<compile_context>
chip_gen: v7x
topology: tpu7x:2x2x1
jax: 0.10.0
libtpu: 0.0.40
codegen_flags: <defaults>
</compile_context>

<pallas_src>
import functools

import jax
import jax.numpy as jnp
import numpy as np
from jax.experimental import pallas as pl
from jax.experimental.pallas import tpu as pltpu


def _round_up(x, m):
    return (x + m - 1) // m * m


# ----------------------------- Fused kernel ---------------------------------
def _sse_fused_kernel(xp_ref, mask_ref, w1_ref, wse_ref, w2_ref, b2_ref,
                      e0_ref, e1_ref, *,
                      cin, c1, c2, d, dp, wp, hwout, eps, slope, n_valid):
    """Fused SSEConv forward for one batch element.

    xp_ref   : (1, cin*dp, hwin)  zero-padded input, flattened (h,w) lanes.
    mask_ref : (d, hwout)         1.0 on valid output lanes, 0.0 elsewhere.
    w1_ref   : (c1*cin*27,) SMEM  conv1 weights (OIDHW, flattened).
    wse_ref  : (c1,)        SMEM  conv_se weights.
    w2_ref   : (c2*c1,)     SMEM  conv2 weights (flattened row-major).
    b2_ref   : (c2,)        SMEM
    e0_ref   : (1, c1, d, hwout)  gated e0 (flattened layout).
    e1_ref   : (1, c2, d, hwout)  conv2 output (flattened layout).
    """
    mask = mask_ref[...]                                   # (d, hwout)

    # ---- conv1 (3x3x3, padding=1): register accumulators; each shifted
    #      slice is materialized once and reused over all c1 channels.
    #      conv1 bias is skipped (cancels exactly under InstanceNorm3d). ----
    acc = [None] * c1
    for ci in range(cin):
        for kd in range(3):
            row = ci * dp + kd
            base = xp_ref[0, row:row + d, :]               # (d, hwin)
            for kh in range(3):
                for kw in range(3):
                    off = kh * wp + kw
                    sh = base[:, off:off + hwout]          # lane-shifted slice
                    widx = ci * 27 + kd * 9 + kh * 3 + kw
                    for co in range(c1):
                        t = sh * w1_ref[co * cin * 27 + widx]
                        acc[co] = t if acc[co] is None else acc[co] + t

    # ---- InstanceNorm3d (biased var, masked one-pass stats) + LeakyReLU.
    #      Normalized channels are stashed in e0_ref (its VMEM block lives
    #      until the grid step ends); the SE logit is accumulated on the fly.
    inv_n = 1.0 / float(n_valid)
    se_logit = None
    for c in range(c1):
        a = acc[c]
        am = a * mask                                      # drop garbage lanes
        mean = jnp.sum(am) * inv_n
        var = jnp.sum(am * am) * inv_n - mean * mean
        y = (a - mean) * jax.lax.rsqrt(var + eps)
        y = jnp.maximum(y, slope * y)                      # LeakyReLU(0.01)
        e0_ref[0, c] = y
        t = y * wse_ref[c]
        se_logit = t if se_logit is None else se_logit + t

    se = jax.nn.sigmoid(se_logit)                          # (d, hwout)

    # ---- SE gating -> e0, and conv2 (1x1x1) + bias -> e1 (register accs). --
    e1_acc = [jnp.full((d, hwout), b2_ref[co], dtype=jnp.float32)
              for co in range(c2)]
    for c in range(c1):
        g = e0_ref[0, c] * se
        e0_ref[0, c] = g
        for co in range(c2):
            e1_acc[co] = e1_acc[co] + g * w2_ref[co * c1 + c]
    for co in range(c2):
        e1_ref[0, co] = e1_acc[co]


# ----------------------------- Wrapper ---------------------------------------
def sse_conv_forward(x, w1, b1, w_se, w2, b2, *, eps=1e-5, slope=0.01):
    """x: (N, Cin, D, H, W) f32. Returns (e0, e1) as in SSEConv.forward.

    Note: conv1's bias `b1` is accepted for API fidelity but is algebraically
    eliminated by InstanceNorm3d (affine=False), so it is not used.
    """
    del b1
    N, Cin, D, H, W = x.shape
    C1 = w1.shape[0]
    C2 = w2.shape[0]
    Dp, Hp, Wp = D + 2, H + 2, W + 2

    # Lane-dense flattened layout: lane index = h*Wp + w (padded stride).
    HWout = _round_up(H * Wp, 128)                 # compute/output lane width
    HWin = _round_up(HWout + 2 * Wp + 2, 128)      # covers all 27 tap shifts

    xp = jnp.pad(x.astype(jnp.float32),
                 ((0, 0), (0, 0), (1, 1), (1, 1), (1, 1)))     # conv padding=1
    xp = xp.reshape(N, Cin * Dp, Hp * Wp)
    xp = jnp.pad(xp, ((0, 0), (0, 0), (0, HWin - Hp * Wp)))    # (N,Cin*Dp,HWin)

    # Valid-lane mask for the InstanceNorm statistics (static constant).
    lane = np.arange(HWout)
    mask_row = ((lane < H * Wp) & ((lane % Wp) < W)).astype(np.float32)
    mask = jnp.asarray(np.tile(mask_row[None, :], (D, 1)))

    # Flattened 1-D SMEM weights (avoids 2-D SMEM padding blowup).
    w1_flat = w1.reshape(C1 * Cin * 27).astype(jnp.float32)
    wse_flat = w_se.reshape(C1).astype(jnp.float32)
    w2_flat = w2.reshape(C2 * C1).astype(jnp.float32)
    b2_f = b2.reshape(C2).astype(jnp.float32)

    kernel = functools.partial(
        _sse_fused_kernel, cin=Cin, c1=C1, c2=C2, d=D, dp=Dp, wp=Wp,
        hwout=HWout, eps=eps, slope=slope, n_valid=D * H * W)

    e0f, e1f = pl.pallas_call(
        kernel,
        out_shape=(jax.ShapeDtypeStruct((N, C1, D, HWout), jnp.float32),
                   jax.ShapeDtypeStruct((N, C2, D, HWout), jnp.float32)),
        grid=(N,),
        in_specs=[
            pl.BlockSpec((1, Cin * Dp, HWin), lambda n: (n, 0, 0)),
            pl.BlockSpec((D, HWout), lambda n: (0, 0)),
            pl.BlockSpec(memory_space=pltpu.MemorySpace.SMEM),   # w1
            pl.BlockSpec(memory_space=pltpu.MemorySpace.SMEM),   # w_se
            pl.BlockSpec(memory_space=pltpu.MemorySpace.SMEM),   # w2
            pl.BlockSpec(memory_space=pltpu.MemorySpace.SMEM),   # b2
        ],
        out_specs=(pl.BlockSpec((1, C1, D, HWout), lambda n: (n, 0, 0, 0)),
                   pl.BlockSpec((1, C2, D, HWout), lambda n: (n, 0, 0, 0))),
        compiler_params=pltpu.CompilerParams(
            dimension_semantics=("parallel",),
            vmem_limit_bytes=48 * 1024 * 1024),
    )(xp, mask, w1_flat, wse_flat, w2_flat, b2_f)

    # Un-flatten lanes: p = h*Wp + w  -> (h, w); drop padded columns.
    e0 = e0f[..., :H * Wp].reshape(N, C1, D, H, Wp)[..., :W]
    e1 = e1f[..., :H * Wp].reshape(N, C2, D, H, Wp)[..., :W]
    # Upsample(scale_factor=1, trilinear, align_corners=True) == identity.
    return e0, e1


# ----------------------------- Reference (pure JAX) --------------------------
def _reference(x, w1, b1, w_se, w2, b2, *, eps=1e-5, slope=0.01):
    dn = ("NCDHW", "OIDHW", "NCDHW")
    e0 = jax.lax.conv_general_dilated(
        x, w1, window_strides=(1, 1, 1),
        padding=[(1, 1), (1, 1), (1, 1)], dimension_numbers=dn)
    e0 = e0 + b1[None, :, None, None, None]
    mean = e0.mean(axis=(2, 3, 4), keepdims=True)
    var = e0.var(axis=(2, 3, 4), keepdims=True)
    e0 = (e0 - mean) / jnp.sqrt(var + eps)
    e0 = jnp.where(e0 >= 0, e0, slope * e0)
    se = jax.nn.sigmoid(
        jnp.einsum("ncdhw,c->ndhw", e0, w_se.reshape(-1)))[:, None]
    e0 = e0 * se
    e1 = jnp.einsum("ncdhw,oc->nodhw", e0, w2.reshape(w2.shape[0], -1))
    e1 = e1 + b2[None, :, None, None, None]
    return e0, e1


if __name__ == "__main__":
    # Small shapes consistent with the module (SSEConv(in_channel=2,
    # out_channel1=4, out_channel2=2, down_sample=1)).
    N, Cin, C1, C2 = 2, 2, 4, 2
    D = H = W = 8

    key = jax.random.PRNGKey(0)
    kx, k1, kb1, kse, k2, kb2 = jax.random.split(key, 6)

    x = jax.random.normal(kx, (N, Cin, D, H, W), jnp.float32)
    w1 = jax.random.normal(k1, (C1, Cin, 3, 3, 3), jnp.float32) * 0.2
    b1 = jax.random.normal(kb1, (C1,), jnp.float32) * 0.1
    w_se = jax.random.normal(kse, (1, C1, 1, 1, 1), jnp.float32) * 0.5
    w2 = jax.random.normal(k2, (C2, C1, 1, 1, 1), jnp.float32) * 0.5
    b2 = jax.random.normal(kb2, (C2,), jnp.float32) * 0.1

    e0, e1 = jax.jit(sse_conv_forward)(x, w1, b1, w_se, w2, b2)
    jax.block_until_ready((e0, e1))

    e0_ref, e1_ref = _reference(x, w1, b1, w_se, w2, b2)
    np.testing.assert_allclose(np.asarray(e0), np.asarray(e0_ref),
                               rtol=1e-3, atol=1e-3)
    np.testing.assert_allclose(np.asarray(e1), np.asarray(e1_ref),
                               rtol=1e-3, atol=1e-3)

    print("KERNEL_OK")
</pallas_src>

<mosaic_0001>
module attributes {stable_mosaic.version = 11 : i64} {
  func.func @_sse_fused_kernel(%arg0: i32, %arg1: memref<1x20x256xf32, #tpu.memory_space<vmem>>, %arg2: memref<8x128xf32, #tpu.memory_space<vmem>>, %arg3: memref<216xf32, #tpu.memory_space<smem>>, %arg4: memref<4xf32, #tpu.memory_space<smem>>, %arg5: memref<8xf32, #tpu.memory_space<smem>>, %arg6: memref<2xf32, #tpu.memory_space<smem>>, %arg7: memref<1x4x8x128xf32, #tpu.memory_space<vmem>>, %arg8: memref<1x2x8x128xf32, #tpu.memory_space<vmem>>) attributes {dimension_semantics = [#tpu.dimension_semantics<parallel>], iteration_bounds = array<i64: 2>, scalar_prefetch = 0 : i64, scratch_operands = 0 : i64, tpu.core_type = #tpu.core_type<tc>, window_params = [{transform_indices = @transform_0, window_bounds = array<i64: 1, 20, 256>}, {pipeline_mode = #tpu.pipeline_mode<synchronous>, transform_indices = @transform_1, window_bounds = array<i64: 8, 128>}, {transform_indices = @transform_2, window_bounds = array<i64: 216>}, {transform_indices = @transform_3, window_bounds = array<i64: 4>}, {transform_indices = @transform_4, window_bounds = array<i64: 8>}, {transform_indices = @transform_5, window_bounds = array<i64: 2>}, {transform_indices = @transform_6, window_bounds = array<i64: 1, 4, 8, 128>}, {transform_indices = @transform_7, window_bounds = array<i64: 1, 2, 8, 128>}]} {
    %c0 = arith.constant 0 : index
    %c0_0 = arith.constant 0 : index
    %0 = vector.load %arg2[%c0, %c0_0] : memref<8x128xf32, #tpu.memory_space<vmem>>, vector<8x128xf32>
    %c0_1 = arith.constant 0 : index
    %c0_2 = arith.constant 0 : index
    %c0_3 = arith.constant 0 : index
    %1 = vector.load %arg1[%c0_1, %c0_2, %c0_3] : memref<1x20x256xf32, #tpu.memory_space<vmem>>, vector<1x8x256xf32>
    %2 = vector.shape_cast %1 : vector<1x8x256xf32> to vector<8x256xf32>
    %3 = vector.extract_strided_slice %2 {offsets = [0, 0], sizes = [8, 128], strides = [1, 1]} : vector<8x256xf32> to vector<8x128xf32>
    %c0_4 = arith.constant 0 : index
    %4 = memref.load %arg3[%c0_4] : memref<216xf32, #tpu.memory_space<smem>>
    %5 = vector.broadcast %4 : f32 to vector<8x128xf32>
    %6 = arith.mulf %3, %5 : vector<8x128xf32>
    %c54 = arith.constant 54 : index
    %7 = memref.load %arg3[%c54] : memref<216xf32, #tpu.memory_space<smem>>
    %8 = vector.broadcast %7 : f32 to vector<8x128xf32>
    %9 = arith.mulf %3, %8 : vector<8x128xf32>
    %c108 = arith.constant 108 : index
    %10 = memref.load %arg3[%c108] : memref<216xf32, #tpu.memory_space<smem>>
    %11 = vector.broadcast %10 : f32 to vector<8x128xf32>
    %12 = arith.mulf %3, %11 : vector<8x128xf32>
    %c162 = arith.constant 162 : index
    %13 = memref.load %arg3[%c162] : memref<216xf32, #tpu.memory_space<smem>>
    %14 = vector.broadcast %13 : f32 to vector<8x128xf32>
    %15 = arith.mulf %3, %14 : vector<8x128xf32>
    %16 = vector.extract_strided_slice %2 {offsets = [0, 1], sizes = [8, 128], strides = [1, 1]} : vector<8x256xf32> to vector<8x128xf32>
    %c1 = arith.constant 1 : index
    %17 = memref.load %arg3[%c1] : memref<216xf32, #tpu.memory_space<smem>>
    %18 = vector.broadcast %17 : f32 to vector<8x128xf32>
    %19 = arith.mulf %16, %18 : vector<8x128xf32>
    %20 = arith.addf %6, %19 : vector<8x128xf32>
    %c55 = arith.constant 55 : index
    %21 = memref.load %arg3[%c55] : memref<216xf32, #tpu.memory_space<smem>>
    %22 = vector.broadcast %21 : f32 to vector<8x128xf32>
    %23 = arith.mulf %16, %22 : vector<8x128xf32>
    %24 = arith.addf %9, %23 : vector<8x128xf32>
    %c109 = arith.constant 109 : index
    %25 = memref.load %arg3[%c109] : memref<216xf32, #tpu.memory_space<smem>>
    %26 = vector.broadcast %25 : f32 to vector<8x128xf32>
    %27 = arith.mulf %16, %26 : vector<8x128xf32>
    %28 = arith.addf %12, %27 : vector<8x128xf32>
    %c163 = arith.constant 163 : index
    %29 = memref.load %arg3[%c163] : memref<216xf32, #tpu.memory_space<smem>>
    %30 = vector.broadcast %29 : f32 to vector<8x128xf32>
    %31 = arith.mulf %16, %30 : vector<8x128xf32>
    %32 = arith.addf %15, %31 : vector<8x128xf32>
    %33 = vector.extract_strided_slice %2 {offsets = [0, 2], sizes = [8, 128], strides = [1, 1]} : vector<8x256xf32> to vector<8x128xf32>
    %c2 = arith.constant 2 : index
    %34 = memref.load %arg3[%c2] : memref<216xf32, #tpu.memory_space<smem>>
    %35 = vector.broadcast %34 : f32 to vector<8x128xf32>
    %36 = arith.mulf %33, %35 : vector<8x128xf32>
    %37 = arith.addf %20, %36 : vector<8x128xf32>
    %c56 = arith.constant 56 : index
    %38 = memref.load %arg3[%c56] : memref<216xf32, #tpu.memory_space<smem>>
    %39 = vector.broadcast %38 : f32 to vector<8x128xf32>
    %40 = arith.mulf %33, %39 : vector<8x128xf32>
    %41 = arith.addf %24, %40 : vector<8x128xf32>
    %c110 = arith.constant 110 : index
    %42 = memref.load %arg3[%c110] : memref<216xf32, #tpu.memory_space<smem>>
    %43 = vector.broadcast %42 : f32 to vector<8x128xf32>
    %44 = arith.mulf %33, %43 : vector<8x128xf32>
    %45 = arith.addf %28, %44 : vector<8x128xf32>
    %c164 = arith.constant 164 : index
    %46 = memref.load %arg3[%c164] : memref<216xf32, #tpu.memory_space<smem>>
    %47 = vector.broadcast %46 : f32 to vector<8x128xf32>
    %48 = arith.mulf %33, %47 : vector<8x128xf32>
    %49 = arith.addf %32, %48 : vector<8x128xf32>
    %50 = vector.extract_strided_slice %2 {offsets = [0, 10], sizes = [8, 128], strides = [1, 1]} : vector<8x256xf32> to vector<8x128xf32>
    %c3 = arith.constant 3 : index
    %51 = memref.load %arg3[%c3] : memref<216xf32, #tpu.memory_space<smem>>
    %52 = vector.broadcast %51 : f32 to vector<8x128xf32>
    %53 = arith.mulf %50, %52 : vector<8x128xf32>
    %54 = arith.addf %37, %53 : vector<8x128xf32>
    %c57 = arith.constant 57 : index
    %55 = memref.load %arg3[%c57] : memref<216xf32, #tpu.memory_space<smem>>
    %56 = vector.broadcast %55 : f32 to vector<8x128xf32>
    %57 = arith.mulf %50, %56 : vector<8x128xf32>
    %58 = arith.addf %41, %57 : vector<8x128xf32>
    %c111 = arith.constant 111 : index
    %59 = memref.load %arg3[%c111] : memref<216xf32, #tpu.memory_space<smem>>
    %60 = vector.broadcast %59 : f32 to vector<8x128xf32>
    %61 = arith.mulf %50, %60 : vector<8x128xf32>
    %62 = arith.addf %45, %61 : vector<8x128xf32>
    %c165 = arith.constant 165 : index
    %63 = memref.load %arg3[%c165] : memref<216xf32, #tpu.memory_space<smem>>
    %64 = vector.broadcast %63 : f32 to vector<8x128xf32>
    %65 = arith.mulf %50, %64 : vector<8x128xf32>
    %66 = arith.addf %49, %65 : vector<8x128xf32>
    %67 = vector.extract_strided_slice %2 {offsets = [0, 11], sizes = [8, 128], strides = [1, 1]} : vector<8x256xf32> to vector<8x128xf32>
    %c4 = arith.constant 4 : index
    %68 = memref.load %arg3[%c4] : memref<216xf32, #tpu.memory_space<smem>>
    %69 = vector.broadcast %68 : f32 to vector<8x128xf32>
    %70 = arith.mulf %67, %69 : vector<8x128xf32>
    %71 = arith.addf %54, %70 : vector<8x128xf32>
    %c58 = arith.constant 58 : index
    %72 = memref.load %arg3[%c58] : memref<216xf32, #tpu.memory_space<smem>>
    %73 = vector.broadcast %72 : f32 to vector<8x128xf32>
    %74 = arith.mulf %67, %73 : vector<8x128xf32>
    %75 = arith.addf %58, %74 : vector<8x128xf32>
    %c112 = arith.constant 112 : index
    %76 = memref.load %arg3[%c112] : memref<216xf32, #tpu.memory_space<smem>>
    %77 = vector.broadcast %76 : f32 to vector<8x128xf32>
    %78 = arith.mulf %67, %77 : vector<8x128xf32>
    %79 = arith.addf %62, %78 : vector<8x128xf32>
    %c166 = arith.constant 166 : index
    %80 = memref.load %arg3[%c166] : memref<216xf32, #tpu.memory_space<smem>>
    %81 = vector.broadcast %80 : f32 to vector<8x128xf32>
    %82 = arith.mulf %67, %81 : vector<8x128xf32>
    %83 = arith.addf %66, %82 : vector<8x128xf32>
    %84 = vector.extract_strided_slice %2 {offsets = [0, 12], sizes = [8, 128], strides = [1, 1]} : vector<8x256xf32> to vector<8x128xf32>
    %c5 = arith.constant 5 : index
    %85 = memref.load %arg3[%c5] : memref<216xf32, #tpu.memory_space<smem>>
    %86 = vector.broadcast %85 : f32 to vector<8x128xf32>
    %87 = arith.mulf %84, %86 : vector<8x128xf32>
    %88 = arith.addf %71, %87 : vector<8x128xf32>
    %c59 = arith.constant 59 : index
    %89 = memref.load %arg3[%c59] : memref<216xf32, #tpu.memory_space<smem>>
    %90 = vector.broadcast %89 : f32 to vector<8x128xf32>
    %91 = arith.mulf %84, %90 : vector<8x128xf32>
    %92 = arith.addf %75, %91 : vector<8x128xf32>
    %c113 = arith.constant 113 : index
    %93 = memref.load %arg3[%c113] : memref<216xf32, #tpu.memory_space<smem>>
    %94 = vector.broadcast %93 : f32 to vector<8x128xf32>
    %95 = arith.mulf %84, %94 : vector<8x128xf32>
    %96 = arith.addf %79, %95 : vector<8x128xf32>
    %c167 = arith.constant 167 : index
    %97 = memref.load %arg3[%c167] : memref<216xf32, #tpu.memory_space<smem>>
    %98 = vector.broadcast %97 : f32 to vector<8x128xf32>
    %99 = arith.mulf %84, %98 : vector<8x128xf32>
    %100 = arith.addf %83, %99 : vector<8x128xf32>
    %101 = vector.extract_strided_slice %2 {offsets = [0, 20], sizes = [8, 128], strides = [1, 1]} : vector<8x256xf32> to vector<8x128xf32>
    %c6 = arith.constant 6 : index
    %102 = memref.load %arg3[%c6] : memref<216xf32, #tpu.memory_space<smem>>
    %103 = vector.broadcast %102 : f32 to vector<8x128xf32>
    %104 = arith.mulf %101, %103 : vector<8x128xf32>
    %105 = arith.addf %88, %104 : vector<8x128xf32>
    %c60 = arith.constant 60 : index
    %106 = memref.load %arg3[%c60] : memref<216xf32, #tpu.memory_space<smem>>
    %107 = vector.broadcast %106 : f32 to vector<8x128xf32>
    %108 = arith.mulf %101, %107 : vector<8x128xf32>
    %109 = arith.addf %92, %108 : vector<8x128xf32>
    %c114 = arith.constant 114 : index
    %110 = memref.load %arg3[%c114] : memref<216xf32, #tpu.memory_space<smem>>
    %111 = vector.broadcast %110 : f32 to vector<8x128xf32>
    %112 = arith.mulf %101, %111 : vector<8x128xf32>
    %113 = arith.addf %96, %112 : vector<8x128xf32>
    %c168 = arith.constant 168 : index
    %114 = memref.load %arg3[%c168] : memref<216xf32, #tpu.memory_space<smem>>
    %115 = vector.broadcast %114 : f32 to vector<8x128xf32>
    %116 = arith.mulf %101, %115 : vector<8x128xf32>
    %117 = arith.addf %100, %116 : vector<8x128xf32>
    %118 = vector.extract_strided_slice %2 {offsets = [0, 21], sizes = [8, 128], strides = [1, 1]} : vector<8x256xf32> to vector<8x128xf32>
    %c7 = arith.constant 7 : index
    %119 = memref.load %arg3[%c7] : memref<216xf32, #tpu.memory_space<smem>>
    %120 = vector.broadcast %119 : f32 to vector<8x128xf32>
    %121 = arith.mulf %118, %120 : vector<8x128xf32>
    %122 = arith.addf %105, %121 : vector<8x128xf32>
    %c61 = arith.constant 61 : index
    %123 = memref.load %arg3[%c61] : memref<216xf32, #tpu.memory_space<smem>>
    %124 = vector.broadcast %123 : f32 to vector<8x128xf32>
    %125 = arith.mulf %118, %124 : vector<8x128xf32>
    %126 = arith.addf %109, %125 : vector<8x128xf32>
    %c115 = arith.constant 115 : index
    %127 = memref.load %arg3[%c115] : memref<216xf32, #tpu.memory_space<smem>>
    %128 = vector.broadcast %127 : f32 to vector<8x128xf32>
    %129 = arith.mulf %118, %128 : vector<8x128xf32>
    %130 = arith.addf %113, %129 : vector<8x128xf32>
    %c169 = arith.constant 169 : index
    %131 = memref.load %arg3[%c169] : memref<216xf32, #tpu.memory_space<smem>>
    %132 = vector.broadcast %131 : f32 to vector<8x128xf32>
    %133 = arith.mulf %118, %132 : vector<8x128xf32>
    %134 = arith.addf %117, %133 : vector<8x128xf32>
    %135 = vector.extract_strided_slice %2 {offsets = [0, 22], sizes = [8, 128], strides = [1, 1]} : vector<8x256xf32> to vector<8x128xf32>
    %c8 = arith.constant 8 : index
    %136 = memref.load %arg3[%c8] : memref<216xf32, #tpu.memory_space<smem>>
    %137 = vector.broadcast %136 : f32 to vector<8x128xf32>
    %138 = arith.mulf %135, %137 : vector<8x128xf32>
    %139 = arith.addf %122, %138 : vector<8x128xf32>
    %c62 = arith.constant 62 : index
    %140 = memref.load %arg3[%c62] : memref<216xf32, #tpu.memory_space<smem>>
    %141 = vector.broadcast %140 : f32 to vector<8x128xf32>
    %142 = arith.mulf %135, %141 : vector<8x128xf32>
    %143 = arith.addf %126, %142 : vector<8x128xf32>
    %c116 = arith.constant 116 : index
    %144 = memref.load %arg3[%c116] : memref<216xf32, #tpu.memory_space<smem>>
    %145 = vector.broadcast %144 : f32 to vector<8x128xf32>
    %146 = arith.mulf %135, %145 : vector<8x128xf32>
    %147 = arith.addf %130, %146 : vector<8x128xf32>
    %c170 = arith.constant 170 : index
    %148 = memref.load %arg3[%c170] : memref<216xf32, #tpu.memory_space<smem>>
    %149 = vector.broadcast %148 : f32 to vector<8x128xf32>
    %150 = arith.mulf %135, %149 : vector<8x128xf32>
    %151 = arith.addf %134, %150 : vector<8x128xf32>
    %c0_5 = arith.constant 0 : index
    %c1_6 = arith.constant 1 : index
    %c0_7 = arith.constant 0 : index
    %152 = vector.load %arg1[%c0_5, %c1_6, %c0_7] : memref<1x20x256xf32, #tpu.memory_space<vmem>>, vector<1x8x256xf32>
    %153 = vector.shape_cast %152 : vector<1x8x256xf32> to vector<8x256xf32>
    %154 = vector.extract_strided_slice %153 {offsets = [0, 0], sizes = [8, 128], strides = [1, 1]} : vector<8x256xf32> to vector<8x128xf32>
    %c9 = arith.constant 9 : index
    %155 = memref.load %arg3[%c9] : memref<216xf32, #tpu.memory_space<smem>>
    %156 = vector.broadcast %155 : f32 to vector<8x128xf32>
    %157 = arith.mulf %154, %156 : vector<8x128xf32>
    %158 = arith.addf %139, %157 : vector<8x128xf32>
    %c63 = arith.constant 63 : index
    %159 = memref.load %arg3[%c63] : memref<216xf32, #tpu.memory_space<smem>>
    %160 = vector.broadcast %159 : f32 to vector<8x128xf32>
    %161 = arith.mulf %154, %160 : vector<8x128xf32>
    %162 = arith.addf %143, %161 : vector<8x128xf32>
    %c117 = arith.constant 117 : index
    %163 = memref.load %arg3[%c117] : memref<216xf32, #tpu.memory_space<smem>>
    %164 = vector.broadcast %163 : f32 to vector<8x128xf32>
    %165 = arith.mulf %154, %164 : vector<8x128xf32>
    %166 = arith.addf %147, %165 : vector<8x128xf32>
    %c171 = arith.constant 171 : index
    %167 = memref.load %arg3[%c171] : memref<216xf32, #tpu.memory_space<smem>>
    %168 = vector.broadcast %167 : f32 to vector<8x128xf32>
    %169 = arith.mulf %154, %168 : vector<8x128xf32>
    %170 = arith.addf %151, %169 : vector<8x128xf32>
    %171 = vector.extract_strided_slice %153 {offsets = [0, 1], sizes = [8, 128], strides = [1, 1]} : vector<8x256xf32> to vector<8x128xf32>
    %c10 = arith.constant 10 : index
    %172 = memref.load %arg3[%c10] : memref<216xf32, #tpu.memory_space<smem>>
    %173 = vector.broadcast %172 : f32 to vector<8x128xf32>
    %174 = arith.mulf %171, %173 : vector<8x128xf32>
    %175 = arith.addf %158, %174 : vector<8x128xf32>
    %c64 = arith.constant 64 : index
    %176 = memref.load %arg3[%c64] : memref<216xf32, #tpu.memory_space<smem>>
    %177 = vector.broadcast %176 : f32 to vector<8x128xf32>
    %178 = arith.mulf %171, %177 : vector<8x128xf32>
    %179 = arith.addf %162, %178 : vector<8x128xf32>
    %c118 = arith.constant 118 : index
    %180 = memref.load %arg3[%c118] : memref<216xf32, #tpu.memory_space<smem>>
    %181 = vector.broadcast %180 : f32 to vector<8x128xf32>
    %182 = arith.mulf %171, %181 : vector<8x128xf32>
    %183 = arith.addf %166, %182 : vector<8x128xf32>
    %c172 = arith.constant 172 : index
    %184 = memref.load %arg3[%c172] : memref<216xf32, #tpu.memory_space<smem>>
    %185 = vector.broadcast %184 : f32 to vector<8x128xf32>
    %186 = arith.mulf %171, %185 : vector<8x128xf32>
    %187 = arith.addf %170, %186 : vector<8x128xf32>
    %188 = vector.extract_strided_slice %153 {offsets = [0, 2], sizes = [8, 128], strides = [1, 1]} : vector<8x256xf32> to vector<8x128xf32>
    %c11 = arith.constant 11 : index
    %189 = memref.load %arg3[%c11] : memref<216xf32, #tpu.memory_space<smem>>
    %190 = vector.broadcast %189 : f32 to vector<8x128xf32>
    %191 = arith.mulf %188, %190 : vector<8x128xf32>
    %192 = arith.addf %175, %191 : vector<8x128xf32>
    %c65 = arith.constant 65 : index
    %193 = memref.load %arg3[%c65] : memref<216xf32, #tpu.memory_space<smem>>
    %194 = vector.broadcast %193 : f32 to vector<8x128xf32>
    %195 = arith.mulf %188, %194 : vector<8x128xf32>
    %196 = arith.addf %179, %195 : vector<8x128xf32>
    %c119 = arith.constant 119 : index
    %197 = memref.load %arg3[%c119] : memref<216xf32, #tpu.memory_space<smem>>
    %198 = vector.broadcast %197 : f32 to vector<8x128xf32>
    %199 = arith.mulf %188, %198 : vector<8x128xf32>
    %200 = arith.addf %183, %199 : vector<8x128xf32>
    %c173 = arith.constant 173 : index
    %201 = memref.load %arg3[%c173] : memref<216xf32, #tpu.memory_space<smem>>
    %202 = vector.broadcast %201 : f32 to vector<8x128xf32>
    %203 = arith.mulf %188, %202 : vector<8x128xf32>
    %204 = arith.addf %187, %203 : vector<8x128xf32>
    %205 = vector.extract_strided_slice %153 {offsets = [0, 10], sizes = [8, 128], strides = [1, 1]} : vector<8x256xf32> to vector<8x128xf32>
    %c12 = arith.constant 12 : index
    %206 = memref.load %arg3[%c12] : memref<216xf32, #tpu.memory_space<smem>>
    %207 = vector.broadcast %206 : f32 to vector<8x128xf32>
    %208 = arith.mulf %205, %207 : vector<8x128xf32>
    %209 = arith.addf %192, %208 : vector<8x128xf32>
    %c66 = arith.constant 66 : index
    %210 = memref.load %arg3[%c66] : memref<216xf32, #tpu.memory_space<smem>>
    %211 = vector.broadcast %210 : f32 to vector<8x128xf32>
    %212 = arith.mulf %205, %211 : vector<8x128xf32>
    %213 = arith.addf %196, %212 : vector<8x128xf32>
    %c120 = arith.constant 120 : index
    %214 = memref.load %arg3[%c120] : memref<216xf32, #tpu.memory_space<smem>>
    %215 = vector.broadcast %214 : f32 to vector<8x128xf32>
    %216 = arith.mulf %205, %215 : vector<8x128xf32>
    %217 = arith.addf %200, %216 : vector<8x128xf32>
    %c174 = arith.constant 174 : index
    %218 = memref.load %arg3[%c174] : memref<216xf32, #tpu.memory_space<smem>>
    %219 = vector.broadcast %218 : f32 to vector<8x128xf32>
    %220 = arith.mulf %205, %219 : vector<8x128xf32>
    %221 = arith.addf %204, %220 : vector<8x128xf32>
    %222 = vector.extract_strided_slice %153 {offsets = [0, 11], sizes = [8, 128], strides = [1, 1]} : vector<8x256xf32> to vector<8x128xf32>
    %c13 = arith.constant 13 : index
    %223 = memref.load %arg3[%c13] : memref<216xf32, #tpu.memory_space<smem>>
    %224 = vector.broadcast %223 : f32 to vector<8x128xf32>
    %225 = arith.mulf %222, %224 : vector<8x128xf32>
    %226 = arith.addf %209, %225 : vector<8x128xf32>
    %c67 = arith.constant 67 : index
    %227 = memref.load %arg3[%c67] : memref<216xf32, #tpu.memory_space<smem>>
    %228 = vector.broadcast %227 : f32 to vector<8x128xf32>
    %229 = arith.mulf %222, %228 : vector<8x128xf32>
    %230 = arith.addf %213, %229 : vector<8x128xf32>
    %c121 = arith.constant 121 : index
    %231 = memref.load %arg3[%c121] : memref<216xf32, #tpu.memory_space<smem>>
    %232 = vector.broadcast %231 : f32 to vector<8x128xf32>
    %233 = arith.mulf %222, %232 : vector<8x128xf32>
    %234 = arith.addf %217, %233 : vector<8x128xf32>
    %c175 = arith.constant 175 : index
    %235 = memref.load %arg3[%c175] : memref<216xf32, #tpu.memory_space<smem>>
    %236 = vector.broadcast %235 : f32 to vector<8x128xf32>
    %237 = arith.mulf %222, %236 : vector<8x128xf32>
    %238 = arith.addf %221, %237 : vector<8x128xf32>
    %239 = vector.extract_strided_slice %153 {offsets = [0, 12], sizes = [8, 128], strides = [1, 1]} : vector<8x256xf32> to vector<8x128xf32>
    %c14 = arith.constant 14 : index
    %240 = memref.load %arg3[%c14] : memref<216xf32, #tpu.memory_space<smem>>
    %241 = vector.broadcast %240 : f32 to vector<8x128xf32>
    %242 = arith.mulf %239, %241 : vector<8x128xf32>
    %243 = arith.addf %226, %242 : vector<8x128xf32>
    %c68 = arith.constant 68 : index
    %244 = memref.load %arg3[%c68] : memref<216xf32, #tpu.memory_space<smem>>
    %245 = vector.broadcast %244 : f32 to vector<8x128xf32>
    %246 = arith.mulf %239, %245 : vector<8x128xf32>
    %247 = arith.addf %230, %246 : vector<8x128xf32>
    %c122 = arith.constant 122 : index
    %248 = memref.load %arg3[%c122] : memref<216xf32, #tpu.memory_space<smem>>
    %249 = vector.broadcast %248 : f32 to vector<8x128xf32>
    %250 = arith.mulf %239, %249 : vector<8x128xf32>
    %251 = arith.addf %234, %250 : vector<8x128xf32>
    %c176 = arith.constant 176 : index
    %252 = memref.load %arg3[%c176] : memref<216xf32, #tpu.memory_space<smem>>
    %253 = vector.broadcast %252 : f32 to vector<8x128xf32>
    %254 = arith.mulf %239, %253 : vector<8x128xf32>
    %255 = arith.addf %238, %254 : vector<8x128xf32>
    %256 = vector.extract_strided_slice %153 {offsets = [0, 20], sizes = [8, 128], strides = [1, 1]} : vector<8x256xf32> to vector<8x128xf32>
    %c15 = arith.constant 15 : index
    %257 = memref.load %arg3[%c15] : memref<216xf32, #tpu.memory_space<smem>>
    %258 = vector.broadcast %257 : f32 to vector<8x128xf32>
    %259 = arith.mulf %256, %258 : vector<8x128xf32>
    %260 = arith.addf %243, %259 : vector<8x128xf32>
    %c69 = arith.constant 69 : index
    %261 = memref.load %arg3[%c69] : memref<216xf32, #tpu.memory_space<smem>>
    %262 = vector.broadcast %261 : f32 to vector<8x128xf32>
    %263 = arith.mulf %256, %262 : vector<8x128xf32>
    %264 = arith.addf %247, %263 : vector<8x128xf32>
    %c123 = arith.constant 123 : index
    %265 = memref.load %arg3[%c123] : memref<216xf32, #tpu.memory_space<smem>>
    %266 = vector.broadcast %265 : f32 to vector<8x128xf32>
    %267 = arith.mulf %256, %266 : vector<8x128xf32>
    %268 = arith.addf %251, %267 : vector<8x128xf32>
    %c177 = arith.constant 177 : index
    %269 = memref.load %arg3[%c177] : memref<216xf32, #tpu.memory_space<smem>>
    %270 = vector.broadcast %269 : f32 to vector<8x128xf32>
    %271 = arith.mulf %256, %270 : vector<8x128xf32>
    %272 = arith.addf %255, %271 : vector<8x128xf32>
    %273 = vector.extract_strided_slice %153 {offsets = [0, 21], sizes = [8, 128], strides = [1, 1]} : vector<8x256xf32> to vector<8x128xf32>
    %c16 = arith.constant 16 : index
    %274 = memref.load %arg3[%c16] : memref<216xf32, #tpu.memory_space<smem>>
    %275 = vector.broadcast %274 : f32 to vector<8x128xf32>
    %276 = arith.mulf %273, %275 : vector<8x128xf32>
    %277 = arith.addf %260, %276 : vector<8x128xf32>
    %c70 = arith.constant 70 : index
    %278 = memref.load %arg3[%c70] : memref<216xf32, #tpu.memory_space<smem>>
    %279 = vector.broadcast %278 : f32 to vector<8x128xf32>
    %280 = arith.mulf %273, %279 : vector<8x128xf32>
    %281 = arith.addf %264, %280 : vector<8x128xf32>
    %c124 = arith.constant 124 : index
    %282 = memref.load %arg3[%c124] : memref<216xf32, #tpu.memory_space<smem>>
    %283 = vector.broadcast %282 : f32 to vector<8x128xf32>
    %284 = arith.mulf %273, %283 : vector<8x128xf32>
    %285 = arith.addf %268, %284 : vector<8x128xf32>
    %c178 = arith.constant 178 : index
    %286 = memref.load %arg3[%c178] : memref<216xf32, #tpu.memory_space<smem>>
    %287 = vector.broadcast %286 : f32 to vector<8x128xf32>
    %288 = arith.mulf %273, %287 : vector<8x128xf32>
    %289 = arith.addf %272, %288 : vector<8x128xf32>
    %290 = vector.extract_strided_slice %153 {offsets = [0, 22], sizes = [8, 128], strides = [1, 1]} : vector<8x256xf32> to vector<8x128xf32>
    %c17 = arith.constant 17 : index
    %291 = memref.load %arg3[%c17] : memref<216xf32, #tpu.memory_space<smem>>
    %292 = vector.broadcast %291 : f32 to vector<8x128xf32>
    %293 = arith.mulf %290, %292 : vector<8x128xf32>
    %294 = arith.addf %277, %293 : vector<8x128xf32>
    %c71 = arith.constant 71 : index
    %295 = memref.load %arg3[%c71] : memref<216xf32, #tpu.memory_space<smem>>
    %296 = vector.broadcast %295 : f32 to vector<8x128xf32>
    %297 = arith.mulf %290, %296 : vector<8x128xf32>
    %298 = arith.addf %281, %297 : vector<8x128xf32>
    %c125 = arith.constant 125 : index
    %299 = memref.load %arg3[%c125] : memref<216xf32, #tpu.memory_space<smem>>
    %300 = vector.broadcast %299 : f32 to vector<8x128xf32>
    %301 = arith.mulf %290, %300 : vector<8x128xf32>
    %302 = arith.addf %285, %301 : vector<8x128xf32>
    %c179 = arith.constant 179 : index
    %303 = memref.load %arg3[%c179] : memref<216xf32, #tpu.memory_space<smem>>
    %304 = vector.broadcast %303 : f32 to vector<8x128xf32>
    %305 = arith.mulf %290, %304 : vector<8x128xf32>
    %306 = arith.addf %289, %305 : vector<8x128xf32>
    %c0_8 = arith.constant 0 : index
    %c2_9 = arith.constant 2 : index
    %c0_10 = arith.constant 0 : index
    %307 = vector.load %arg1[%c0_8, %c2_9, %c0_10] : memref<1x20x256xf32, #tpu.memory_space<vmem>>, vector<1x8x256xf32>
    %308 = vector.shape_cast %307 : vector<1x8x256xf32> to vector<8x256xf32>
    %309 = vector.extract_strided_slice %308 {offsets = [0, 0], sizes = [8, 128], strides = [1, 1]} : vector<8x256xf32> to vector<8x128xf32>
    %c18 = arith.constant 18 : index
    %310 = memref.load %arg3[%c18] : memref<216xf32, #tpu.memory_space<smem>>
    %311 = vector.broadcast %310 : f32 to vector<8x128xf32>
    %312 = arith.mulf %309, %311 : vector<8x128xf32>
    %313 = arith.addf %294, %312 : vector<8x128xf32>
    %c72 = arith.constant 72 : index
    %314 = memref.load %arg3[%c72] : memref<216xf32, #tpu.memory_space<smem>>
    %315 = vector.broadcast %314 : f32 to vector<8x128xf32>
    %316 = arith.mulf %309, %315 : vector<8x128xf32>
    %317 = arith.addf %298, %316 : vector<8x128xf32>
    %c126 = arith.constant 126 : index
    %318 = memref.load %arg3[%c126] : memref<216xf32, #tpu.memory_space<smem>>
    %319 = vector.broadcast %318 : f32 to vector<8x128xf32>
    %320 = arith.mulf %309, %319 : vector<8x128xf32>
    %321 = arith.addf %302, %320 : vector<8x128xf32>
    %c180 = arith.constant 180 : index
    %322 = memref.load %arg3[%c180] : memref<216xf32, #tpu.memory_space<smem>>
    %323 = vector.broadcast %322 : f32 to vector<8x128xf32>
    %324 = arith.mulf %309, %323 : vector<8x128xf32>
    %325 = arith.addf %306, %324 : vector<8x128xf32>
    %326 = vector.extract_strided_slice %308 {offsets = [0, 1], sizes = [8, 128], strides = [1, 1]} : vector<8x256xf32> to vector<8x128xf32>
    %c19 = arith.constant 19 : index
    %327 = memref.load %arg3[%c19] : memref<216xf32, #tpu.memory_space<smem>>
    %328 = vector.broadcast %327 : f32 to vector<8x128xf32>
    %329 = arith.mulf %326, %328 : vector<8x128xf32>
    %330 = arith.addf %313, %329 : vector<8x128xf32>
    %c73 = arith.constant 73 : index
    %331 = memref.load %arg3[%c73] : memref<216xf32, #tpu.memory_space<smem>>
    %332 = vector.broadcast %331 : f32 to vector<8x128xf32>
    %333 = arith.mulf %326, %332 : vector<8x128xf32>
    %334 = arith.addf %317, %333 : vector<8x128xf32>
    %c127 = arith.constant 127 : index
    %335 = memref.load %arg3[%c127] : memref<216xf32, #tpu.memory_space<smem>>
    %336 = vector.broadcast %335 : f32 to vector<8x128xf32>
    %337 = arith.mulf %326, %336 : vector<8x128xf32>
    %338 = arith.addf %321, %337 : vector<8x128xf32>
    %c181 = arith.constant 181 : index
    %339 = memref.load %arg3[%c181] : memref<216xf32, #tpu.memory_space<smem>>
    %340 = vector.broadcast %339 : f32 to vector<8x128xf32>
    %341 = arith.mulf %326, %340 : vector<8x128xf32>
    %342 = arith.addf %325, %341 : vector<8x128xf32>
    %343 = vector.extract_strided_slice %308 {offsets = [0, 2], sizes = [8, 128], strides = [1, 1]} : vector<8x256xf32> to vector<8x128xf32>
    %c20 = arith.constant 20 : index
    %344 = memref.load %arg3[%c20] : memref<216xf32, #tpu.memory_space<smem>>
    %345 = vector.broadcast %344 : f32 to vector<8x128xf32>
    %346 = arith.mulf %343, %345 : vector<8x128xf32>
    %347 = arith.addf %330, %346 : vector<8x128xf32>
    %c74 = arith.constant 74 : index
    %348 = memref.load %arg3[%c74] : memref<216xf32, #tpu.memory_space<smem>>
    %349 = vector.broadcast %348 : f32 to vector<8x128xf32>
    %350 = arith.mulf %343, %349 : vector<8x128xf32>
    %351 = arith.addf %334, %350 : vector<8x128xf32>
    %c128 = arith.constant 128 : index
    %352 = memref.load %arg3[%c128] : memref<216xf32, #tpu.memory_space<smem>>
    %353 = vector.broadcast %352 : f32 to vector<8x128xf32>
    %354 = arith.mulf %343, %353 : vector<8x128xf32>
    %355 = arith.addf %338, %354 : vector<8x128xf32>
    %c182 = arith.constant 182 : index
    %356 = memref.load %arg3[%c182] : memref<216xf32, #tpu.memory_space<smem>>
    %357 = vector.broadcast %356 : f32 to vector<8x128xf32>
    %358 = arith.mulf %343, %357 : vector<8x128xf32>
    %359 = arith.addf %342, %358 : vector<8x128xf32>
    %360 = vector.extract_strided_slice %308 {offsets = [0, 10], sizes = [8, 128], strides = [1, 1]} : vector<8x256xf32> to vector<8x128xf32>
    %c21 = arith.constant 21 : index
    %361 = memref.load %arg3[%c21] : memref<216xf32, #tpu.memory_space<smem>>
    %362 = vector.broadcast %361 : f32 to vector<8x128xf32>
    %363 = arith.mulf %360, %362 : vector<8x128xf32>
    %364 = arith.addf %347, %363 : vector<8x128xf32>
    %c75 = arith.constant 75 : index
    %365 = memref.load %arg3[%c75] : memref<216xf32, #tpu.memory_space<smem>>
    %366 = vector.broadcast %365 : f32 to vector<8x128xf32>
    %367 = arith.mulf %360, %366 : vector<8x128xf32>
    %368 = arith.addf %351, %367 : vector<8x128xf32>
    %c129 = arith.constant 129 : index
    %369 = memref.load %arg3[%c129] : memref<216xf32, #tpu.memory_space<smem>>
    %370 = vector.broadcast %369 : f32 to vector<8x128xf32>
    %371 = arith.mulf %360, %370 : vector<8x128xf32>
    %372 = arith.addf %355, %371 : vector<8x128xf32>
    %c183 = arith.constant 183 : index
    %373 = memref.load %arg3[%c183] : memref<216xf32, #tpu.memory_space<smem>>
    %374 = vector.broadcast %373 : f32 to vector<8x128xf32>
    %375 = arith.mulf %360, %374 : vector<8x128xf32>
    %376 = arith.addf %359, %375 : vector<8x128xf32>
    %377 = vector.extract_strided_slice %308 {offsets = [0, 11], sizes = [8, 128], strides = [1, 1]} : vector<8x256xf32> to vector<8x128xf32>
    %c22 = arith.constant 22 : index
    %378 = memref.load %arg3[%c22] : memref<216xf32, #tpu.memory_space<smem>>
    %379 = vector.broadcast %378 : f32 to vector<8x128xf32>
    %380 = arith.mulf %377, %379 : vector<8x128xf32>
    %381 = arith.addf %364, %380 : vector<8x128xf32>
    %c76 = arith.constant 76 : index
    %382 = memref.load %arg3[%c76] : memref<216xf32, #tpu.memory_space<smem>>
    %383 = vector.broadcast %382 : f32 to vector<8x128xf32>
    %384 = arith.mulf %377, %383 : vector<8x128xf32>
    %385 = arith.addf %368, %384 : vector<8x128xf32>
    %c130 = arith.constant 130 : index
    %386 = memref.load %arg3[%c130] : memref<216xf32, #tpu.memory_space<smem>>
    %387 = vector.broadcast %386 : f32 to vector<8x128xf32>
    %388 = arith.mulf %377, %387 : vector<8x128xf32>
    %389 = arith.addf %372, %388 : vector<8x128xf32>
    %c184 = arith.constant 184 : index
    %390 = memref.load %arg3[%c184] : memref<216xf32, #tpu.memory_space<smem>>
    %391 = vector.broadcast %390 : f32 to vector<8x128xf32>
    %392 = arith.mulf %377, %391 : vector<8x128xf32>
    %393 = arith.addf %376, %392 : vector<8x128xf32>
    %394 = vector.extract_strided_slice %308 {offsets = [0, 12], sizes = [8, 128], strides = [1, 1]} : vector<8x256xf32> to vector<8x128xf32>
    %c23 = arith.constant 23 : index
    %395 = memref.load %arg3[%c23] : memref<216xf32, #tpu.memory_space<smem>>
    %396 = vector.broadcast %395 : f32 to vector<8x128xf32>
    %397 = arith.mulf %394, %396 : vector<8x128xf32>
    %398 = arith.addf %381, %397 : vector<8x128xf32>
    %c77 = arith.constant 77 : index
    %399 = memref.load %arg3[%c77] : memref<216xf32, #tpu.memory_space<smem>>
    %400 = vector.broadcast %399 : f32 to vector<8x128xf32>
    %401 = arith.mulf %394, %400 : vector<8x128xf32>
    %402 = arith.addf %385, %401 : vector<8x128xf32>
    %c131 = arith.constant 131 : index
    %403 = memref.load %arg3[%c131] : memref<216xf32, #tpu.memory_space<smem>>
    %404 = vector.broadcast %403 : f32 to vector<8x128xf32>
    %405 = arith.mulf %394, %404 : vector<8x128xf32>
    %406 = arith.addf %389, %405 : vector<8x128xf32>
    %c185 = arith.constant 185 : index
    %407 = memref.load %arg3[%c185] : memref<216xf32, #tpu.memory_space<smem>>
    %408 = vector.broadcast %407 : f32 to vector<8x128xf32>
    %409 = arith.mulf %394, %408 : vector<8x128xf32>
    %410 = arith.addf %393, %409 : vector<8x128xf32>
    %411 = vector.extract_strided_slice %308 {offsets = [0, 20], sizes = [8, 128], strides = [1, 1]} : vector<8x256xf32> to vector<8x128xf32>
    %c24 = arith.constant 24 : index
    %412 = memref.load %arg3[%c24] : memref<216xf32, #tpu.memory_space<smem>>
    %413 = vector.broadcast %412 : f32 to vector<8x128xf32>
    %414 = arith.mulf %411, %413 : vector<8x128xf32>
    %415 = arith.addf %398, %414 : vector<8x128xf32>
    %c78 = arith.constant 78 : index
    %416 = memref.load %arg3[%c78] : memref<216xf32, #tpu.memory_space<smem>>
    %417 = vector.broadcast %416 : f32 to vector<8x128xf32>
    %418 = arith.mulf %411, %417 : vector<8x128xf32>
    %419 = arith.addf %402, %418 : vector<8x128xf32>
    %c132 = arith.constant 132 : index
    %420 = memref.load %arg3[%c132] : memref<216xf32, #tpu.memory_space<smem>>
    %421 = vector.broadcast %420 : f32 to vector<8x128xf32>
    %422 = arith.mulf %411, %421 : vector<8x128xf32>
    %423 = arith.addf %406, %422 : vector<8x128xf32>
    %c186 = arith.constant 186 : index
    %424 = memref.load %arg3[%c186] : memref<216xf32, #tpu.memory_space<smem>>
    %425 = vector.broadcast %424 : f32 to vector<8x128xf32>
    %426 = arith.mulf %411, %425 : vector<8x128xf32>
    %427 = arith.addf %410, %426 : vector<8x128xf32>
    %428 = vector.extract_strided_slice %308 {offsets = [0, 21], sizes = [8, 128], strides = [1, 1]} : vector<8x256xf32> to vector<8x128xf32>
    %c25 = arith.constant 25 : index
    %429 = memref.load %arg3[%c25] : memref<216xf32, #tpu.memory_space<smem>>
    %430 = vector.broadcast %429 : f32 to vector<8x128xf32>
    %431 = arith.mulf %428, %430 : vector<8x128xf32>
    %432 = arith.addf %415, %431 : vector<8x128xf32>
    %c79 = arith.constant 79 : index
    %433 = memref.load %arg3[%c79] : memref<216xf32, #tpu.memory_space<smem>>
    %434 = vector.broadcast %433 : f32 to vector<8x128xf32>
    %435 = arith.mulf %428, %434 : vector<8x128xf32>
    %436 = arith.addf %419, %435 : vector<8x128xf32>
    %c133 = arith.constant 133 : index
    %437 = memref.load %arg3[%c133] : memref<216xf32, #tpu.memory_space<smem>>
    %438 = vector.broadcast %437 : f32 to vector<8x128xf32>
    %439 = arith.mulf %428, %438 : vector<8x128xf32>
    %440 = arith.addf %423, %439 : vector<8x128xf32>
    %c187 = arith.constant 187 : index
    %441 = memref.load %arg3[%c187] : memref<216xf32, #tpu.memory_space<smem>>
    %442 = vector.broadcast %441 : f32 to vector<8x128xf32>
    %443 = arith.mulf %428, %442 : vector<8x128xf32>
    %444 = arith.addf %427, %443 : vector<8x128xf32>
    %445 = vector.extract_strided_slice %308 {offsets = [0, 22], sizes = [8, 128], strides = [1, 1]} : vector<8x256xf32> to vector<8x128xf32>
    %c26 = arith.constant 26 : index
    %446 = memref.load %arg3[%c26] : memref<216xf32, #tpu.memory_space<smem>>
    %447 = vector.broadcast %446 : f32 to vector<8x128xf32>
    %448 = arith.mulf %445, %447 : vector<8x128xf32>
    %449 = arith.addf %432, %448 : vector<8x128xf32>
    %c80 = arith.constant 80 : index
    %450 = memref.load %arg3[%c80] : memref<216xf32, #tpu.memory_space<smem>>
    %451 = vector.broadcast %450 : f32 to vector<8x128xf32>
    %452 = arith.mulf %445, %451 : vector<8x128xf32>
    %453 = arith.addf %436, %452 : vector<8x128xf32>
    %c134 = arith.constant 134 : index
    %454 = memref.load %arg3[%c134] : memref<216xf32, #tpu.memory_space<smem>>
    %455 = vector.broadcast %454 : f32 to vector<8x128xf32>
    %456 = arith.mulf %445, %455 : vector<8x128xf32>
    %457 = arith.addf %440, %456 : vector<8x128xf32>
    %c188 = arith.constant 188 : index
    %458 = memref.load %arg3[%c188] : memref<216xf32, #tpu.memory_space<smem>>
    %459 = vector.broadcast %458 : f32 to vector<8x128xf32>
    %460 = arith.mulf %445, %459 : vector<8x128xf32>
    %461 = arith.addf %444, %460 : vector<8x128xf32>
    %c0_11 = arith.constant 0 : index
    %c10_12 = arith.constant 10 : index
    %c0_13 = arith.constant 0 : index
    %462 = vector.load %arg1[%c0_11, %c10_12, %c0_13] : memref<1x20x256xf32, #tpu.memory_space<vmem>>, vector<1x8x256xf32>
    %463 = vector.shape_cast %462 : vector<1x8x256xf32> to vector<8x256xf32>
    %464 = vector.extract_strided_slice %463 {offsets = [0, 0], sizes = [8, 128], strides = [1, 1]} : vector<8x256xf32> to vector<8x128xf32>
    %c27 = arith.constant 27 : index
    %465 = memref.load %arg3[%c27] : memref<216xf32, #tpu.memory_space<smem>>
    %466 = vector.broadcast %465 : f32 to vector<8x128xf32>
    %467 = arith.mulf %464, %466 : vector<8x128xf32>
    %468 = arith.addf %449, %467 : vector<8x128xf32>
    %c81 = arith.constant 81 : index
    %469 = memref.load %arg3[%c81] : memref<216xf32, #tpu.memory_space<smem>>
    %470 = vector.broadcast %469 : f32 to vector<8x128xf32>
    %471 = arith.mulf %464, %470 : vector<8x128xf32>
    %472 = arith.addf %453, %471 : vector<8x128xf32>
    %c135 = arith.constant 135 : index
    %473 = memref.load %arg3[%c135] : memref<216xf32, #tpu.memory_space<smem>>
    %474 = vector.broadcast %473 : f32 to vector<8x128xf32>
    %475 = arith.mulf %464, %474 : vector<8x128xf32>
    %476 = arith.addf %457, %475 : vector<8x128xf32>
    %c189 = arith.constant 189 : index
    %477 = memref.load %arg3[%c189] : memref<216xf32, #tpu.memory_space<smem>>
    %478 = vector.broadcast %477 : f32 to vector<8x128xf32>
    %479 = arith.mulf %464, %478 : vector<8x128xf32>
    %480 = arith.addf %461, %479 : vector<8x128xf32>
    %481 = vector.extract_strided_slice %463 {offsets = [0, 1], sizes = [8, 128], strides = [1, 1]} : vector<8x256xf32> to vector<8x128xf32>
    %c28 = arith.constant 28 : index
    %482 = memref.load %arg3[%c28] : memref<216xf32, #tpu.memory_space<smem>>
    %483 = vector.broadcast %482 : f32 to vector<8x128xf32>
    %484 = arith.mulf %481, %483 : vector<8x128xf32>
    %485 = arith.addf %468, %484 : vector<8x128xf32>
    %c82 = arith.constant 82 : index
    %486 = memref.load %arg3[%c82] : memref<216xf32, #tpu.memory_space<smem>>
    %487 = vector.broadcast %486 : f32 to vector<8x128xf32>
    %488 = arith.mulf %481, %487 : vector<8x128xf32>
    %489 = arith.addf %472, %488 : vector<8x128xf32>
    %c136 = arith.constant 136 : index
    %490 = memref.load %arg3[%c136] : memref<216xf32, #tpu.memory_space<smem>>
    %491 = vector.broadcast %490 : f32 to vector<8x128xf32>
    %492 = arith.mulf %481, %491 : vector<8x128xf32>
    %493 = arith.addf %476, %492 : vector<8x128xf32>
    %c190 = arith.constant 190 : index
    %494 = memref.load %arg3[%c190] : memref<216xf32, #tpu.memory_space<smem>>
    %495 = vector.broadcast %494 : f32 to vector<8x128xf32>
    %496 = arith.mulf %481, %495 : vector<8x128xf32>
    %497 = arith.addf %480, %496 : vector<8x128xf32>
    %498 = vector.extract_strided_slice %463 {offsets = [0, 2], sizes = [8, 128], strides = [1, 1]} : vector<8x256xf32> to vector<8x128xf32>
    %c29 = arith.constant 29 : index
    %499 = memref.load %arg3[%c29] : memref<216xf32, #tpu.memory_space<smem>>
    %500 = vector.broadcast %499 : f32 to vector<8x128xf32>
    %501 = arith.mulf %498, %500 : vector<8x128xf32>
    %502 = arith.addf %485, %501 : vector<8x128xf32>
    %c83 = arith.constant 83 : index
    %503 = memref.load %arg3[%c83] : memref<216xf32, #tpu.memory_space<smem>>
    %504 = vector.broadcast %503 : f32 to vector<8x128xf32>
    %505 = arith.mulf %498, %504 : vector<8x128xf32>
    %506 = arith.addf %489, %505 : vector<8x128xf32>
    %c137 = arith.constant 137 : index
    %507 = memref.load %arg3[%c137] : memref<216xf32, #tpu.memory_space<smem>>
    %508 = vector.broadcast %507 : f32 to vector<8x128xf32>
    %509 = arith.mulf %498, %508 : vector<8x128xf32>
    %510 = arith.addf %493, %509 : vector<8x128xf32>
    %c191 = arith.constant 191 : index
    %511 = memref.load %arg3[%c191] : memref<216xf32, #tpu.memory_space<smem>>
    %512 = vector.broadcast %511 : f32 to vector<8x128xf32>
    %513 = arith.mulf %498, %512 : vector<8x128xf32>
    %514 = arith.addf %497, %513 : vector<8x128xf32>
    %515 = vector.extract_strided_slice %463 {offsets = [0, 10], sizes = [8, 128], strides = [1, 1]} : vector<8x256xf32> to vector<8x128xf32>
    %c30 = arith.constant 30 : index
    %516 = memref.load %arg3[%c30] : memref<216xf32, #tpu.memory_space<smem>>
    %517 = vector.broadcast %516 : f32 to vector<8x128xf32>
    %518 = arith.mulf %515, %517 : vector<8x128xf32>
    %519 = arith.addf %502, %518 : vector<8x128xf32>
    %c84 = arith.constant 84 : index
    %520 = memref.load %arg3[%c84] : memref<216xf32, #tpu.memory_space<smem>>
    %521 = vector.broadcast %520 : f32 to vector<8x128xf32>
    %522 = arith.mulf %515, %521 : vector<8x128xf32>
    %523 = arith.addf %506, %522 : vector<8x128xf32>
    %c138 = arith.constant 138 : index
    %524 = memref.load %arg3[%c138] : memref<216xf32, #tpu.memory_space<smem>>
    %525 = vector.broadcast %524 : f32 to vector<8x128xf32>
    %526 = arith.mulf %515, %525 : vector<8x128xf32>
    %527 = arith.addf %510, %526 : vector<8x128xf32>
    %c192 = arith.constant 192 : index
    %528 = memref.load %arg3[%c192] : memref<216xf32, #tpu.memory_space<smem>>
    %529 = vector.broadcast %528 : f32 to vector<8x128xf32>
    %530 = arith.mulf %515, %529 : vector<8x128xf32>
    %531 = arith.addf %514, %530 : vector<8x128xf32>
    %532 = vector.extract_strided_slice %463 {offsets = [0, 11], sizes = [8, 128], strides = [1, 1]} : vector<8x256xf32> to vector<8x128xf32>
    %c31 = arith.constant 31 : index
    %533 = memref.load %arg3[%c31] : memref<216xf32, #tpu.memory_space<smem>>
    %534 = vector.broadcast %533 : f32 to vector<8x128xf32>
    %535 = arith.mulf %532, %534 : vector<8x128xf32>
    %536 = arith.addf %519, %535 : vector<8x128xf32>
    %c85 = arith.constant 85 : index
    %537 = memref.load %arg3[%c85] : memref<216xf32, #tpu.memory_space<smem>>
    %538 = vector.broadcast %537 : f32 to vector<8x128xf32>
    %539 = arith.mulf %532, %538 : vector<8x128xf32>
    %540 = arith.addf %523, %539 : vector<8x128xf32>
    %c139 = arith.constant 139 : index
    %541 = memref.load %arg3[%c139] : memref<216xf32, #tpu.memory_space<smem>>
    %542 = vector.broadcast %541 : f32 to vector<8x128xf32>
    %543 = arith.mulf %532, %542 : vector<8x128xf32>
    %544 = arith.addf %527, %543 : vector<8x128xf32>
    %c193 = arith.constant 193 : index
    %545 = memref.load %arg3[%c193] : memref<216xf32, #tpu.memory_space<smem>>
    %546 = vector.broadcast %545 : f32 to vector<8x128xf32>
    %547 = arith.mulf %532, %546 : vector<8x128xf32>
    %548 = arith.addf %531, %547 : vector<8x128xf32>
    %549 = vector.extract_strided_slice %463 {offsets = [0, 12], sizes = [8, 128], strides = [1, 1]} : vector<8x256xf32> to vector<8x128xf32>
    %c32 = arith.constant 32 : index
    %550 = memref.load %arg3[%c32] : memref<216xf32, #tpu.memory_space<smem>>
    %551 = vector.broadcast %550 : f32 to vector<8x128xf32>
    %552 = arith.mulf %549, %551 : vector<8x128xf32>
    %553 = arith.addf %536, %552 : vector<8x128xf32>
    %c86 = arith.constant 86 : index
    %554 = memref.load %arg3[%c86] : memref<216xf32, #tpu.memory_space<smem>>
    %555 = vector.broadcast %554 : f32 to vector<8x128xf32>
    %556 = arith.mulf %549, %555 : vector<8x128xf32>
    %557 = arith.addf %540, %556 : vector<8x128xf32>
    %c140 = arith.constant 140 : index
    %558 = memref.load %arg3[%c140] : memref<216xf32, #tpu.memory_space<smem>>
    %559 = vector.broadcast %558 : f32 to vector<8x128xf32>
    %560 = arith.mulf %549, %559 : vector<8x128xf32>
    %561 = arith.addf %544, %560 : vector<8x128xf32>
    %c194 = arith.constant 194 : index
    %562 = memref.load %arg3[%c194] : memref<216xf32, #tpu.memory_space<smem>>
    %563 = vector.broadcast %562 : f32 to vector<8x128xf32>
    %564 = arith.mulf %549, %563 : vector<8x128xf32>
    %565 = arith.addf %548, %564 : vector<8x128xf32>
    %566 = vector.extract_strided_slice %463 {offsets = [0, 20], sizes = [8, 128], strides = [1, 1]} : vector<8x256xf32> to vector<8x128xf32>
    %c33 = arith.constant 33 : index
    %567 = memref.load %arg3[%c33] : memref<216xf32, #tpu.memory_space<smem>>
    %568 = vector.broadcast %567 : f32 to vector<8x128xf32>
    %569 = arith.mulf %566, %568 : vector<8x128xf32>
    %570 = arith.addf %553, %569 : vector<8x128xf32>
    %c87 = arith.constant 87 : index
    %571 = memref.load %arg3[%c87] : memref<216xf32, #tpu.memory_space<smem>>
    %572 = vector.broadcast %571 : f32 to vector<8x128xf32>
    %573 = arith.mulf %566, %572 : vector<8x128xf32>
    %574 = arith.addf %557, %573 : vector<8x128xf32>
    %c141 = arith.constant 141 : index
    %575 = memref.load %arg3[%c141] : memref<216xf32, #tpu.memory_space<smem>>
    %576 = vector.broadcast %575 : f32 to vector<8x128xf32>
    %577 = arith.mulf %566, %576 : vector<8x128xf32>
    %578 = arith.addf %561, %577 : vector<8x128xf32>
    %c195 = arith.constant 195 : index
    %579 = memref.load %arg3[%c195] : memref<216xf32, #tpu.memory_space<smem>>
    %580 = vector.broadcast %579 : f32 to vector<8x128xf32>
    %581 = arith.mulf %566, %580 : vector<8x128xf32>
    %582 = arith.addf %565, %581 : vector<8x128xf32>
    %583 = vector.extract_strided_slice %463 {offsets = [0, 21], sizes = [8, 128], strides = [1, 1]} : vector<8x256xf32> to vector<8x128xf32>
    %c34 = arith.constant 34 : index
    %584 = memref.load %arg3[%c34] : memref<216xf32, #tpu.memory_space<smem>>
    %585 = vector.broadcast %584 : f32 to vector<8x128xf32>
    %586 = arith.mulf %583, %585 : vector<8x128xf32>
    %587 = arith.addf %570, %586 : vector<8x128xf32>
    %c88 = arith.constant 88 : index
    %588 = memref.load %arg3[%c88] : memref<216xf32, #tpu.memory_space<smem>>
    %589 = vector.broadcast %588 : f32 to vector<8x128xf32>
    %590 = arith.mulf %583, %589 : vector<8x128xf32>
    %591 = arith.addf %574, %590 : vector<8x128xf32>
    %c142 = arith.constant 142 : index
    %592 = memref.load %arg3[%c142] : memref<216xf32, #tpu.memory_space<smem>>
    %593 = vector.broadcast %592 : f32 to vector<8x128xf32>
    %594 = arith.mulf %583, %593 : vector<8x128xf32>
    %595 = arith.addf %578, %594 : vector<8x128xf32>
    %c196 = arith.constant 196 : index
    %596 = memref.load %arg3[%c196] : memref<216xf32, #tpu.memory_space<smem>>
    %597 = vector.broadcast %596 : f32 to vector<8x128xf32>
    %598 = arith.mulf %583, %597 : vector<8x128xf32>
    %599 = arith.addf %582, %598 : vector<8x128xf32>
    %600 = vector.extract_strided_slice %463 {offsets = [0, 22], sizes = [8, 128], strides = [1, 1]} : vector<8x256xf32> to vector<8x128xf32>
    %c35 = arith.constant 35 : index
    %601 = memref.load %arg3[%c35] : memref<216xf32, #tpu.memory_space<smem>>
    %602 = vector.broadcast %601 : f32 to vector<8x128xf32>
    %603 = arith.mulf %600, %602 : vector<8x128xf32>
    %604 = arith.addf %587, %603 : vector<8x128xf32>
    %c89 = arith.constant 89 : index
    %605 = memref.load %arg3[%c89] : memref<216xf32, #tpu.memory_space<smem>>
    %606 = vector.broadcast %605 : f32 to vector<8x128xf32>
    %607 = arith.mulf %600, %606 : vector<8x128xf32>
    %608 = arith.addf %591, %607 : vector<8x128xf32>
    %c143 = arith.constant 143 : index
    %609 = memref.load %arg3[%c143] : memref<216xf32, #tpu.memory_space<smem>>
    %610 = vector.broadcast %609 : f32 to vector<8x128xf32>
    %611 = arith.mulf %600, %610 : vector<8x128xf32>
    %612 = arith.addf %595, %611 : vector<8x128xf32>
    %c197 = arith.constant 197 : index
    %613 = memref.load %arg3[%c197] : memref<216xf32, #tpu.memory_space<smem>>
    %614 = vector.broadcast %613 : f32 to vector<8x128xf32>
    %615 = arith.mulf %600, %614 : vector<8x128xf32>
    %616 = arith.addf %599, %615 : vector<8x128xf32>
    %c0_14 = arith.constant 0 : index
    %c11_15 = arith.constant 11 : index
    %c0_16 = arith.constant 0 : index
    %617 = vector.load %arg1[%c0_14, %c11_15, %c0_16] : memref<1x20x256xf32, #tpu.memory_space<vmem>>, vector<1x8x256xf32>
    %618 = vector.shape_cast %617 : vector<1x8x256xf32> to vector<8x256xf32>
    %619 = vector.extract_strided_slice %618 {offsets = [0, 0], sizes = [8, 128], strides = [1, 1]} : vector<8x256xf32> to vector<8x128xf32>
    %c36 = arith.constant 36 : index
    %620 = memref.load %arg3[%c36] : memref<216xf32, #tpu.memory_space<smem>>
    %621 = vector.broadcast %620 : f32 to vector<8x128xf32>
    %622 = arith.mulf %619, %621 : vector<8x128xf32>
    %623 = arith.addf %604, %622 : vector<8x128xf32>
    %c90 = arith.constant 90 : index
    %624 = memref.load %arg3[%c90] : memref<216xf32, #tpu.memory_space<smem>>
    %625 = vector.broadcast %624 : f32 to vector<8x128xf32>
    %626 = arith.mulf %619, %625 : vector<8x128xf32>
    %627 = arith.addf %608, %626 : vector<8x128xf32>
    %c144 = arith.constant 144 : index
    %628 = memref.load %arg3[%c144] : memref<216xf32, #tpu.memory_space<smem>>
    %629 = vector.broadcast %628 : f32 to vector<8x128xf32>
    %630 = arith.mulf %619, %629 : vector<8x128xf32>
    %631 = arith.addf %612, %630 : vector<8x128xf32>
    %c198 = arith.constant 198 : index
    %632 = memref.load %arg3[%c198] : memref<216xf32, #tpu.memory_space<smem>>
    %633 = vector.broadcast %632 : f32 to vector<8x128xf32>
    %634 = arith.mulf %619, %633 : vector<8x128xf32>
    %635 = arith.addf %616, %634 : vector<8x128xf32>
    %636 = vector.extract_strided_slice %618 {offsets = [0, 1], sizes = [8, 128], strides = [1, 1]} : vector<8x256xf32> to vector<8x128xf32>
    %c37 = arith.constant 37 : index
    %637 = memref.load %arg3[%c37] : memref<216xf32, #tpu.memory_space<smem>>
    %638 = vector.broadcast %637 : f32 to vector<8x128xf32>
    %639 = arith.mulf %636, %638 : vector<8x128xf32>
    %640 = arith.addf %623, %639 : vector<8x128xf32>
    %c91 = arith.constant 91 : index
    %641 = memref.load %arg3[%c91] : memref<216xf32, #tpu.memory_space<smem>>
    %642 = vector.broadcast %641 : f32 to vector<8x128xf32>
    %643 = arith.mulf %636, %642 : vector<8x128xf32>
    %644 = arith.addf %627, %643 : vector<8x128xf32>
    %c145 = arith.constant 145 : index
    %645 = memref.load %arg3[%c145] : memref<216xf32, #tpu.memory_space<smem>>
    %646 = vector.broadcast %645 : f32 to vector<8x128xf32>
    %647 = arith.mulf %636, %646 : vector<8x128xf32>
    %648 = arith.addf %631, %647 : vector<8x128xf32>
    %c199 = arith.constant 199 : index
    %649 = memref.load %arg3[%c199] : memref<216xf32, #tpu.memory_space<smem>>
    %650 = vector.broadcast %649 : f32 to vector<8x128xf32>
    %651 = arith.mulf %636, %650 : vector<8x128xf32>
    %652 = arith.addf %635, %651 : vector<8x128xf32>
    %653 = vector.extract_strided_slice %618 {offsets = [0, 2], sizes = [8, 128], strides = [1, 1]} : vector<8x256xf32> to vector<8x128xf32>
    %c38 = arith.constant 38 : index
    %654 = memref.load %arg3[%c38] : memref<216xf32, #tpu.memory_space<smem>>
    %655 = vector.broadcast %654 : f32 to vector<8x128xf32>
    %656 = arith.mulf %653, %655 : vector<8x128xf32>
    %657 = arith.addf %640, %656 : vector<8x128xf32>
    %c92 = arith.constant 92 : index
    %658 = memref.load %arg3[%c92] : memref<216xf32, #tpu.memory_space<smem>>
    %659 = vector.broadcast %658 : f32 to vector<8x128xf32>
    %660 = arith.mulf %653, %659 : vector<8x128xf32>
    %661 = arith.addf %644, %660 : vector<8x128xf32>
    %c146 = arith.constant 146 : index
    %662 = memref.load %arg3[%c146] : memref<216xf32, #tpu.memory_space<smem>>
    %663 = vector.broadcast %662 : f32 to vector<8x128xf32>
    %664 = arith.mulf %653, %663 : vector<8x128xf32>
    %665 = arith.addf %648, %664 : vector<8x128xf32>
    %c200 = arith.constant 200 : index
    %666 = memref.load %arg3[%c200] : memref<216xf32, #tpu.memory_space<smem>>
    %667 = vector.broadcast %666 : f32 to vector<8x128xf32>
    %668 = arith.mulf %653, %667 : vector<8x128xf32>
    %669 = arith.addf %652, %668 : vector<8x128xf32>
    %670 = vector.extract_strided_slice %618 {offsets = [0, 10], sizes = [8, 128], strides = [1, 1]} : vector<8x256xf32> to vector<8x128xf32>
    %c39 = arith.constant 39 : index
    %671 = memref.load %arg3[%c39] : memref<216xf32, #tpu.memory_space<smem>>
    %672 = vector.broadcast %671 : f32 to vector<8x128xf32>
    %673 = arith.mulf %670, %672 : vector<8x128xf32>
    %674 = arith.addf %657, %673 : vector<8x128xf32>
    %c93 = arith.constant 93 : index
    %675 = memref.load %arg3[%c93] : memref<216xf32, #tpu.memory_space<smem>>
    %676 = vector.broadcast %675 : f32 to vector<8x128xf32>
    %677 = arith.mulf %670, %676 : vector<8x128xf32>
    %678 = arith.addf %661, %677 : vector<8x128xf32>
    %c147 = arith.constant 147 : index
    %679 = memref.load %arg3[%c147] : memref<216xf32, #tpu.memory_space<smem>>
    %680 = vector.broadcast %679 : f32 to vector<8x128xf32>
    %681 = arith.mulf %670, %680 : vector<8x128xf32>
    %682 = arith.addf %665, %681 : vector<8x128xf32>
    %c201 = arith.constant 201 : index
    %683 = memref.load %arg3[%c201] : memref<216xf32, #tpu.memory_space<smem>>
    %684 = vector.broadcast %683 : f32 to vector<8x128xf32>
    %685 = arith.mulf %670, %684 : vector<8x128xf32>
    %686 = arith.addf %669, %685 : vector<8x128xf32>
    %687 = vector.extract_strided_slice %618 {offsets = [0, 11], sizes = [8, 128], strides = [1, 1]} : vector<8x256xf32> to vector<8x128xf32>
    %c40 = arith.constant 40 : index
    %688 = memref.load %arg3[%c40] : memref<216xf32, #tpu.memory_space<smem>>
    %689 = vector.broadcast %688 : f32 to vector<8x128xf32>
    %690 = arith.mulf %687, %689 : vector<8x128xf32>
    %691 = arith.addf %674, %690 : vector<8x128xf32>
    %c94 = arith.constant 94 : index
    %692 = memref.load %arg3[%c94] : memref<216xf32, #tpu.memory_space<smem>>
    %693 = vector.broadcast %692 : f32 to vector<8x128xf32>
    %694 = arith.mulf %687, %693 : vector<8x128xf32>
    %695 = arith.addf %678, %694 : vector<8x128xf32>
    %c148 = arith.constant 148 : index
    %696 = memref.load %arg3[%c148] : memref<216xf32, #tpu.memory_space<smem>>
    %697 = vector.broadcast %696 : f32 to vector<8x128xf32>
    %698 = arith.mulf %687, %697 : vector<8x128xf32>
    %699 = arith.addf %682, %698 : vector<8x128xf32>
    %c202 = arith.constant 202 : index
    %700 = memref.load %arg3[%c202] : memref<216xf32, #tpu.memory_space<smem>>
    %701 = vector.broadcast %700 : f32 to vector<8x128xf32>
    %702 = arith.mulf %687, %701 : vector<8x128xf32>
    %703 = arith.addf %686, %702 : vector<8x128xf32>
    %704 = vector.extract_strided_slice %618 {offsets = [0, 12], sizes = [8, 128], strides = [1, 1]} : vector<8x256xf32> to vector<8x128xf32>
    %c41 = arith.constant 41 : index
    %705 = memref.load %arg3[%c41] : memref<216xf32, #tpu.memory_space<smem>>
    %706 = vector.broadcast %705 : f32 to vector<8x128xf32>
    %707 = arith.mulf %704, %706 : vector<8x128xf32>
    %708 = arith.addf %691, %707 : vector<8x128xf32>
    %c95 = arith.constant 95 : index
    %709 = memref.load %arg3[%c95] : memref<216xf32, #tpu.memory_space<smem>>
    %710 = vector.broadcast %709 : f32 to vector<8x128xf32>
    %711 = arith.mulf %704, %710 : vector<8x128xf32>
    %712 = arith.addf %695, %711 : vector<8x128xf32>
    %c149 = arith.constant 149 : index
    %713 = memref.load %arg3[%c149] : memref<216xf32, #tpu.memory_space<smem>>
    %714 = vector.broadcast %713 : f32 to vector<8x128xf32>
    %715 = arith.mulf %704, %714 : vector<8x128xf32>
    %716 = arith.addf %699, %715 : vector<8x128xf32>
    %c203 = arith.constant 203 : index
    %717 = memref.load %arg3[%c203] : memref<216xf32, #tpu.memory_space<smem>>
    %718 = vector.broadcast %717 : f32 to vector<8x128xf32>
    %719 = arith.mulf %704, %718 : vector<8x128xf32>
    %720 = arith.addf %703, %719 : vector<8x128xf32>
    %721 = vector.extract_strided_slice %618 {offsets = [0, 20], sizes = [8, 128], strides = [1, 1]} : vector<8x256xf32> to vector<8x128xf32>
    %c42 = arith.constant 42 : index
    %722 = memref.load %arg3[%c42] : memref<216xf32, #tpu.memory_space<smem>>
    %723 = vector.broadcast %722 : f32 to vector<8x128xf32>
    %724 = arith.mulf %721, %723 : vector<8x128xf32>
    %725 = arith.addf %708, %724 : vector<8x128xf32>
    %c96 = arith.constant 96 : index
    %726 = memref.load %arg3[%c96] : memref<216xf32, #tpu.memory_space<smem>>
    %727 = vector.broadcast %726 : f32 to vector<8x128xf32>
    %728 = arith.mulf %721, %727 : vector<8x128xf32>
    %729 = arith.addf %712, %728 : vector<8x128xf32>
    %c150 = arith.constant 150 : index
    %730 = memref.load %arg3[%c150] : memref<216xf32, #tpu.memory_space<smem>>
    %731 = vector.broadcast %730 : f32 to vector<8x128xf32>
    %732 = arith.mulf %721, %731 : vector<8x128xf32>
    %733 = arith.addf %716, %732 : vector<8x128xf32>
    %c204 = arith.constant 204 : index
    %734 = memref.load %arg3[%c204] : memref<216xf32, #tpu.memory_space<smem>>
    %735 = vector.broadcast %734 : f32 to vector<8x128xf32>
    %736 = arith.mulf %721, %735 : vector<8x128xf32>
    %737 = arith.addf %720, %736 : vector<8x128xf32>
    %738 = vector.extract_strided_slice %618 {offsets = [0, 21], sizes = [8, 128], strides = [1, 1]} : vector<8x256xf32> to vector<8x128xf32>
    %c43 = arith.constant 43 : index
    %739 = memref.load %arg3[%c43] : memref<216xf32, #tpu.memory_space<smem>>
    %740 = vector.broadcast %739 : f32 to vector<8x128xf32>
    %741 = arith.mulf %738, %740 : vector<8x128xf32>
    %742 = arith.addf %725, %741 : vector<8x128xf32>
    %c97 = arith.constant 97 : index
    %743 = memref.load %arg3[%c97] : memref<216xf32, #tpu.memory_space<smem>>
    %744 = vector.broadcast %743 : f32 to vector<8x128xf32>
    %745 = arith.mulf %738, %744 : vector<8x128xf32>
    %746 = arith.addf %729, %745 : vector<8x128xf32>
    %c151 = arith.constant 151 : index
    %747 = memref.load %arg3[%c151] : memref<216xf32, #tpu.memory_space<smem>>
    %748 = vector.broadcast %747 : f32 to vector<8x128xf32>
    %749 = arith.mulf %738, %748 : vector<8x128xf32>
    %750 = arith.addf %733, %749 : vector<8x128xf32>
    %c205 = arith.constant 205 : index
    %751 = memref.load %arg3[%c205] : memref<216xf32, #tpu.memory_space<smem>>
    %752 = vector.broadcast %751 : f32 to vector<8x128xf32>
    %753 = arith.mulf %738, %752 : vector<8x128xf32>
    %754 = arith.addf %737, %753 : vector<8x128xf32>
    %755 = vector.extract_strided_slice %618 {offsets = [0, 22], sizes = [8, 128], strides = [1, 1]} : vector<8x256xf32> to vector<8x128xf32>
    %c44 = arith.constant 44 : index
    %756 = memref.load %arg3[%c44] : memref<216xf32, #tpu.memory_space<smem>>
    %757 = vector.broadcast %756 : f32 to vector<8x128xf32>
    %758 = arith.mulf %755, %757 : vector<8x128xf32>
    %759 = arith.addf %742, %758 : vector<8x128xf32>
    %c98 = arith.constant 98 : index
    %760 = memref.load %arg3[%c98] : memref<216xf32, #tpu.memory_space<smem>>
    %761 = vector.broadcast %760 : f32 to vector<8x128xf32>
    %762 = arith.mulf %755, %761 : vector<8x128xf32>
    %763 = arith.addf %746, %762 : vector<8x128xf32>
    %c152 = arith.constant 152 : index
    %764 = memref.load %arg3[%c152] : memref<216xf32, #tpu.memory_space<smem>>
    %765 = vector.broadcast %764 : f32 to vector<8x128xf32>
    %766 = arith.mulf %755, %765 : vector<8x128xf32>
    %767 = arith.addf %750, %766 : vector<8x128xf32>
    %c206 = arith.constant 206 : index
    %768 = memref.load %arg3[%c206] : memref<216xf32, #tpu.memory_space<smem>>
    %769 = vector.broadcast %768 : f32 to vector<8x128xf32>
    %770 = arith.mulf %755, %769 : vector<8x128xf32>
    %771 = arith.addf %754, %770 : vector<8x128xf32>
    %c0_17 = arith.constant 0 : index
    %c12_18 = arith.constant 12 : index
    %c0_19 = arith.constant 0 : index
    %772 = vector.load %arg1[%c0_17, %c12_18, %c0_19] : memref<1x20x256xf32, #tpu.memory_space<vmem>>, vector<1x8x256xf32>
    %773 = vector.shape_cast %772 : vector<1x8x256xf32> to vector<8x256xf32>
    %774 = vector.extract_strided_slice %773 {offsets = [0, 0], sizes = [8, 128], strides = [1, 1]} : vector<8x256xf32> to vector<8x128xf32>
    %c45 = arith.constant 45 : index
    %775 = memref.load %arg3[%c45] : memref<216xf32, #tpu.memory_space<smem>>
    %776 = vector.broadcast %775 : f32 to vector<8x128xf32>
    %777 = arith.mulf %774, %776 : vector<8x128xf32>
    %778 = arith.addf %759, %777 : vector<8x128xf32>
    %c99 = arith.constant 99 : index
    %779 = memref.load %arg3[%c99] : memref<216xf32, #tpu.memory_space<smem>>
    %780 = vector.broadcast %779 : f32 to vector<8x128xf32>
    %781 = arith.mulf %774, %780 : vector<8x128xf32>
    %782 = arith.addf %763, %781 : vector<8x128xf32>
    %c153 = arith.constant 153 : index
    %783 = memref.load %arg3[%c153] : memref<216xf32, #tpu.memory_space<smem>>
    %784 = vector.broadcast %783 : f32 to vector<8x128xf32>
    %785 = arith.mulf %774, %784 : vector<8x128xf32>
    %786 = arith.addf %767, %785 : vector<8x128xf32>
    %c207 = arith.constant 207 : index
    %787 = memref.load %arg3[%c207] : memref<216xf32, #tpu.memory_space<smem>>
    %788 = vector.broadcast %787 : f32 to vector<8x128xf32>
    %789 = arith.mulf %774, %788 : vector<8x128xf32>
    %790 = arith.addf %771, %789 : vector<8x128xf32>
    %791 = vector.extract_strided_slice %773 {offsets = [0, 1], sizes = [8, 128], strides = [1, 1]} : vector<8x256xf32> to vector<8x128xf32>
    %c46 = arith.constant 46 : index
    %792 = memref.load %arg3[%c46] : memref<216xf32, #tpu.memory_space<smem>>
    %793 = vector.broadcast %792 : f32 to vector<8x128xf32>
    %794 = arith.mulf %791, %793 : vector<8x128xf32>
    %795 = arith.addf %778, %794 : vector<8x128xf32>
    %c100 = arith.constant 100 : index
    %796 = memref.load %arg3[%c100] : memref<216xf32, #tpu.memory_space<smem>>
    %797 = vector.broadcast %796 : f32 to vector<8x128xf32>
    %798 = arith.mulf %791, %797 : vector<8x128xf32>
    %799 = arith.addf %782, %798 : vector<8x128xf32>
    %c154 = arith.constant 154 : index
    %800 = memref.load %arg3[%c154] : memref<216xf32, #tpu.memory_space<smem>>
    %801 = vector.broadcast %800 : f32 to vector<8x128xf32>
    %802 = arith.mulf %791, %801 : vector<8x128xf32>
    %803 = arith.addf %786, %802 : vector<8x128xf32>
    %c208 = arith.constant 208 : index
    %804 = memref.load %arg3[%c208] : memref<216xf32, #tpu.memory_space<smem>>
    %805 = vector.broadcast %804 : f32 to vector<8x128xf32>
    %806 = arith.mulf %791, %805 : vector<8x128xf32>
    %807 = arith.addf %790, %806 : vector<8x128xf32>
    %808 = vector.extract_strided_slice %773 {offsets = [0, 2], sizes = [8, 128], strides = [1, 1]} : vector<8x256xf32> to vector<8x128xf32>
    %c47 = arith.constant 47 : index
    %809 = memref.load %arg3[%c47] : memref<216xf32, #tpu.memory_space<smem>>
    %810 = vector.broadcast %809 : f32 to vector<8x128xf32>
    %811 = arith.mulf %808, %810 : vector<8x128xf32>
    %812 = arith.addf %795, %811 : vector<8x128xf32>
    %c101 = arith.constant 101 : index
    %813 = memref.load %arg3[%c101] : memref<216xf32, #tpu.memory_space<smem>>
    %814 = vector.broadcast %813 : f32 to vector<8x128xf32>
    %815 = arith.mulf %808, %814 : vector<8x128xf32>
    %816 = arith.addf %799, %815 : vector<8x128xf32>
    %c155 = arith.constant 155 : index
    %817 = memref.load %arg3[%c155] : memref<216xf32, #tpu.memory_space<smem>>
    %818 = vector.broadcast %817 : f32 to vector<8x128xf32>
    %819 = arith.mulf %808, %818 : vector<8x128xf32>
    %820 = arith.addf %803, %819 : vector<8x128xf32>
    %c209 = arith.constant 209 : index
    %821 = memref.load %arg3[%c209] : memref<216xf32, #tpu.memory_space<smem>>
    %822 = vector.broadcast %821 : f32 to vector<8x128xf32>
    %823 = arith.mulf %808, %822 : vector<8x128xf32>
    %824 = arith.addf %807, %823 : vector<8x128xf32>
    %825 = vector.extract_strided_slice %773 {offsets = [0, 10], sizes = [8, 128], strides = [1, 1]} : vector<8x256xf32> to vector<8x128xf32>
    %c48 = arith.constant 48 : index
    %826 = memref.load %arg3[%c48] : memref<216xf32, #tpu.memory_space<smem>>
    %827 = vector.broadcast %826 : f32 to vector<8x128xf32>
    %828 = arith.mulf %825, %827 : vector<8x128xf32>
    %829 = arith.addf %812, %828 : vector<8x128xf32>
    %c102 = arith.constant 102 : index
    %830 = memref.load %arg3[%c102] : memref<216xf32, #tpu.memory_space<smem>>
    %831 = vector.broadcast %830 : f32 to vector<8x128xf32>
    %832 = arith.mulf %825, %831 : vector<8x128xf32>
    %833 = arith.addf %816, %832 : vector<8x128xf32>
    %c156 = arith.constant 156 : index
    %834 = memref.load %arg3[%c156] : memref<216xf32, #tpu.memory_space<smem>>
    %835 = vector.broadcast %834 : f32 to vector<8x128xf32>
    %836 = arith.mulf %825, %835 : vector<8x128xf32>
    %837 = arith.addf %820, %836 : vector<8x128xf32>
    %c210 = arith.constant 210 : index
    %838 = memref.load %arg3[%c210] : memref<216xf32, #tpu.memory_space<smem>>
    %839 = vector.broadcast %838 : f32 to vector<8x128xf32>
    %840 = arith.mulf %825, %839 : vector<8x128xf32>
    %841 = arith.addf %824, %840 : vector<8x128xf32>
    %842 = vector.extract_strided_slice %773 {offsets = [0, 11], sizes = [8, 128], strides = [1, 1]} : vector<8x256xf32> to vector<8x128xf32>
    %c49 = arith.constant 49 : index
    %843 = memref.load %arg3[%c49] : memref<216xf32, #tpu.memory_space<smem>>
    %844 = vector.broadcast %843 : f32 to vector<8x128xf32>
    %845 = arith.mulf %842, %844 : vector<8x128xf32>
    %846 = arith.addf %829, %845 : vector<8x128xf32>
    %c103 = arith.constant 103 : index
    %847 = memref.load %arg3[%c103] : memref<216xf32, #tpu.memory_space<smem>>
    %848 = vector.broadcast %847 : f32 to vector<8x128xf32>
    %849 = arith.mulf %842, %848 : vector<8x128xf32>
    %850 = arith.addf %833, %849 : vector<8x128xf32>
    %c157 = arith.constant 157 : index
    %851 = memref.load %arg3[%c157] : memref<216xf32, #tpu.memory_space<smem>>
    %852 = vector.broadcast %851 : f32 to vector<8x128xf32>
    %853 = arith.mulf %842, %852 : vector<8x128xf32>
    %854 = arith.addf %837, %853 : vector<8x128xf32>
    %c211 = arith.constant 211 : index
    %855 = memref.load %arg3[%c211] : memref<216xf32, #tpu.memory_space<smem>>
    %856 = vector.broadcast %855 : f32 to vector<8x128xf32>
    %857 = arith.mulf %842, %856 : vector<8x128xf32>
    %858 = arith.addf %841, %857 : vector<8x128xf32>
    %859 = vector.extract_strided_slice %773 {offsets = [0, 12], sizes = [8, 128], strides = [1, 1]} : vector<8x256xf32> to vector<8x128xf32>
    %c50 = arith.constant 50 : index
    %860 = memref.load %arg3[%c50] : memref<216xf32, #tpu.memory_space<smem>>
    %861 = vector.broadcast %860 : f32 to vector<8x128xf32>
    %862 = arith.mulf %859, %861 : vector<8x128xf32>
    %863 = arith.addf %846, %862 : vector<8x128xf32>
    %c104 = arith.constant 104 : index
    %864 = memref.load %arg3[%c104] : memref<216xf32, #tpu.memory_space<smem>>
    %865 = vector.broadcast %864 : f32 to vector<8x128xf32>
    %866 = arith.mulf %859, %865 : vector<8x128xf32>
    %867 = arith.addf %850, %866 : vector<8x128xf32>
    %c158 = arith.constant 158 : index
    %868 = memref.load %arg3[%c158] : memref<216xf32, #tpu.memory_space<smem>>
    %869 = vector.broadcast %868 : f32 to vector<8x128xf32>
    %870 = arith.mulf %859, %869 : vector<8x128xf32>
    %871 = arith.addf %854, %870 : vector<8x128xf32>
    %c212 = arith.constant 212 : index
    %872 = memref.load %arg3[%c212] : memref<216xf32, #tpu.memory_space<smem>>
    %873 = vector.broadcast %872 : f32 to vector<8x128xf32>
    %874 = arith.mulf %859, %873 : vector<8x128xf32>
    %875 = arith.addf %858, %874 : vector<8x128xf32>
    %876 = vector.extract_strided_slice %773 {offsets = [0, 20], sizes = [8, 128], strides = [1, 1]} : vector<8x256xf32> to vector<8x128xf32>
    %c51 = arith.constant 51 : index
    %877 = memref.load %arg3[%c51] : memref<216xf32, #tpu.memory_space<smem>>
    %878 = vector.broadcast %877 : f32 to vector<8x128xf32>
    %879 = arith.mulf %876, %878 : vector<8x128xf32>
    %880 = arith.addf %863, %879 : vector<8x128xf32>
    %c105 = arith.constant 105 : index
    %881 = memref.load %arg3[%c105] : memref<216xf32, #tpu.memory_space<smem>>
    %882 = vector.broadcast %881 : f32 to vector<8x128xf32>
    %883 = arith.mulf %876, %882 : vector<8x128xf32>
    %884 = arith.addf %867, %883 : vector<8x128xf32>
    %c159 = arith.constant 159 : index
    %885 = memref.load %arg3[%c159] : memref<216xf32, #tpu.memory_space<smem>>
    %886 = vector.broadcast %885 : f32 to vector<8x128xf32>
    %887 = arith.mulf %876, %886 : vector<8x128xf32>
    %888 = arith.addf %871, %887 : vector<8x128xf32>
    %c213 = arith.constant 213 : index
    %889 = memref.load %arg3[%c213] : memref<216xf32, #tpu.memory_space<smem>>
    %890 = vector.broadcast %889 : f32 to vector<8x128xf32>
    %891 = arith.mulf %876, %890 : vector<8x128xf32>
    %892 = arith.addf %875, %891 : vector<8x128xf32>
    %893 = vector.extract_strided_slice %773 {offsets = [0, 21], sizes = [8, 128], strides = [1, 1]} : vector<8x256xf32> to vector<8x128xf32>
    %c52 = arith.constant 52 : index
    %894 = memref.load %arg3[%c52] : memref<216xf32, #tpu.memory_space<smem>>
    %895 = vector.broadcast %894 : f32 to vector<8x128xf32>
    %896 = arith.mulf %893, %895 : vector<8x128xf32>
    %897 = arith.addf %880, %896 : vector<8x128xf32>
    %c106 = arith.constant 106 : index
    %898 = memref.load %arg3[%c106] : memref<216xf32, #tpu.memory_space<smem>>
    %899 = vector.broadcast %898 : f32 to vector<8x128xf32>
    %900 = arith.mulf %893, %899 : vector<8x128xf32>
    %901 = arith.addf %884, %900 : vector<8x128xf32>
    %c160 = arith.constant 160 : index
    %902 = memref.load %arg3[%c160] : memref<216xf32, #tpu.memory_space<smem>>
    %903 = vector.broadcast %902 : f32 to vector<8x128xf32>
    %904 = arith.mulf %893, %903 : vector<8x128xf32>
    %905 = arith.addf %888, %904 : vector<8x128xf32>
    %c214 = arith.constant 214 : index
    %906 = memref.load %arg3[%c214] : memref<216xf32, #tpu.memory_space<smem>>
    %907 = vector.broadcast %906 : f32 to vector<8x128xf32>
    %908 = arith.mulf %893, %907 : vector<8x128xf32>
    %909 = arith.addf %892, %908 : vector<8x128xf32>
    %910 = vector.extract_strided_slice %773 {offsets = [0, 22], sizes = [8, 128], strides = [1, 1]} : vector<8x256xf32> to vector<8x128xf32>
    %c53 = arith.constant 53 : index
    %911 = memref.load %arg3[%c53] : memref<216xf32, #tpu.memory_space<smem>>
    %912 = vector.broadcast %911 : f32 to vector<8x128xf32>
    %913 = arith.mulf %910, %912 : vector<8x128xf32>
    %914 = arith.addf %897, %913 : vector<8x128xf32>
    %c107 = arith.constant 107 : index
    %915 = memref.load %arg3[%c107] : memref<216xf32, #tpu.memory_space<smem>>
    %916 = vector.broadcast %915 : f32 to vector<8x128xf32>
    %917 = arith.mulf %910, %916 : vector<8x128xf32>
    %918 = arith.addf %901, %917 : vector<8x128xf32>
    %c161 = arith.constant 161 : index
    %919 = memref.load %arg3[%c161] : memref<216xf32, #tpu.memory_space<smem>>
    %920 = vector.broadcast %919 : f32 to vector<8x128xf32>
    %921 = arith.mulf %910, %920 : vector<8x128xf32>
    %922 = arith.addf %905, %921 : vector<8x128xf32>
    %c215 = arith.constant 215 : index
    %923 = memref.load %arg3[%c215] : memref<216xf32, #tpu.memory_space<smem>>
    %924 = vector.broadcast %923 : f32 to vector<8x128xf32>
    %925 = arith.mulf %910, %924 : vector<8x128xf32>
    %926 = arith.addf %909, %925 : vector<8x128xf32>
    %927 = arith.mulf %914, %0 : vector<8x128xf32>
    %928 = vector.shape_cast %927 : vector<8x128xf32> to vector<1x8x128xf32>
    %cst = arith.constant dense<0.000000e+00> : vector<1xf32>
    %929 = vector.multi_reduction <add>, %928, %cst [1, 2] : vector<1x8x128xf32> to vector<1xf32>
    %930 = vector.shape_cast %929 : vector<1xf32> to vector<1x1x1xf32>
    %931 = vector.extract %930[0, 0, 0] : f32 from vector<1x1x1xf32>
    %cst_20 = arith.constant 0.001953125 : f32
    %932 = arith.mulf %931, %cst_20 : f32
    %933 = arith.mulf %927, %927 : vector<8x128xf32>
    %934 = vector.shape_cast %933 : vector<8x128xf32> to vector<1x8x128xf32>
    %cst_21 = arith.constant dense<0.000000e+00> : vector<1xf32>
    %935 = vector.multi_reduction <add>, %934, %cst_21 [1, 2] : vector<1x8x128xf32> to vector<1xf32>
    %936 = vector.shape_cast %935 : vector<1xf32> to vector<1x1x1xf32>
    %937 = vector.extract %936[0, 0, 0] : f32 from vector<1x1x1xf32>
    %cst_22 = arith.constant 0.001953125 : f32
    %938 = arith.mulf %937, %cst_22 : f32
    %939 = arith.mulf %932, %932 : f32
    %940 = arith.subf %938, %939 : f32
    %941 = vector.broadcast %932 : f32 to vector<8x128xf32>
    %942 = arith.subf %914, %941 : vector<8x128xf32>
    %cst_23 = arith.constant 9.99999974E-6 : f32
    %943 = arith.addf %940, %cst_23 : f32
    %944 = math.rsqrt %943 : f32
    %945 = vector.broadcast %944 : f32 to vector<8x128xf32>
    %946 = arith.mulf %942, %945 : vector<8x128xf32>
    %cst_24 = arith.constant 0.00999999977 : f32
    %947 = vector.broadcast %cst_24 : f32 to vector<8x128xf32>
    %948 = arith.mulf %947, %946 : vector<8x128xf32>
    %949 = arith.maximumf %946, %948 : vector<8x128xf32>
    %c0_25 = arith.constant 0 : index
    %c0_26 = arith.constant 0 : index
    %c0_27 = arith.constant 0 : index
    %c0_28 = arith.constant 0 : index
    %950 = vector.load %arg7[%c0_25, %c0_26, %c0_27, %c0_28] : memref<1x4x8x128xf32, #tpu.memory_space<vmem>>, vector<1x1x8x128xf32>
    %951 = vector.shape_cast %950 : vector<1x1x8x128xf32> to vector<8x128xf32>
    %952 = vector.shape_cast %949 : vector<8x128xf32> to vector<1x1x8x128xf32>
    tpu.vector_store %arg7[%c0_25, %c0_26, %c0_27, %c0_28], %952 {strides = array<i32>} : memref<1x4x8x128xf32, #tpu.memory_space<vmem>>, vector<1x1x8x128xf32>,
    %c0_29 = arith.constant 0 : index
    %953 = memref.load %arg4[%c0_29] : memref<4xf32, #tpu.memory_space<smem>>
    %954 = vector.broadcast %953 : f32 to vector<8x128xf32>
    %955 = arith.mulf %949, %954 : vector<8x128xf32>
    %956 = arith.mulf %918, %0 : vector<8x128xf32>
    %957 = vector.shape_cast %956 : vector<8x128xf32> to vector<1x8x128xf32>
    %cst_30 = arith.constant dense<0.000000e+00> : vector<1xf32>
    %958 = vector.multi_reduction <add>, %957, %cst_30 [1, 2] : vector<1x8x128xf32> to vector<1xf32>
    %959 = vector.shape_cast %958 : vector<1xf32> to vector<1x1x1xf32>
    %960 = vector.extract %959[0, 0, 0] : f32 from vector<1x1x1xf32>
    %cst_31 = arith.constant 0.001953125 : f32
    %961 = arith.mulf %960, %cst_31 : f32
    %962 = arith.mulf %956, %956 : vector<8x128xf32>
    %963 = vector.shape_cast %962 : vector<8x128xf32> to vector<1x8x128xf32>
    %cst_32 = arith.constant dense<0.000000e+00> : vector<1xf32>
    %964 = vector.multi_reduction <add>, %963, %cst_32 [1, 2] : vector<1x8x128xf32> to vector<1xf32>
    %965 = vector.shape_cast %964 : vector<1xf32> to vector<1x1x1xf32>
    %966 = vector.extract %965[0, 0, 0] : f32 from vector<1x1x1xf32>
    %cst_33 = arith.constant 0.001953125 : f32
    %967 = arith.mulf %966, %cst_33 : f32
    %968 = arith.mulf %961, %961 : f32
    %969 = arith.subf %967, %968 : f32
    %970 = vector.broadcast %961 : f32 to vector<8x128xf32>
    %971 = arith.subf %918, %970 : vector<8x128xf32>
    %cst_34 = arith.constant 9.99999974E-6 : f32
    %972 = arith.addf %969, %cst_34 : f32
    %973 = math.rsqrt %972 : f32
    %974 = vector.broadcast %973 : f32 to vector<8x128xf32>
    %975 = arith.mulf %971, %974 : vector<8x128xf32>
    %cst_35 = arith.constant 0.00999999977 : f32
    %976 = vector.broadcast %cst_35 : f32 to vector<8x128xf32>
    %977 = arith.mulf %976, %975 : vector<8x128xf32>
    %978 = arith.maximumf %975, %977 : vector<8x128xf32>
    %c0_36 = arith.constant 0 : index
    %c1_37 = arith.constant 1 : index
    %c0_38 = arith.constant 0 : index
    %c0_39 = arith.constant 0 : index
    %979 = vector.load %arg7[%c0_36, %c1_37, %c0_38, %c0_39] : memref<1x4x8x128xf32, #tpu.memory_space<vmem>>, vector<1x1x8x128xf32>
    %980 = vector.shape_cast %979 : vector<1x1x8x128xf32> to vector<8x128xf32>
    %981 = vector.shape_cast %978 : vector<8x128xf32> to vector<1x1x8x128xf32>
    tpu.vector_store %arg7[%c0_36, %c1_37, %c0_38, %c0_39], %981 {strides = array<i32>} : memref<1x4x8x128xf32, #tpu.memory_space<vmem>>, vector<1x1x8x128xf32>,
    %c1_40 = arith.constant 1 : index
    %982 = memref.load %arg4[%c1_40] : memref<4xf32, #tpu.memory_space<smem>>
    %983 = vector.broadcast %982 : f32 to vector<8x128xf32>
    %984 = arith.mulf %978, %983 : vector<8x128xf32>
    %985 = arith.addf %955, %984 : vector<8x128xf32>
    %986 = arith.mulf %922, %0 : vector<8x128xf32>
    %987 = vector.shape_cast %986 : vector<8x128xf32> to vector<1x8x128xf32>
    %cst_41 = arith.constant dense<0.000000e+00> : vector<1xf32>
    %988 = vector.multi_reduction <add>, %987, %cst_41 [1, 2] : vector<1x8x128xf32> to vector<1xf32>
    %989 = vector.shape_cast %988 : vector<1xf32> to vector<1x1x1xf32>
    %990 = vector.extract %989[0, 0, 0] : f32 from vector<1x1x1xf32>
    %cst_42 = arith.constant 0.001953125 : f32
    %991 = arith.mulf %990, %cst_42 : f32
    %992 = arith.mulf %986, %986 : vector<8x128xf32>
    %993 = vector.shape_cast %992 : vector<8x128xf32> to vector<1x8x128xf32>
    %cst_43 = arith.constant dense<0.000000e+00> : vector<1xf32>
    %994 = vector.multi_reduction <add>, %993, %cst_43 [1, 2] : vector<1x8x128xf32> to vector<1xf32>
    %995 = vector.shape_cast %994 : vector<1xf32> to vector<1x1x1xf32>
    %996 = vector.extract %995[0, 0, 0] : f32 from vector<1x1x1xf32>
    %cst_44 = arith.constant 0.001953125 : f32
    %997 = arith.mulf %996, %cst_44 : f32
    %998 = arith.mulf %991, %991 : f32
    %999 = arith.subf %997, %998 : f32
    %1000 = vector.broadcast %991 : f32 to vector<8x128xf32>
    %1001 = arith.subf %922, %1000 : vector<8x128xf32>
    %cst_45 = arith.constant 9.99999974E-6 : f32
    %1002 = arith.addf %999, %cst_45 : f32
    %1003 = math.rsqrt %1002 : f32
    %1004 = vector.broadcast %1003 : f32 to vector<8x128xf32>
    %1005 = arith.mulf %1001, %1004 : vector<8x128xf32>
    %cst_46 = arith.constant 0.00999999977 : f32
    %1006 = vector.broadcast %cst_46 : f32 to vector<8x128xf32>
    %1007 = arith.mulf %1006, %1005 : vector<8x128xf32>
    %1008 = arith.maximumf %1005, %1007 : vector<8x128xf32>
    %c0_47 = arith.constant 0 : index
    %c2_48 = arith.constant 2 : index
    %c0_49 = arith.constant 0 : index
    %c0_50 = arith.constant 0 : index
    %1009 = vector.load %arg7[%c0_47, %c2_48, %c0_49, %c0_50] : memref<1x4x8x128xf32, #tpu.memory_space<vmem>>, vector<1x1x8x128xf32>
    %1010 = vector.shape_cast %1009 : vector<1x1x8x128xf32> to vector<8x128xf32>
    %1011 = vector.shape_cast %1008 : vector<8x128xf32> to vector<1x1x8x128xf32>
    tpu.vector_store %arg7[%c0_47, %c2_48, %c0_49, %c0_50], %1011 {strides = array<i32>} : memref<1x4x8x128xf32, #tpu.memory_space<vmem>>, vector<1x1x8x128xf32>,
    %c2_51 = arith.constant 2 : index
    %1012 = memref.load %arg4[%c2_51] : memref<4xf32, #tpu.memory_space<smem>>
    %1013 = vector.broadcast %1012 : f32 to vector<8x128xf32>
    %1014 = arith.mulf %1008, %1013 : vector<8x128xf32>
    %1015 = arith.addf %985, %1014 : vector<8x128xf32>
    %1016 = arith.mulf %926, %0 : vector<8x128xf32>
    %1017 = vector.shape_cast %1016 : vector<8x128xf32> to vector<1x8x128xf32>
    %cst_52 = arith.constant dense<0.000000e+00> : vector<1xf32>
    %1018 = vector.multi_reduction <add>, %1017, %cst_52 [1, 2] : vector<1x8x128xf32> to vector<1xf32>
    %1019 = vector.shape_cast %1018 : vector<1xf32> to vector<1x1x1xf32>
    %1020 = vector.extract %1019[0, 0, 0] : f32 from vector<1x1x1xf32>
    %cst_53 = arith.constant 0.001953125 : f32
    %1021 = arith.mulf %1020, %cst_53 : f32
    %1022 = arith.mulf %1016, %1016 : vector<8x128xf32>
    %1023 = vector.shape_cast %1022 : vector<8x128xf32> to vector<1x8x128xf32>
    %cst_54 = arith.constant dense<0.000000e+00> : vector<1xf32>
    %1024 = vector.multi_reduction <add>, %1023, %cst_54 [1, 2] : vector<1x8x128xf32> to vector<1xf32>
    %1025 = vector.shape_cast %1024 : vector<1xf32> to vector<1x1x1xf32>
    %1026 = vector.extract %1025[0, 0, 0] : f32 from vector<1x1x1xf32>
    %cst_55 = arith.constant 0.001953125 : f32
    %1027 = arith.mulf %1026, %cst_55 : f32
    %1028 = arith.mulf %1021, %1021 : f32
    %1029 = arith.subf %1027, %1028 : f32
    %1030 = vector.broadcast %1021 : f32 to vector<8x128xf32>
    %1031 = arith.subf %926, %1030 : vector<8x128xf32>
    %cst_56 = arith.constant 9.99999974E-6 : f32
    %1032 = arith.addf %1029, %cst_56 : f32
    %1033 = math.rsqrt %1032 : f32
    %1034 = vector.broadcast %1033 : f32 to vector<8x128xf32>
    %1035 = arith.mulf %1031, %1034 : vector<8x128xf32>
    %cst_57 = arith.constant 0.00999999977 : f32
    %1036 = vector.broadcast %cst_57 : f32 to vector<8x128xf32>
    %1037 = arith.mulf %1036, %1035 : vector<8x128xf32>
    %1038 = arith.maximumf %1035, %1037 : vector<8x128xf32>
    %c0_58 = arith.constant 0 : index
    %c3_59 = arith.constant 3 : index
    %c0_60 = arith.constant 0 : index
    %c0_61 = arith.constant 0 : index
    %1039 = vector.load %arg7[%c0_58, %c3_59, %c0_60, %c0_61] : memref<1x4x8x128xf32, #tpu.memory_space<vmem>>, vector<1x1x8x128xf32>
    %1040 = vector.shape_cast %1039 : vector<1x1x8x128xf32> to vector<8x128xf32>
    %1041 = vector.shape_cast %1038 : vector<8x128xf32> to vector<1x1x8x128xf32>
    tpu.vector_store %arg7[%c0_58, %c3_59, %c0_60, %c0_61], %1041 {strides = array<i32>} : memref<1x4x8x128xf32, #tpu.memory_space<vmem>>, vector<1x1x8x128xf32>,
    %c3_62 = arith.constant 3 : index
    %1042 = memref.load %arg4[%c3_62] : memref<4xf32, #tpu.memory_space<smem>>
    %1043 = vector.broadcast %1042 : f32 to vector<8x128xf32>
    %1044 = arith.mulf %1038, %1043 : vector<8x128xf32>
    %1045 = arith.addf %1015, %1044 : vector<8x128xf32>
    %1046 = arith.negf %1045 : vector<8x128xf32>
    %1047 = math.exp %1046 : vector<8x128xf32>
    %cst_63 = arith.constant 1.000000e+00 : f32
    %1048 = vector.broadcast %cst_63 : f32 to vector<8x128xf32>
    %1049 = arith.addf %1048, %1047 : vector<8x128xf32>
    %1050 = arith.divf %1048, %1049 : vector<8x128xf32>
    %c0_64 = arith.constant 0 : index
    %1051 = memref.load %arg6[%c0_64] : memref<2xf32, #tpu.memory_space<smem>>
    %1052 = vector.broadcast %1051 : f32 to vector<8x128xf32>
    %c1_65 = arith.constant 1 : index
    %1053 = memref.load %arg6[%c1_65] : memref<2xf32, #tpu.memory_space<smem>>
    %1054 = vector.broadcast %1053 : f32 to vector<8x128xf32>
    %c0_66 = arith.constant 0 : index
    %c0_67 = arith.constant 0 : index
    %c0_68 = arith.constant 0 : index
    %c0_69 = arith.constant 0 : index
    %1055 = vector.load %arg7[%c0_66, %c0_67, %c0_68, %c0_69] : memref<1x4x8x128xf32, #tpu.memory_space<vmem>>, vector<1x1x8x128xf32>
    %1056 = vector.shape_cast %1055 : vector<1x1x8x128xf32> to vector<8x128xf32>
    %1057 = arith.mulf %1056, %1050 : vector<8x128xf32>
    %c0_70 = arith.constant 0 : index
    %c0_71 = arith.constant 0 : index
    %c0_72 = arith.constant 0 : index
    %c0_73 = arith.constant 0 : index
    %1058 = vector.load %arg7[%c0_70, %c0_71, %c0_72, %c0_73] : memref<1x4x8x128xf32, #tpu.memory_space<vmem>>, vector<1x1x8x128xf32>
    %1059 = vector.shape_cast %1058 : vector<1x1x8x128xf32> to vector<8x128xf32>
    %1060 = vector.shape_cast %1057 : vector<8x128xf32> to vector<1x1x8x128xf32>
    tpu.vector_store %arg7[%c0_70, %c0_71, %c0_72, %c0_73], %1060 {strides = array<i32>} : memref<1x4x8x128xf32, #tpu.memory_space<vmem>>, vector<1x1x8x128xf32>,
    %c0_74 = arith.constant 0 : index
    %1061 = memref.load %arg5[%c0_74] : memref<8xf32, #tpu.memory_space<smem>>
    %1062 = vector.broadcast %1061 : f32 to vector<8x128xf32>
    %1063 = arith.mulf %1057, %1062 : vector<8x128xf32>
    %1064 = arith.addf %1052, %1063 : vector<8x128xf32>
    %c4_75 = arith.constant 4 : index
    %1065 = memref.load %arg5[%c4_75] : memref<8xf32, #tpu.memory_space<smem>>
    %1066 = vector.broadcast %1065 : f32 to vector<8x128xf32>
    %1067 = arith.mulf %1057, %1066 : vector<8x128xf32>
    %1068 = arith.addf %1054, %1067 : vector<8x128xf32>
    %c0_76 = arith.constant 0 : index
    %c1_77 = arith.constant 1 : index
    %c0_78 = arith.constant 0 : index
    %c0_79 = arith.constant 0 : index
    %1069 = vector.load %arg7[%c0_76, %c1_77, %c0_78, %c0_79] : memref<1x4x8x128xf32, #tpu.memory_space<vmem>>, vector<1x1x8x128xf32>
    %1070 = vector.shape_cast %1069 : vector<1x1x8x128xf32> to vector<8x128xf32>
    %1071 = arith.mulf %1070, %1050 : vector<8x128xf32>
    %c0_80 = arith.constant 0 : index
    %c1_81 = arith.constant 1 : index
    %c0_82 = arith.constant 0 : index
    %c0_83 = arith.constant 0 : index
    %1072 = vector.load %arg7[%c0_80, %c1_81, %c0_82, %c0_83] : memref<1x4x8x128xf32, #tpu.memory_space<vmem>>, vector<1x1x8x128xf32>
    %1073 = vector.shape_cast %1072 : vector<1x1x8x128xf32> to vector<8x128xf32>
    %1074 = vector.shape_cast %1071 : vector<8x128xf32> to vector<1x1x8x128xf32>
    tpu.vector_store %arg7[%c0_80, %c1_81, %c0_82, %c0_83], %1074 {strides = array<i32>} : memref<1x4x8x128xf32, #tpu.memory_space<vmem>>, vector<1x1x8x128xf32>,
    %c1_84 = arith.constant 1 : index
    %1075 = memref.load %arg5[%c1_84] : memref<8xf32, #tpu.memory_space<smem>>
    %1076 = vector.broadcast %1075 : f32 to vector<8x128xf32>
    %1077 = arith.mulf %1071, %1076 : vector<8x128xf32>
    %1078 = arith.addf %1064, %1077 : vector<8x128xf32>
    %c5_85 = arith.constant 5 : index
    %1079 = memref.load %arg5[%c5_85] : memref<8xf32, #tpu.memory_space<smem>>
    %1080 = vector.broadcast %1079 : f32 to vector<8x128xf32>
    %1081 = arith.mulf %1071, %1080 : vector<8x128xf32>
    %1082 = arith.addf %1068, %1081 : vector<8x128xf32>
    %c0_86 = arith.constant 0 : index
    %c2_87 = arith.constant 2 : index
    %c0_88 = arith.constant 0 : index
    %c0_89 = arith.constant 0 : index
    %1083 = vector.load %arg7[%c0_86, %c2_87, %c0_88, %c0_89] : memref<1x4x8x128xf32, #tpu.memory_space<vmem>>, vector<1x1x8x128xf32>
    %1084 = vector.shape_cast %1083 : vector<1x1x8x128xf32> to vector<8x128xf32>
    %1085 = arith.mulf %1084, %1050 : vector<8x128xf32>
    %c0_90 = arith.constant 0 : index
    %c2_91 = arith.constant 2 : index
    %c0_92 = arith.constant 0 : index
    %c0_93 = arith.constant 0 : index
    %1086 = vector.load %arg7[%c0_90, %c2_91, %c0_92, %c0_93] : memref<1x4x8x128xf32, #tpu.memory_space<vmem>>, vector<1x1x8x128xf32>
    %1087 = vector.shape_cast %1086 : vector<1x1x8x128xf32> to vector<8x128xf32>
    %1088 = vector.shape_cast %1085 : vector<8x128xf32> to vector<1x1x8x128xf32>
    tpu.vector_store %arg7[%c0_90, %c2_91, %c0_92, %c0_93], %1088 {strides = array<i32>} : memref<1x4x8x128xf32, #tpu.memory_space<vmem>>, vector<1x1x8x128xf32>,
    %c2_94 = arith.constant 2 : index
    %1089 = memref.load %arg5[%c2_94] : memref<8xf32, #tpu.memory_space<smem>>
    %1090 = vector.broadcast %1089 : f32 to vector<8x128xf32>
    %1091 = arith.mulf %1085, %1090 : vector<8x128xf32>
    %1092 = arith.addf %1078, %1091 : vector<8x128xf32>
    %c6_95 = arith.constant 6 : index
    %1093 = memref.load %arg5[%c6_95] : memref<8xf32, #tpu.memory_space<smem>>
    %1094 = vector.broadcast %1093 : f32 to vector<8x128xf32>
    %1095 = arith.mulf %1085, %1094 : vector<8x128xf32>
    %1096 = arith.addf %1082, %1095 : vector<8x128xf32>
    %c0_96 = arith.constant 0 : index
    %c3_97 = arith.constant 3 : index
    %c0_98 = arith.constant 0 : index
    %c0_99 = arith.constant 0 : index
    %1097 = vector.load %arg7[%c0_96, %c3_97, %c0_98, %c0_99] : memref<1x4x8x128xf32, #tpu.memory_space<vmem>>, vector<1x1x8x128xf32>
    %1098 = vector.shape_cast %1097 : vector<1x1x8x128xf32> to vector<8x128xf32>
    %1099 = arith.mulf %1098, %1050 : vector<8x128xf32>
    %c0_100 = arith.constant 0 : index
    %c3_101 = arith.constant 3 : index
    %c0_102 = arith.constant 0 : index
    %c0_103 = arith.constant 0 : index
    %1100 = vector.load %arg7[%c0_100, %c3_101, %c0_102, %c0_103] : memref<1x4x8x128xf32, #tpu.memory_space<vmem>>, vector<1x1x8x128xf32>
    %1101 = vector.shape_cast %1100 : vector<1x1x8x128xf32> to vector<8x128xf32>
    %1102 = vector.shape_cast %1099 : vector<8x128xf32> to vector<1x1x8x128xf32>
    tpu.vector_store %arg7[%c0_100, %c3_101, %c0_102, %c0_103], %1102 {strides = array<i32>} : memref<1x4x8x128xf32, #tpu.memory_space<vmem>>, vector<1x1x8x128xf32>,
    %c3_104 = arith.constant 3 : index
    %1103 = memref.load %arg5[%c3_104] : memref<8xf32, #tpu.memory_space<smem>>
    %1104 = vector.broadcast %1103 : f32 to vector<8x128xf32>
    %1105 = arith.mulf %1099, %1104 : vector<8x128xf32>
    %1106 = arith.addf %1092, %1105 : vector<8x128xf32>
    %c7_105 = arith.constant 7 : index
    %1107 = memref.load %arg5[%c7_105] : memref<8xf32, #tpu.memory_space<smem>>
    %1108 = vector.broadcast %1107 : f32 to vector<8x128xf32>
    %1109 = arith.mulf %1099, %1108 : vector<8x128xf32>
    %1110 = arith.addf %1096, %1109 : vector<8x128xf32>
    %c0_106 = arith.constant 0 : index
    %c0_107 = arith.constant 0 : index
    %c0_108 = arith.constant 0 : index
    %c0_109 = arith.constant 0 : index
    %1111 = vector.load %arg8[%c0_106, %c0_107, %c0_108, %c0_109] : memref<1x2x8x128xf32, #tpu.memory_space<vmem>>, vector<1x1x8x128xf32>
    %1112 = vector.shape_cast %1111 : vector<1x1x8x128xf32> to vector<8x128xf32>
    %1113 = vector.shape_cast %1106 : vector<8x128xf32> to vector<1x1x8x128xf32>
    tpu.vector_store %arg8[%c0_106, %c0_107, %c0_108, %c0_109], %1113 {strides = array<i32>} : memref<1x2x8x128xf32, #tpu.memory_space<vmem>>, vector<1x1x8x128xf32>,
    %c0_110 = arith.constant 0 : index
    %c1_111 = arith.constant 1 : index
    %c0_112 = arith.constant 0 : index
    %c0_113 = arith.constant 0 : index
    %1114 = vector.load %arg8[%c0_110, %c1_111, %c0_112, %c0_113] : memref<1x2x8x128xf32, #tpu.memory_space<vmem>>, vector<1x1x8x128xf32>
    %1115 = vector.shape_cast %1114 : vector<1x1x8x128xf32> to vector<8x128xf32>
    %1116 = vector.shape_cast %1110 : vector<8x128xf32> to vector<1x1x8x128xf32>
    tpu.vector_store %arg8[%c0_110, %c1_111, %c0_112, %c0_113], %1116 {strides = array<i32>} : memref<1x2x8x128xf32, #tpu.memory_space<vmem>>, vector<1x1x8x128xf32>,
    return
  }
  func.func @transform_0(%arg0: i32) -> (i32, i32, i32) {
    %c0_i32 = arith.constant 0 : i32
    %c0_i32_0 = arith.constant 0 : i32
    %c0_i32_1 = arith.constant 0 : i32
    return %arg0, %c0_i32, %c0_i32_0 : i32, i32, i32
  }
  func.func @transform_1(%arg0: i32) -> (i32, i32) {
    %c0_i32 = arith.constant 0 : i32
    %c0_i32_0 = arith.constant 0 : i32
    %c0_i32_1 = arith.constant 0 : i32
    return %c0_i32, %c0_i32_0 : i32, i32
  }
  func.func @transform_2(%arg0: i32) -> i32 {
    %c0_i32 = arith.constant 0 : i32
    %c0_i32_0 = arith.constant 0 : i32
    return %c0_i32 : i32
  }
  func.func @transform_3(%arg0: i32) -> i32 {
    %c0_i32 = arith.constant 0 : i32
    %c0_i32_0 = arith.constant 0 : i32
    return %c0_i32 : i32
  }
  func.func @transform_4(%arg0: i32) -> i32 {
    %c0_i32 = arith.constant 0 : i32
    %c0_i32_0 = arith.constant 0 : i32
    return %c0_i32 : i32
  }
  func.func @transform_5(%arg0: i32) -> i32 {
    %c0_i32 = arith.constant 0 : i32
    %c0_i32_0 = arith.constant 0 : i32
    return %c0_i32 : i32
  }
  func.func @transform_6(%arg0: i32) -> (i32, i32, i32, i32) {
    %c0_i32 = arith.constant 0 : i32
    %c0_i32_0 = arith.constant 0 : i32
    %c0_i32_1 = arith.constant 0 : i32
    %c0_i32_2 = arith.constant 0 : i32
    return %arg0, %c0_i32, %c0_i32_0, %c0_i32_1 : i32, i32, i32, i32
  }
  func.func @transform_7(%arg0: i32) -> (i32, i32, i32, i32) {
    %c0_i32 = arith.constant 0 : i32
    %c0_i32_0 = arith.constant 0 : i32
    %c0_i32_1 = arith.constant 0 : i32
    %c0_i32_2 = arith.constant 0 : i32
    return %arg0, %c0_i32, %c0_i32_0, %c0_i32_1 : i32, i32, i32, i32
  }
}

</mosaic_0001>

<llo_original>
// kernel: sse_conv_forward.1
$region0: #{sse_conv_forward.1}
  #allocation0 [shape = 'u32[]', space=smem, size = 0x4, offset = 0x4, fixed_abs, tag = 'smem constant byte address 0x4 - core index']
  #allocation1 [shape = 'u32[144,128]{1,0:T(1,128)}', space=vmem, size = 0x12000, scoped, tag = 'internal scratch']
  %s0 = inlined_call_operand.vmem [shape: f32[2,20,256], index: 0, kind: input, shape index: {}]
  %s1 = inlined_call_operand.vmem [shape: f32[8,128], index: 1, kind: input, shape index: {}]
  %s2 = inlined_call_operand.vmem [shape: f32[216], index: 2, kind: input, shape index: {}]
  %s3 = inlined_call_operand.vmem [shape: f32[4], index: 3, kind: input, shape index: {}]
  %s4 = inlined_call_operand.vmem [shape: f32[8], index: 4, kind: input, shape index: {}]
  %s5 = inlined_call_operand.vmem [shape: f32[2], index: 5, kind: input, shape index: {}]
  %s6 = inlined_call_operand.vmem [shape: f32[2,4,8,128], index: 6, kind: output, shape index: {0}]
  %s7 = inlined_call_operand.vmem [shape: f32[2,2,8,128], index: 7, kind: output, shape index: {1}]
  %8 = xla_tuple %s6, %s7
  %s9 = sld [smem:[#allocation0]]
  $region81: #{sse_conv_forward.1} parent=0
    _
  %s11 = ssub.s32 1, %s9
  %s12 = scalar_select 0, %s11, %s9
  $region1: #{sse_conv_forward.1} parent=0
    #allocation2 [shape = 'u8[1024]{0}', space=smem, size = 0x400, scoped, tag = 'input window, operand 2, single buffered']
    #allocation3 [shape = 's32[2]{0}', space=sflag, size = 0x8, scoped, tag = 'scoped memory for sse_conv_forward.1']
    #allocation4 [shape = 'u8[512]{0}', space=smem, size = 0x200, scoped, tag = 'input window, operand 3, single buffered']
    #allocation5 [shape = 's32[1]{0}', space=sflag, size = 0x4, scoped, tag = 'scoped memory for sse_conv_forward.1']
    #allocation6 [shape = 'u8[512]{0}', space=smem, size = 0x200, scoped, tag = 'input window, operand 4, single buffered']
    #allocation7 [shape = 'u8[512]{0}', space=smem, size = 0x200, scoped, tag = 'input window, operand 5, single buffered']
    #allocation8 [shape = 's32[1]{0}', space=sflag, size = 0x4, scoped, tag = 'scoped memory for sse_conv_forward.1']
    %13 = vsyncpa [#allocation3], 0
    %14 = vsyncpa [#allocation5], 0
    %15 = vsyncpa [#allocation8], 0
    loop: start=0, step=1, limit=4
    $region2: #{sse_conv_forward.1} parent=1 // loop_pre_header
      _
    $region3: #{sse_conv_forward.1} parent=1 // loop_header
      %s17 = sphi 0, %s21
      %p18 = scmp.ge.s32.totalorder %s17, 4
      %s27 = sphi 0, %s29
      %s30 = sphi 0, %s27
      %s31 = sphi 0, %s30
      %s47 = sphi 0, %s31
      %s51 = sphi 0, %s51
      %s53 = sphi 0, %s51
      %s54 = sphi 0, %s53
      %s68 = sphi 0, %s54
      %s72 = sphi 0, %s72
      %s74 = sphi 0, %s72
      %s75 = sphi 0, %s74
      %s89 = sphi 0, %s75
      %s93 = sphi 0, %s93
      %s95 = sphi 0, %s93
      %s96 = sphi 0, %s95
      %s110 = sphi 0, %s96
      %s114 = sphi 0, %s114
      %s116 = sphi 0, %s114
      %s117 = sphi 0, %s116
      %s131 = sphi 0, %s117
      %s135 = sphi 0, %s135
      %s137 = sphi 0, %s135
      %s138 = sphi 0, %s137
      %s152 = sphi 0, %s138
      %s158 = sphi 0, %s160
      %s161 = sphi 0, %s158
      %s162 = sphi 0, %s161
      %s178 = sphi 0, %s162
      %s184 = sphi 0, %s186
      %s187 = sphi 0, %s184
      %s188 = sphi 0, %s187
      %s204 = sphi 0, %s188
    $region4: #{sse_conv_forward.1} parent=1 // loop_header_branch
      %20 = sbr.rel (%p18) target = $region8
    $region5: #{sse_conv_forward.1} parent=1 // loop_body
      %s22 = ssub.s32 %s17, 1
      %s23 = ssub.s32 %s17, 2
      %s24 = sadd.s32 %s17, 1
      %s25 = ssub.s32 %s17, %s24
      %p26 = scmp.eq.s32.totalorder %s25, 0
      %s28 = sadd.s32 %s27, 1
      %s29 = scalar_select %p26, %s27, %s28
      %p32 = pneg %p26
      %p33 = scmp.eq.s32.totalorder %s17, 1
      %p34 = por %p32, %p33
      %p35 = scmp.ne.s32.totalorder %s27, %s30
      %p36 = scmp.eq.s32.totalorder %s17, 0
      %p37 = por %p35, %p36
      %p38 = scmp.ne.s32.totalorder %s27, %s30
      %p39 = scmp.eq.s32.totalorder %s22, 1
      %p40 = por %p38, %p39
      %p41 = scmp.ne.s32.totalorder %s30, %s31
      %p42 = scmp.eq.s32.totalorder %s22, 0
      %p43 = por %p41, %p42
      %p44 = scmp.ne.s32.totalorder %s30, %s31
      %p45 = scmp.eq.s32.totalorder %s23, 1
      %p46 = por %p44, %p45
      %p48 = scmp.ne.s32.totalorder %s31, %s47
      %p49 = scmp.eq.s32.totalorder %s23, 0
      %p50 = por %p48, %p49
      %s52 = sadd.s32 %s51, 1
      %p55 = scmp.eq.s32.totalorder %s17, 1
      %p56 = scmp.ne.s32.totalorder %s51, %s53
      %p57 = scmp.eq.s32.totalorder %s17, 0
      %p58 = por %p56, %p57
      %p59 = scmp.ne.s32.totalorder %s51, %s53
      %p60 = scmp.eq.s32.totalorder %s22, 1
      %p61 = por %p59, %p60
      %p62 = scmp.ne.s32.totalorder %s53, %s54
      %p63 = scmp.eq.s32.totalorder %s22, 0
      %p64 = por %p62, %p63
      %p65 = scmp.ne.s32.totalorder %s53, %s54
      %p66 = scmp.eq.s32.totalorder %s23, 1
      %p67 = por %p65, %p66
      %p69 = scmp.ne.s32.totalorder %s54, %s68
      %p70 = scmp.eq.s32.totalorder %s23, 0
      %p71 = por %p69, %p70
      %s73 = sadd.s32 %s72, 1
      %p76 = scmp.eq.s32.totalorder %s17, 1
      %p77 = scmp.ne.s32.totalorder %s72, %s74
      %p78 = scmp.eq.s32.totalorder %s17, 0
      %p79 = por %p77, %p78
      %p80 = scmp.ne.s32.totalorder %s72, %s74
      %p81 = scmp.eq.s32.totalorder %s22, 1
      %p82 = por %p80, %p81
      %p83 = scmp.ne.s32.totalorder %s74, %s75
      %p84 = scmp.eq.s32.totalorder %s22, 0
      %p85 = por %p83, %p84
      %p86 = scmp.ne.s32.totalorder %s74, %s75
      %p87 = scmp.eq.s32.totalorder %s23, 1
      %p88 = por %p86, %p87
      %p90 = scmp.ne.s32.totalorder %s75, %s89
      %p91 = scmp.eq.s32.totalorder %s23, 0
      %p92 = por %p90, %p91
      %s94 = sadd.s32 %s93, 1
      %p97 = scmp.eq.s32.totalorder %s17, 1
      %p98 = scmp.ne.s32.totalorder %s93, %s95
      %p99 = scmp.eq.s32.totalorder %s17, 0
      %p100 = por %p98, %p99
      %p101 = scmp.ne.s32.totalorder %s93, %s95
      %p102 = scmp.eq.s32.totalorder %s22, 1
      %p103 = por %p101, %p102
      %p104 = scmp.ne.s32.totalorder %s95, %s96
      %p105 = scmp.eq.s32.totalorder %s22, 0
      %p106 = por %p104, %p105
      %p107 = scmp.ne.s32.totalorder %s95, %s96
      %p108 = scmp.eq.s32.totalorder %s23, 1
      %p109 = por %p107, %p108
      %p111 = scmp.ne.s32.totalorder %s96, %s110
      %p112 = scmp.eq.s32.totalorder %s23, 0
      %p113 = por %p111, %p112
      %s115 = sadd.s32 %s114, 1
      %p118 = scmp.eq.s32.totalorder %s17, 1
      %p119 = scmp.ne.s32.totalorder %s114, %s116
      %p120 = scmp.eq.s32.totalorder %s17, 0
      %p121 = por %p119, %p120
      %p122 = scmp.ne.s32.totalorder %s114, %s116
      %p123 = scmp.eq.s32.totalorder %s22, 1
      %p124 = por %p122, %p123
      %p125 = scmp.ne.s32.totalorder %s116, %s117
      %p126 = scmp.eq.s32.totalorder %s22, 0
      %p127 = por %p125, %p126
      %p128 = scmp.ne.s32.totalorder %s116, %s117
      %p129 = scmp.eq.s32.totalorder %s23, 1
      %p130 = por %p128, %p129
      %p132 = scmp.ne.s32.totalorder %s117, %s131
      %p133 = scmp.eq.s32.totalorder %s23, 0
      %p134 = por %p132, %p133
      %s136 = sadd.s32 %s135, 1
      %p139 = scmp.eq.s32.totalorder %s17, 1
      %p140 = scmp.ne.s32.totalorder %s135, %s137
      %p141 = scmp.eq.s32.totalorder %s17, 0
      %p142 = por %p140, %p141
      %p143 = scmp.ne.s32.totalorder %s135, %s137
      %p144 = scmp.eq.s32.totalorder %s22, 1
      %p145 = por %p143, %p144
      %p146 = scmp.ne.s32.totalorder %s137, %s138
      %p147 = scmp.eq.s32.totalorder %s22, 0
      %p148 = por %p146, %p147
      %p149 = scmp.ne.s32.totalorder %s137, %s138
      %p150 = scmp.eq.s32.totalorder %s23, 1
      %p151 = por %p149, %p150
      %p153 = scmp.ne.s32.totalorder %s138, %s152
      %p154 = scmp.eq.s32.totalorder %s23, 0
      %p155 = por %p153, %p154
      %s156 = ssub.s32 %s17, %s24
      %p157 = scmp.eq.s32.totalorder %s156, 0
      %s159 = sadd.s32 %s158, 1
      %s160 = scalar_select %p157, %s158, %s159
      %p163 = pneg %p157
      %p164 = scmp.eq.s32.totalorder %s17, 1
      %p165 = por %p163, %p164
      %p166 = scmp.ne.s32.totalorder %s158, %s161
      %p167 = scmp.eq.s32.totalorder %s17, 0
      %p168 = por %p166, %p167
      %p169 = scmp.ne.s32.totalorder %s158, %s161
      %p170 = scmp.eq.s32.totalorder %s22, 1
      %p171 = por %p169, %p170
      %p172 = scmp.ne.s32.totalorder %s161, %s162
      %p173 = scmp.eq.s32.totalorder %s22, 0
      %p174 = por %p172, %p173
      %p175 = scmp.ne.s32.totalorder %s161, %s162
      %p176 = scmp.eq.s32.totalorder %s23, 1
      %p177 = por %p175, %p176
      %p179 = scmp.ne.s32.totalorder %s162, %s178
      %p180 = scmp.eq.s32.totalorder %s23, 0
      %p181 = por %p179, %p180
      %s182 = ssub.s32 %s17, %s24
      %p183 = scmp.eq.s32.totalorder %s182, 0
      %s185 = sadd.s32 %s184, 1
      %s186 = scalar_select %p183, %s184, %s185
      %p189 = pneg %p183
      %p190 = scmp.eq.s32.totalorder %s17, 1
      %p191 = por %p189, %p190
      %p192 = scmp.ne.s32.totalorder %s184, %s187
      %p193 = scmp.eq.s32.totalorder %s17, 0
      %p194 = por %p192, %p193
      %p195 = scmp.ne.s32.totalorder %s184, %s187
      %p196 = scmp.eq.s32.totalorder %s22, 1
      %p197 = por %p195, %p196
      %p198 = scmp.ne.s32.totalorder %s187, %s188
      %p199 = scmp.eq.s32.totalorder %s22, 0
      %p200 = por %p198, %p199
      %p201 = scmp.ne.s32.totalorder %s187, %s188
      %p202 = scmp.eq.s32.totalorder %s23, 1
      %p203 = por %p201, %p202
      %p205 = scmp.ne.s32.totalorder %s188, %s204
      %p206 = scmp.eq.s32.totalorder %s23, 0
      %p207 = por %p205, %p206
      %p208 = scmp.le.s32.totalorder 1, %s17
      %p209 = scmp.lt.s32.totalorder %s17, 3
      %p210 = pnand %p208, %p209
      %p211 = pneg %p210
      // Predicated region
      $region9: #{sse_conv_forward.1} parent=5 // pred_check
        _
      $region10: #{sse_conv_forward.1} parent=5 // pred_check_branch
        %213 = sbr.rel (%p210) target = $region12
      $region11: #{sse_conv_forward.1} parent=5 // pred_region
        %s214 = ssub.s32 %s17, 1
        // Predicated region
        $region13: #{sse_conv_forward.1} parent=11 // pred_check
          %p215 = pneg %p64
        $region14: #{sse_conv_forward.1} parent=11 // pred_check_branch
          %217 = sbr.rel (%p215) target = $region16
        $region15: #{sse_conv_forward.1} parent=11 // pred_region
          _
        $region16: #{sse_conv_forward.1} parent=11 // pred_fallthru
          _
        // Predicated region
        $region17: #{sse_conv_forward.1} parent=11 // pred_check
          %p218 = pneg %p85
        $region18: #{sse_conv_forward.1} parent=11 // pred_check_branch
          %220 = sbr.rel (%p218) target = $region20
        $region19: #{sse_conv_forward.1} parent=11 // pred_region
          %s222 = ssub.s32 32, 32
          %223 = vsyncadd [#allocation3], %s222
          %s225 = sshll.u32 %s2, 4
          %s226 = int_to_ptr.vmem [resolvable:$true] %s225
          %228 = dma.vmem_to_smem %s226, 32, [#allocation2], [#allocation3]
        $region20: #{sse_conv_forward.1} parent=11 // pred_fallthru
          _
        // Predicated region
        $region21: #{sse_conv_forward.1} parent=11 // pred_check
          %p229 = pneg %p106
        $region22: #{sse_conv_forward.1} parent=11 // pred_check_branch
          %231 = sbr.rel (%p229) target = $region24
        $region23: #{sse_conv_forward.1} parent=11 // pred_region
          %s233 = ssub.s32 16, 16
          %234 = vsyncadd [#allocation5], %s233
          %s236 = sshll.u32 %s3, 4
          %s237 = int_to_ptr.vmem [resolvable:$true] %s236
          %239 = dma.vmem_to_smem %s237, 16, [#allocation4], [#allocation5]
        $region24: #{sse_conv_forward.1} parent=11 // pred_fallthru
          _
        // Predicated region
        $region25: #{sse_conv_forward.1} parent=11 // pred_check
          %p240 = pneg %p127
        $region26: #{sse_conv_forward.1} parent=11 // pred_check_branch
          %242 = sbr.rel (%p240) target = $region28
        $region27: #{sse_conv_forward.1} parent=11 // pred_region
          %s244 = ssub.s32 16, 16
          %245 = vsyncadd [#allocation5], %s244
          %s247 = sshll.u32 %s4, 4
          %s248 = int_to_ptr.vmem [resolvable:$true] %s247
          %250 = dma.vmem_to_smem %s248, 16, [#allocation6], [#allocation5]
        $region28: #{sse_conv_forward.1} parent=11 // pred_fallthru
          _
        // Predicated region
        $region29: #{sse_conv_forward.1} parent=11 // pred_check
          %p251 = pneg %p148
        $region30: #{sse_conv_forward.1} parent=11 // pred_check_branch
          %253 = sbr.rel (%p251) target = $region32
        $region31: #{sse_conv_forward.1} parent=11 // pred_region
          %s255 = ssub.s32 16, 16
          %256 = vsyncadd [#allocation8], %s255
          %s258 = sshll.u32 %s5, 4
          %s259 = int_to_ptr.vmem [resolvable:$true] %s258
          %261 = dma.vmem_to_smem %s259, 16, [#allocation7], [#allocation8]
        $region32: #{sse_conv_forward.1} parent=11 // pred_fallthru
          _
      $region12: #{sse_conv_forward.1} parent=5 // pred_fallthru
        _
      %p262 = scmp.lt.s32.totalorder %s17, 2
      // Predicated region
      $region33: #{sse_conv_forward.1} parent=5 // pred_check
        %p263 = pneg %p262
      $region34: #{sse_conv_forward.1} parent=5 // pred_check_branch
        %265 = sbr.rel (%p263) target = $region36
      $region35: #{sse_conv_forward.1} parent=5 // pred_region
        // Predicated region
        $region37: #{sse_conv_forward.1} parent=35 // pred_check
          %p266 = pneg %p37
        $region38: #{sse_conv_forward.1} parent=35 // pred_check_branch
          %268 = sbr.rel (%p266) target = $region40
        $region39: #{sse_conv_forward.1} parent=35 // pred_region
          %p269 = scmp.lt.s32.totalorder %s17, 1
          %s270 = scalar_select %p269, %s17, 1
          %s271 = smul.addr %s270, 6
          %s272 = smul.addr %s271, 8
          %s273 = scalar_lea.vmem %s0, %s272
        $region40: #{sse_conv_forward.1} parent=35 // pred_fallthru
          _
      $region36: #{sse_conv_forward.1} parent=5 // pred_fallthru
        _
      %p274 = scmp.le.s32.totalorder 1, %s17
      %p275 = scmp.lt.s32.totalorder %s17, 3
      %p276 = pnand %p274, %p275
      %p277 = pneg %p276
      // Predicated region
      $region41: #{sse_conv_forward.1} parent=5 // pred_check
        _
      $region42: #{sse_conv_forward.1} parent=5 // pred_check_branch
        %279 = sbr.rel (%p276) target = $region44
      $region43: #{sse_conv_forward.1} parent=5 // pred_region
        %s280 = ssub.s32 %s17, 1
        // Predicated region
        $region45: #{sse_conv_forward.1} parent=43 // pred_check
          %p281 = pneg %p85
        $region46: #{sse_conv_forward.1} parent=43 // pred_check_branch
          %283 = sbr.rel (%p281) target = $region48
        $region47: #{sse_conv_forward.1} parent=43 // pred_region
          %284 = dma.done [#allocation3], 32
        $region48: #{sse_conv_forward.1} parent=43 // pred_fallthru
          _
        // Predicated region
        $region49: #{sse_conv_forward.1} parent=43 // pred_check
          %p285 = pneg %p106
        $region50: #{sse_conv_forward.1} parent=43 // pred_check_branch
          %287 = sbr.rel (%p285) target = $region52
        $region51: #{sse_conv_forward.1} parent=43 // pred_region
          %288 = dma.done [#allocation5], 16
        $region52: #{sse_conv_forward.1} parent=43 // pred_fallthru
          _
        // Predicated region
        $region53: #{sse_conv_forward.1} parent=43 // pred_check
          %p289 = pneg %p127
        $region54: #{sse_conv_forward.1} parent=43 // pred_check_branch
          %291 = sbr.rel (%p289) target = $region56
        $region55: #{sse_conv_forward.1} parent=43 // pred_region
          %292 = dma.done [#allocation5], 16
        $region56: #{sse_conv_forward.1} parent=43 // pred_fallthru
          _
        // Predicated region
        $region57: #{sse_conv_forward.1} parent=43 // pred_check
          %p293 = pneg %p148
        $region58: #{sse_conv_forward.1} parent=43 // pred_check_branch
          %295 = sbr.rel (%p293) target = $region60
        $region59: #{sse_conv_forward.1} parent=43 // pred_region
          %296 = dma.done [#allocation8], 16
        $region60: #{sse_conv_forward.1} parent=43 // pred_fallthru
          _
        %297 = sfence
        %p298 = scmp.lt.s32.totalorder %s22, 1
        %s299 = scalar_select %p298, %s22, 1
        %s300 = smul.addr %s299, 6
        %s301 = smul.addr %s300, 8
        %s302 = scalar_lea.vmem %s0, %s301
        %p303 = pneg %p43
        %p304 = pneg %p40
        %p305 = pneg %p64
        %p306 = pneg %p61
        %p307 = pneg %p85
        %p308 = pneg %p82
        %p309 = pneg %p106
        %p310 = pneg %p103
        %p311 = pneg %p127
        %p312 = pneg %p124
        %p313 = pneg %p148
        %p314 = pneg %p145
        %p315 = pneg %p174
        %p316 = pneg %p171
        %p317 = scmp.lt.s32.totalorder %s22, 1
        %s318 = scalar_select %p317, %s22, 1
        %s319 = smul.addr %s318, 4
        %s320 = smul.addr %s319, 8
        %s321 = scalar_lea.vmem %s6, %s320
        %p322 = pneg %p200
        %p323 = pneg %p197
        %p324 = scmp.lt.s32.totalorder %s22, 1
        %s325 = scalar_select %p324, %s22, 1
        %s326 = smul.addr %s325, 2
        %s327 = smul.addr %s326, 8
        %s328 = scalar_lea.vmem %s7, %s327
        %p329 = scmp.lt.s32.totalorder %s22, 1
        %s330 = scalar_select %p329, %s22, 1
        %s331 = smul.addr %s330, 6
        %s332 = smul.addr %s331, 8
        %s333 = scalar_lea.vmem %s0, %s332
        %p334 = scmp.lt.s32.totalorder %s22, 1
        %s335 = scalar_select %p334, %s22, 1
        %s336 = smul.addr %s335, 4
        %s337 = smul.addr %s336, 8
        %s338 = scalar_lea.vmem %s6, %s337
        %p339 = scmp.lt.s32.totalorder %s22, 1
        %s340 = scalar_select %p339, %s22, 1
        %s341 = smul.addr %s340, 2
        %s342 = smul.addr %s341, 8
        %s343 = scalar_lea.vmem %s7, %s342
        %v344 = vld [vmem:[%s1] sm:$0xff]
        %v345 = vld [vmem:[%s333] sm:$0xff]
        %v346 = vld [vmem:[%s333 + $0x8] sm:$0xff]
        %s347 = sld [smem:[#allocation2]]
        %v348 = vstv %s347
        %v349 = vmul.f32 %v345, %v348
        %s350 = sld [smem:[#allocation2 + $0x36]]
        %v351 = vstv %s350
        %v352 = vmul.f32 %v345, %v351
        %s353 = sld [smem:[#allocation2 + $0x6c]]
        %v354 = vstv %s353
        %v355 = vmul.f32 %v345, %v354
        %s356 = sld [smem:[#allocation2 + $0xa2]]
        %v357 = vstv %s356
        %v358 = vmul.f32 %v345, %v357
        %s359 = sld [smem:[#allocation2 + $0x1]]
        %v360 = vstv %s359
        %v361 = vmul.f32 %v345, %v360
        %v362 = vmul.f32 %v346, %v360
        %365 = vrot.lane.b32.xlu0 %v361, 127
        %v366 = vpop.permute.xlu0 %365
        %367 = vrot.lane.b32.xlu0 %v362, 127
        %v368 = vpop.permute.xlu0 %367
        %vm369 = vcmask 1039360
        %v370 = vsel %vm369, %v366, %v368
        %v372 = vadd.f32 %v349, %v370
        %s373 = sld [smem:[#allocation2 + $0x37]]
        %v374 = vstv %s373
        %v375 = vmul.f32 %v345, %v374
        %v376 = vmul.f32 %v346, %v374
        %379 = vrot.lane.b32.xlu0 %v375, 127
        %v380 = vpop.permute.xlu0 %379
        %381 = vrot.lane.b32.xlu0 %v376, 127
        %v382 = vpop.permute.xlu0 %381
        %v383 = vsel %vm369, %v380, %v382
        %v385 = vadd.f32 %v352, %v383
        %s386 = sld [smem:[#allocation2 + $0x6d]]
        %v387 = vstv %s386
        %v388 = vmul.f32 %v345, %v387
        %v389 = vmul.f32 %v346, %v387
        %392 = vrot.lane.b32.xlu0 %v388, 127
        %v393 = vpop.permute.xlu0 %392
        %394 = vrot.lane.b32.xlu0 %v389, 127
        %v395 = vpop.permute.xlu0 %394
        %v396 = vsel %vm369, %v393, %v395
        %v398 = vadd.f32 %v355, %v396
        %s399 = sld [smem:[#allocation2 + $0xa3]]
        %v400 = vstv %s399
        %v401 = vmul.f32 %v345, %v400
        %v402 = vmul.f32 %v346, %v400
        %405 = vrot.lane.b32.xlu0 %v401, 127
        %v406 = vpop.permute.xlu0 %405
        %407 = vrot.lane.b32.xlu0 %v402, 127
        %v408 = vpop.permute.xlu0 %407
        %v409 = vsel %vm369, %v406, %v408
        %v411 = vadd.f32 %v358, %v409
        %s412 = sld [smem:[#allocation2 + $0x2]]
        %v413 = vstv %s412
        %v414 = vmul.f32 %v345, %v413
        %v415 = vmul.f32 %v346, %v413
        %418 = vrot.lane.b32.xlu0 %v414, 126
        %v419 = vpop.permute.xlu0 %418
        %420 = vrot.lane.b32.xlu0 %v415, 126
        %v421 = vpop.permute.xlu0 %420
        %vm422 = vcmask 1031168
        %v423 = vsel %vm422, %v419, %v421
        %v425 = vadd.f32 %v372, %v423
        %s426 = sld [smem:[#allocation2 + $0x38]]
        %v427 = vstv %s426
        %v428 = vmul.f32 %v345, %v427
        %v429 = vmul.f32 %v346, %v427
        %432 = vrot.lane.b32.xlu0 %v428, 126
        %v433 = vpop.permute.xlu0 %432
        %434 = vrot.lane.b32.xlu0 %v429, 126
        %v435 = vpop.permute.xlu0 %434
        %v436 = vsel %vm422, %v433, %v435
        %v438 = vadd.f32 %v385, %v436
        %s439 = sld [smem:[#allocation2 + $0x6e]]
        %v440 = vstv %s439
        %v441 = vmul.f32 %v345, %v440
        %v442 = vmul.f32 %v346, %v440
        %445 = vrot.lane.b32.xlu0 %v441, 126
        %v446 = vpop.permute.xlu0 %445
        %447 = vrot.lane.b32.xlu0 %v442, 126
        %v448 = vpop.permute.xlu0 %447
        %v449 = vsel %vm422, %v446, %v448
        %v451 = vadd.f32 %v398, %v449
        %s452 = sld [smem:[#allocation2 + $0xa4]]
        %v453 = vstv %s452
        %v454 = vmul.f32 %v345, %v453
        %v455 = vmul.f32 %v346, %v453
        %458 = vrot.lane.b32.xlu0 %v454, 126
        %v459 = vpop.permute.xlu0 %458
        %460 = vrot.lane.b32.xlu0 %v455, 126
        %v461 = vpop.permute.xlu0 %460
        %v462 = vsel %vm422, %v459, %v461
        %v464 = vadd.f32 %v411, %v462
        %s465 = sld [smem:[#allocation2 + $0x3]]
        %v466 = vstv %s465
        %v467 = vmul.f32 %v345, %v466
        %v468 = vmul.f32 %v346, %v466
        %471 = vrot.lane.b32.xlu0 %v467, 118
        %v472 = vpop.permute.xlu0 %471
        %473 = vrot.lane.b32.xlu0 %v468, 118
        %v474 = vpop.permute.xlu0 %473
        %vm475 = vcmask 965632
        %v476 = vsel %vm475, %v472, %v474
        %v478 = vadd.f32 %v425, %v476
        %s479 = sld [smem:[#allocation2 + $0x39]]
        %v480 = vstv %s479
        %v481 = vmul.f32 %v345, %v480
        %v482 = vmul.f32 %v346, %v480
        %485 = vrot.lane.b32.xlu0 %v481, 118
        %v486 = vpop.permute.xlu0 %485
        %487 = vrot.lane.b32.xlu0 %v482, 118
        %v488 = vpop.permute.xlu0 %487
        %v489 = vsel %vm475, %v486, %v488
        %v491 = vadd.f32 %v438, %v489
        %s492 = sld [smem:[#allocation2 + $0x6f]]
        %v493 = vstv %s492
        %v494 = vmul.f32 %v345, %v493
        %v495 = vmul.f32 %v346, %v493
        %498 = vrot.lane.b32.xlu0 %v494, 118
        %v499 = vpop.permute.xlu0 %498
        %500 = vrot.lane.b32.xlu0 %v495, 118
        %v501 = vpop.permute.xlu0 %500
        %v502 = vsel %vm475, %v499, %v501
        %v504 = vadd.f32 %v451, %v502
        %s505 = sld [smem:[#allocation2 + $0xa5]]
        %v506 = vstv %s505
        %v507 = vmul.f32 %v345, %v506
        %v508 = vmul.f32 %v346, %v506
        %511 = vrot.lane.b32.xlu0 %v507, 118
        %v512 = vpop.permute.xlu0 %511
        %513 = vrot.lane.b32.xlu0 %v508, 118
        %v514 = vpop.permute.xlu0 %513
        %v515 = vsel %vm475, %v512, %v514
        %v517 = vadd.f32 %v464, %v515
        %s518 = sld [smem:[#allocation2 + $0x4]]
        %v519 = vstv %s518
        %v520 = vmul.f32 %v345, %v519
        %v521 = vmul.f32 %v346, %v519
        %524 = vrot.lane.b32.xlu0 %v520, 117
        %v525 = vpop.permute.xlu0 %524
        %526 = vrot.lane.b32.xlu0 %v521, 117
        %v527 = vpop.permute.xlu0 %526
        %vm528 = vcmask 957440
        %v529 = vsel %vm528, %v525, %v527
        %v531 = vadd.f32 %v478, %v529
        %s532 = sld [smem:[#allocation2 + $0x3a]]
        %v533 = vstv %s532
        %v534 = vmul.f32 %v345, %v533
        %v535 = vmul.f32 %v346, %v533
        %538 = vrot.lane.b32.xlu0 %v534, 117
        %v539 = vpop.permute.xlu0 %538
        %540 = vrot.lane.b32.xlu0 %v535, 117
        %v541 = vpop.permute.xlu0 %540
        %v542 = vsel %vm528, %v539, %v541
        %v544 = vadd.f32 %v491, %v542
        %s545 = sld [smem:[#allocation2 + $0x70]]
        %v546 = vstv %s545
        %v547 = vmul.f32 %v345, %v546
        %v548 = vmul.f32 %v346, %v546
        %551 = vrot.lane.b32.xlu0 %v547, 117
        %v552 = vpop.permute.xlu0 %551
        %553 = vrot.lane.b32.xlu0 %v548, 117
        %v554 = vpop.permute.xlu0 %553
        %v555 = vsel %vm528, %v552, %v554
        %v557 = vadd.f32 %v504, %v555
        %s558 = sld [smem:[#allocation2 + $0xa6]]
        %v559 = vstv %s558
        %v560 = vmul.f32 %v345, %v559
        %v561 = vmul.f32 %v346, %v559
        %564 = vrot.lane.b32.xlu0 %v560, 117
        %v565 = vpop.permute.xlu0 %564
        %566 = vrot.lane.b32.xlu0 %v561, 117
        %v567 = vpop.permute.xlu0 %566
        %v568 = vsel %vm528, %v565, %v567
        %v570 = vadd.f32 %v517, %v568
        %s571 = sld [smem:[#allocation2 + $0x5]]
        %v572 = vstv %s571
        %v573 = vmul.f32 %v345, %v572
        %v574 = vmul.f32 %v346, %v572
        %577 = vrot.lane.b32.xlu0 %v573, 116
        %v578 = vpop.permute.xlu0 %577
        %579 = vrot.lane.b32.xlu0 %v574, 116
        %v580 = vpop.permute.xlu0 %579
        %vm581 = vcmask 949248
        %v582 = vsel %vm581, %v578, %v580
        %v584 = vadd.f32 %v531, %v582
        %s585 = sld [smem:[#allocation2 + $0x3b]]
        %v586 = vstv %s585
        %v587 = vmul.f32 %v345, %v586
        %v588 = vmul.f32 %v346, %v586
        %591 = vrot.lane.b32.xlu0 %v587, 116
        %v592 = vpop.permute.xlu0 %591
        %593 = vrot.lane.b32.xlu0 %v588, 116
        %v594 = vpop.permute.xlu0 %593
        %v595 = vsel %vm581, %v592, %v594
        %v597 = vadd.f32 %v544, %v595
        %s598 = sld [smem:[#allocation2 + $0x71]]
        %v599 = vstv %s598
        %v600 = vmul.f32 %v345, %v599
        %v601 = vmul.f32 %v346, %v599
        %604 = vrot.lane.b32.xlu0 %v600, 116
        %v605 = vpop.permute.xlu0 %604
        %606 = vrot.lane.b32.xlu0 %v601, 116
        %v607 = vpop.permute.xlu0 %606
        %v608 = vsel %vm581, %v605, %v607
        %v610 = vadd.f32 %v557, %v608
        %s611 = sld [smem:[#allocation2 + $0xa7]]
        %v612 = vstv %s611
        %v613 = vmul.f32 %v345, %v612
        %v614 = vmul.f32 %v346, %v612
        %617 = vrot.lane.b32.xlu0 %v613, 116
        %v618 = vpop.permute.xlu0 %617
        %619 = vrot.lane.b32.xlu0 %v614, 116
        %v620 = vpop.permute.xlu0 %619
        %v621 = vsel %vm581, %v618, %v620
        %v623 = vadd.f32 %v570, %v621
        %s624 = sld [smem:[#allocation2 + $0x6]]
        %v625 = vstv %s624
        %v626 = vmul.f32 %v345, %v625
        %v627 = vmul.f32 %v346, %v625
        %630 = vrot.lane.b32.xlu0 %v626, 108
        %v631 = vpop.permute.xlu0 %630
        %632 = vrot.lane.b32.xlu0 %v627, 108
        %v633 = vpop.permute.xlu0 %632
        %vm634 = vcmask 883712
        %v635 = vsel %vm634, %v631, %v633
        %v637 = vadd.f32 %v584, %v635
        %s638 = sld [smem:[#allocation2 + $0x3c]]
        %v639 = vstv %s638
        %v640 = vmul.f32 %v345, %v639
        %v641 = vmul.f32 %v346, %v639
        %644 = vrot.lane.b32.xlu0 %v640, 108
        %v645 = vpop.permute.xlu0 %644
        %646 = vrot.lane.b32.xlu0 %v641, 108
        %v647 = vpop.permute.xlu0 %646
        %v648 = vsel %vm634, %v645, %v647
        %v650 = vadd.f32 %v597, %v648
        %s651 = sld [smem:[#allocation2 + $0x72]]
        %v652 = vstv %s651
        %v653 = vmul.f32 %v345, %v652
        %v654 = vmul.f32 %v346, %v652
        %657 = vrot.lane.b32.xlu0 %v653, 108
        %v658 = vpop.permute.xlu0 %657
        %659 = vrot.lane.b32.xlu0 %v654, 108
        %v660 = vpop.permute.xlu0 %659
        %v661 = vsel %vm634, %v658, %v660
        %v663 = vadd.f32 %v610, %v661
        %s664 = sld [smem:[#allocation2 + $0xa8]]
        %v665 = vstv %s664
        %v666 = vmul.f32 %v345, %v665
        %v667 = vmul.f32 %v346, %v665
        %670 = vrot.lane.b32.xlu0 %v666, 108
        %v671 = vpop.permute.xlu0 %670
        %672 = vrot.lane.b32.xlu0 %v667, 108
        %v673 = vpop.permute.xlu0 %672
        %v674 = vsel %vm634, %v671, %v673
        %v676 = vadd.f32 %v623, %v674
        %s677 = sld [smem:[#allocation2 + $0x7]]
        %v678 = vstv %s677
        %v679 = vmul.f32 %v345, %v678
        %v680 = vmul.f32 %v346, %v678
        %683 = vrot.lane.b32.xlu0 %v679, 107
        %v684 = vpop.permute.xlu0 %683
        %685 = vrot.lane.b32.xlu0 %v680, 107
        %v686 = vpop.permute.xlu0 %685
        %vm687 = vcmask 875520
        %v688 = vsel %vm687, %v684, %v686
        %v690 = vadd.f32 %v637, %v688
        %s691 = sld [smem:[#allocation2 + $0x3d]]
        %v692 = vstv %s691
        %v693 = vmul.f32 %v345, %v692
        %v694 = vmul.f32 %v346, %v692
        %697 = vrot.lane.b32.xlu0 %v693, 107
        %v698 = vpop.permute.xlu0 %697
        %699 = vrot.lane.b32.xlu0 %v694, 107
        %v700 = vpop.permute.xlu0 %699
        %v701 = vsel %vm687, %v698, %v700
        %v703 = vadd.f32 %v650, %v701
        %s704 = sld [smem:[#allocation2 + $0x73]]
        %v705 = vstv %s704
        %v706 = vmul.f32 %v345, %v705
        %v707 = vmul.f32 %v346, %v705
        %710 = vrot.lane.b32.xlu0 %v706, 107
        %v711 = vpop.permute.xlu0 %710
        %712 = vrot.lane.b32.xlu0 %v707, 107
        %v713 = vpop.permute.xlu0 %712
        %v714 = vsel %vm687, %v711, %v713
        %v716 = vadd.f32 %v663, %v714
        %s717 = sld [smem:[#allocation2 + $0xa9]]
        %v718 = vstv %s717
        %v719 = vmul.f32 %v345, %v718
        %v720 = vmul.f32 %v346, %v718
        %723 = vrot.lane.b32.xlu0 %v719, 107
        %v724 = vpop.permute.xlu0 %723
        %725 = vrot.lane.b32.xlu0 %v720, 107
        %v726 = vpop.permute.xlu0 %725
        %v727 = vsel %vm687, %v724, %v726
        %v729 = vadd.f32 %v676, %v727
        %s730 = sld [smem:[#allocation2 + $0x8]]
        %v731 = vstv %s730
        %v732 = vmul.f32 %v345, %v731
        %v733 = vmul.f32 %v346, %v731
        %736 = vrot.lane.b32.xlu0 %v732, 106
        %v737 = vpop.permute.xlu0 %736
        %738 = vrot.lane.b32.xlu0 %v733, 106
        %v739 = vpop.permute.xlu0 %738
        %vm740 = vcmask 867328
        %v741 = vsel %vm740, %v737, %v739
        %v743 = vadd.f32 %v690, %v741
        %s744 = sld [smem:[#allocation2 + $0x3e]]
        %v745 = vstv %s744
        %v746 = vmul.f32 %v345, %v745
        %v747 = vmul.f32 %v346, %v745
        %750 = vrot.lane.b32.xlu0 %v746, 106
        %v751 = vpop.permute.xlu0 %750
        %752 = vrot.lane.b32.xlu0 %v747, 106
        %v753 = vpop.permute.xlu0 %752
        %v754 = vsel %vm740, %v751, %v753
        %v756 = vadd.f32 %v703, %v754
        %s757 = sld [smem:[#allocation2 + $0x74]]
        %v758 = vstv %s757
        %v759 = vmul.f32 %v345, %v758
        %v760 = vmul.f32 %v346, %v758
        %763 = vrot.lane.b32.xlu0 %v759, 106
        %v764 = vpop.permute.xlu0 %763
        %765 = vrot.lane.b32.xlu0 %v760, 106
        %v766 = vpop.permute.xlu0 %765
        %v767 = vsel %vm740, %v764, %v766
        %v769 = vadd.f32 %v716, %v767
        %s770 = sld [smem:[#allocation2 + $0xaa]]
        %v771 = vstv %s770
        %v772 = vmul.f32 %v345, %v771
        %v773 = vmul.f32 %v346, %v771
        %776 = vrot.lane.b32.xlu0 %v772, 106
        %v777 = vpop.permute.xlu0 %776
        %778 = vrot.lane.b32.xlu0 %v773, 106
        %v779 = vpop.permute.xlu0 %778
        %v780 = vsel %vm740, %v777, %v779
        %v782 = vadd.f32 %v729, %v780
        %v783 = vld [vmem:[%s333] sm:$0xfe]
        %v784 = vld [vmem:[%s333 + $0x8] sm:$0xfe]
        %v785 = vld [vmem:[%s333 + $0x10] sm:$0x1]
        %v786 = vld [vmem:[%s333 + $0x18] sm:$0x1]
        %s787 = sld [smem:[#allocation2 + $0x9]]
        %v788 = vstv %s787
        %v789 = vmul.f32 %v783, %v788
        %v790 = vmul.f32 %v785, %v788
        %vm793 = vcmask 1046528
        %v794 = vrot.slane %v789, 1
        %v795 = vrot.slane %v790, 1
        %v796 = vsel %vm793, %v794, %v795
        %v798 = vadd.f32 %v743, %v796
        %s799 = sld [smem:[#allocation2 + $0x3f]]
        %v800 = vstv %s799
        %v801 = vmul.f32 %v783, %v800
        %v802 = vmul.f32 %v785, %v800
        %v805 = vrot.slane %v801, 1
        %v806 = vrot.slane %v802, 1
        %v807 = vsel %vm793, %v805, %v806
        %v809 = vadd.f32 %v756, %v807
        %s810 = sld [smem:[#allocation2 + $0x75]]
        %v811 = vstv %s810
        %v812 = vmul.f32 %v783, %v811
        %v813 = vmul.f32 %v785, %v811
        %v816 = vrot.slane %v812, 1
        %v817 = vrot.slane %v813, 1
        %v818 = vsel %vm793, %v816, %v817
        %v820 = vadd.f32 %v769, %v818
        %s821 = sld [smem:[#allocation2 + $0xab]]
        %v822 = vstv %s821
        %v823 = vmul.f32 %v783, %v822
        %v824 = vmul.f32 %v785, %v822
        %v827 = vrot.slane %v823, 1
        %v828 = vrot.slane %v824, 1
        %v829 = vsel %vm793, %v827, %v828
        %v831 = vadd.f32 %v782, %v829
        %s832 = sld [smem:[#allocation2 + $0xa]]
        %v833 = vstv %s832
        %v834 = vmul.f32 %v783, %v833
        %v835 = vmul.f32 %v784, %v833
        %v836 = vmul.f32 %v785, %v833
        %v837 = vmul.f32 %v786, %v833
        %v842 = vrot.slane %v834, 1
        %v843 = vrot.slane %v836, 1
        %v844 = vsel %vm793, %v842, %v843
        %v845 = vrot.slane %v835, 1
        %v846 = vrot.slane %v837, 1
        %v847 = vsel %vm793, %v845, %v846
        %848 = vrot.lane.b32.xlu0 %v844, 127
        %v849 = vpop.permute.xlu0 %848
        %850 = vrot.lane.b32.xlu0 %v847, 127
        %v851 = vpop.permute.xlu0 %850
        %v852 = vsel %vm369, %v849, %v851
        %v854 = vadd.f32 %v798, %v852
        %s855 = sld [smem:[#allocation2 + $0x40]]
        %v856 = vstv %s855
        %v857 = vmul.f32 %v783, %v856
        %v858 = vmul.f32 %v784, %v856
        %v859 = vmul.f32 %v785, %v856
        %v860 = vmul.f32 %v786, %v856
        %v865 = vrot.slane %v857, 1
        %v866 = vrot.slane %v859, 1
        %v867 = vsel %vm793, %v865, %v866
        %v868 = vrot.slane %v858, 1
        %v869 = vrot.slane %v860, 1
        %v870 = vsel %vm793, %v868, %v869
        %871 = vrot.lane.b32.xlu0 %v867, 127
        %v872 = vpop.permute.xlu0 %871
        %873 = vrot.lane.b32.xlu0 %v870, 127
        %v874 = vpop.permute.xlu0 %873
        %v875 = vsel %vm369, %v872, %v874
        %v877 = vadd.f32 %v809, %v875
        %s878 = sld [smem:[#allocation2 + $0x76]]
        %v879 = vstv %s878
        %v880 = vmul.f32 %v783, %v879
        %v881 = vmul.f32 %v784, %v879
        %v882 = vmul.f32 %v785, %v879
        %v883 = vmul.f32 %v786, %v879
        %v888 = vrot.slane %v880, 1
        %v889 = vrot.slane %v882, 1
        %v890 = vsel %vm793, %v888, %v889
        %v891 = vrot.slane %v881, 1
        %v892 = vrot.slane %v883, 1
        %v893 = vsel %vm793, %v891, %v892
        %894 = vrot.lane.b32.xlu0 %v890, 127
        %v895 = vpop.permute.xlu0 %894
        %896 = vrot.lane.b32.xlu0 %v893, 127
        %v897 = vpop.permute.xlu0 %896
        %v898 = vsel %vm369, %v895, %v897
        %v900 = vadd.f32 %v820, %v898
        %s901 = sld [smem:[#allocation2 + $0xac]]
        %v902 = vstv %s901
        %v903 = vmul.f32 %v783, %v902
        %v904 = vmul.f32 %v784, %v902
        %v905 = vmul.f32 %v785, %v902
        %v906 = vmul.f32 %v786, %v902
        %v911 = vrot.slane %v903, 1
        %v912 = vrot.slane %v905, 1
        %v913 = vsel %vm793, %v911, %v912
        %v914 = vrot.slane %v904, 1
        %v915 = vrot.slane %v906, 1
        %v916 = vsel %vm793, %v914, %v915
        %917 = vrot.lane.b32.xlu0 %v913, 127
        %v918 = vpop.permute.xlu0 %917
        %919 = vrot.lane.b32.xlu0 %v916, 127
        %v920 = vpop.permute.xlu0 %919
        %v921 = vsel %vm369, %v918, %v920
        %v923 = vadd.f32 %v831, %v921
        %s924 = sld [smem:[#allocation2 + $0xb]]
        %v925 = vstv %s924
        %v926 = vmul.f32 %v783, %v925
        %v927 = vmul.f32 %v784, %v925
        %v928 = vmul.f32 %v785, %v925
        %v929 = vmul.f32 %v786, %v925
        %v934 = vrot.slane %v926, 1
        %v935 = vrot.slane %v928, 1
        %v936 = vsel %vm793, %v934, %v935
        %v937 = vrot.slane %v927, 1
        %v938 = vrot.slane %v929, 1
        %v939 = vsel %vm793, %v937, %v938
        %940 = vrot.lane.b32.xlu0 %v936, 126
        %v941 = vpop.permute.xlu0 %940
        %942 = vrot.lane.b32.xlu0 %v939, 126
        %v943 = vpop.permute.xlu0 %942
        %v944 = vsel %vm422, %v941, %v943
        %v946 = vadd.f32 %v854, %v944
        %s947 = sld [smem:[#allocation2 + $0x41]]
        %v948 = vstv %s947
        %v949 = vmul.f32 %v783, %v948
        %v950 = vmul.f32 %v784, %v948
        %v951 = vmul.f32 %v785, %v948
        %v952 = vmul.f32 %v786, %v948
        %v957 = vrot.slane %v949, 1
        %v958 = vrot.slane %v951, 1
        %v959 = vsel %vm793, %v957, %v958
        %v960 = vrot.slane %v950, 1
        %v961 = vrot.slane %v952, 1
        %v962 = vsel %vm793, %v960, %v961
        %963 = vrot.lane.b32.xlu0 %v959, 126
        %v964 = vpop.permute.xlu0 %963
        %965 = vrot.lane.b32.xlu0 %v962, 126
        %v966 = vpop.permute.xlu0 %965
        %v967 = vsel %vm422, %v964, %v966
        %v969 = vadd.f32 %v877, %v967
        %s970 = sld [smem:[#allocation2 + $0x77]]
        %v971 = vstv %s970
        %v972 = vmul.f32 %v783, %v971
        %v973 = vmul.f32 %v784, %v971
        %v974 = vmul.f32 %v785, %v971
        %v975 = vmul.f32 %v786, %v971
        %v980 = vrot.slane %v972, 1
        %v981 = vrot.slane %v974, 1
        %v982 = vsel %vm793, %v980, %v981
        %v983 = vrot.slane %v973, 1
        %v984 = vrot.slane %v975, 1
        %v985 = vsel %vm793, %v983, %v984
        %986 = vrot.lane.b32.xlu0 %v982, 126
        %v987 = vpop.permute.xlu0 %986
        %988 = vrot.lane.b32.xlu0 %v985, 126
        %v989 = vpop.permute.xlu0 %988
        %v990 = vsel %vm422, %v987, %v989
        %v992 = vadd.f32 %v900, %v990
        %s993 = sld [smem:[#allocation2 + $0xad]]
        %v994 = vstv %s993
        %v995 = vmul.f32 %v783, %v994
        %v996 = vmul.f32 %v784, %v994
        %v997 = vmul.f32 %v785, %v994
        %v998 = vmul.f32 %v786, %v994
        %v1003 = vrot.slane %v995, 1
        %v1004 = vrot.slane %v997, 1
        %v1005 = vsel %vm793, %v1003, %v1004
        %v1006 = vrot.slane %v996, 1
        %v1007 = vrot.slane %v998, 1
        %v1008 = vsel %vm793, %v1006, %v1007
        %1009 = vrot.lane.b32.xlu0 %v1005, 126
        %v1010 = vpop.permute.xlu0 %1009
        %1011 = vrot.lane.b32.xlu0 %v1008, 126
        %v1012 = vpop.permute.xlu0 %1011
        %v1013 = vsel %vm422, %v1010, %v1012
        %v1015 = vadd.f32 %v923, %v1013
        %s1016 = sld [smem:[#allocation2 + $0xc]]
        %v1017 = vstv %s1016
        %v1018 = vmul.f32 %v783, %v1017
        %v1019 = vmul.f32 %v784, %v1017
        %v1020 = vmul.f32 %v785, %v1017
        %v1021 = vmul.f32 %v786, %v1017
        %v1026 = vrot.slane %v1018, 1
        %v1027 = vrot.slane %v1020, 1
        %v1028 = vsel %vm793, %v1026, %v1027
        %v1029 = vrot.slane %v1019, 1
        %v1030 = vrot.slane %v1021, 1
        %v1031 = vsel %vm793, %v1029, %v1030
        %1032 = vrot.lane.b32.xlu0 %v1028, 118
        %v1033 = vpop.permute.xlu0 %1032
        %1034 = vrot.lane.b32.xlu0 %v1031, 118
        %v1035 = vpop.permute.xlu0 %1034
        %v1036 = vsel %vm475, %v1033, %v1035
        %v1038 = vadd.f32 %v946, %v1036
        %s1039 = sld [smem:[#allocation2 + $0x42]]
        %v1040 = vstv %s1039
        %v1041 = vmul.f32 %v783, %v1040
        %v1042 = vmul.f32 %v784, %v1040
        %v1043 = vmul.f32 %v785, %v1040
        %v1044 = vmul.f32 %v786, %v1040
        %v1049 = vrot.slane %v1041, 1
        %v1050 = vrot.slane %v1043, 1
        %v1051 = vsel %vm793, %v1049, %v1050
        %v1052 = vrot.slane %v1042, 1
        %v1053 = vrot.slane %v1044, 1
        %v1054 = vsel %vm793, %v1052, %v1053
        %1055 = vrot.lane.b32.xlu0 %v1051, 118
        %v1056 = vpop.permute.xlu0 %1055
        %1057 = vrot.lane.b32.xlu0 %v1054, 118
        %v1058 = vpop.permute.xlu0 %1057
        %v1059 = vsel %vm475, %v1056, %v1058
        %v1061 = vadd.f32 %v969, %v1059
        %s1062 = sld [smem:[#allocation2 + $0x78]]
        %v1063 = vstv %s1062
        %v1064 = vmul.f32 %v783, %v1063
        %v1065 = vmul.f32 %v784, %v1063
        %v1066 = vmul.f32 %v785, %v1063
        %v1067 = vmul.f32 %v786, %v1063
        %v1072 = vrot.slane %v1064, 1
        %v1073 = vrot.slane %v1066, 1
        %v1074 = vsel %vm793, %v1072, %v1073
        %v1075 = vrot.slane %v1065, 1
        %v1076 = vrot.slane %v1067, 1
        %v1077 = vsel %vm793, %v1075, %v1076
        %1078 = vrot.lane.b32.xlu0 %v1074, 118
        %v1079 = vpop.permute.xlu0 %1078
        %1080 = vrot.lane.b32.xlu0 %v1077, 118
        %v1081 = vpop.permute.xlu0 %1080
        %v1082 = vsel %vm475, %v1079, %v1081
        %v1084 = vadd.f32 %v992, %v1082
        %s1085 = sld [smem:[#allocation2 + $0xae]]
        %v1086 = vstv %s1085
        %v1087 = vmul.f32 %v783, %v1086
        %v1088 = vmul.f32 %v784, %v1086
        %v1089 = vmul.f32 %v785, %v1086
        %v1090 = vmul.f32 %v786, %v1086
        %v1095 = vrot.slane %v1087, 1
        %v1096 = vrot.slane %v1089, 1
        %v1097 = vsel %vm793, %v1095, %v1096
        %v1098 = vrot.slane %v1088, 1
        %v1099 = vrot.slane %v1090, 1
        %v1100 = vsel %vm793, %v1098, %v1099
        %1101 = vrot.lane.b32.xlu0 %v1097, 118
        %v1102 = vpop.permute.xlu0 %1101
        %1103 = vrot.lane.b32.xlu0 %v1100, 118
        %v1104 = vpop.permute.xlu0 %1103
        %v1105 = vsel %vm475, %v1102, %v1104
        %v1107 = vadd.f32 %v1015, %v1105
        %s1108 = sld [smem:[#allocation2 + $0xd]]
        %v1109 = vstv %s1108
        %v1110 = vmul.f32 %v783, %v1109
        %v1111 = vmul.f32 %v784, %v1109
        %v1112 = vmul.f32 %v785, %v1109
        %v1113 = vmul.f32 %v786, %v1109
        %v1118 = vrot.slane %v1110, 1
        %v1119 = vrot.slane %v1112, 1
        %v1120 = vsel %vm793, %v1118, %v1119
        %v1121 = vrot.slane %v1111, 1
        %v1122 = vrot.slane %v1113, 1
        %v1123 = vsel %vm793, %v1121, %v1122
        %1124 = vrot.lane.b32.xlu0 %v1120, 117
        %v1125 = vpop.permute.xlu0 %1124
        %1126 = vrot.lane.b32.xlu0 %v1123, 117
        %v1127 = vpop.permute.xlu0 %1126
        %v1128 = vsel %vm528, %v1125, %v1127
        %v1130 = vadd.f32 %v1038, %v1128
        %s1131 = sld [smem:[#allocation2 + $0x43]]
        %v1132 = vstv %s1131
        %v1133 = vmul.f32 %v783, %v1132
        %v1134 = vmul.f32 %v784, %v1132
        %v1135 = vmul.f32 %v785, %v1132
        %v1136 = vmul.f32 %v786, %v1132
        %v1141 = vrot.slane %v1133, 1
        %v1142 = vrot.slane %v1135, 1
        %v1143 = vsel %vm793, %v1141, %v1142
        %v1144 = vrot.slane %v1134, 1
        %v1145 = vrot.slane %v1136, 1
        %v1146 = vsel %vm793, %v1144, %v1145
        %1147 = vrot.lane.b32.xlu0 %v1143, 117
        %v1148 = vpop.permute.xlu0 %1147
        %1149 = vrot.lane.b32.xlu0 %v1146, 117
        %v1150 = vpop.permute.xlu0 %1149
        %v1151 = vsel %vm528, %v1148, %v1150
        %v1153 = vadd.f32 %v1061, %v1151
        %s1154 = sld [smem:[#allocation2 + $0x79]]
        %v1155 = vstv %s1154
        %v1156 = vmul.f32 %v783, %v1155
        %v1157 = vmul.f32 %v784, %v1155
        %v1158 = vmul.f32 %v785, %v1155
        %v1159 = vmul.f32 %v786, %v1155
        %v1164 = vrot.slane %v1156, 1
        %v1165 = vrot.slane %v1158, 1
        %v1166 = vsel %vm793, %v1164, %v1165
        %v1167 = vrot.slane %v1157, 1
        %v1168 = vrot.slane %v1159, 1
        %v1169 = vsel %vm793, %v1167, %v1168
        %1170 = vrot.lane.b32.xlu0 %v1166, 117
        %v1171 = vpop.permute.xlu0 %1170
        %1172 = vrot.lane.b32.xlu0 %v1169, 117
        %v1173 = vpop.permute.xlu0 %1172
        %v1174 = vsel %vm528, %v1171, %v1173
        %v1176 = vadd.f32 %v1084, %v1174
        %s1177 = sld [smem:[#allocation2 + $0xaf]]
        %v1178 = vstv %s1177
        %v1179 = vmul.f32 %v783, %v1178
        %v1180 = vmul.f32 %v784, %v1178
        %v1181 = vmul.f32 %v785, %v1178
        %v1182 = vmul.f32 %v786, %v1178
        %v1187 = vrot.slane %v1179, 1
        %v1188 = vrot.slane %v1181, 1
        %v1189 = vsel %vm793, %v1187, %v1188
        %v1190 = vrot.slane %v1180, 1
        %v1191 = vrot.slane %v1182, 1
        %v1192 = vsel %vm793, %v1190, %v1191
        %1193 = vrot.lane.b32.xlu0 %v1189, 117
        %v1194 = vpop.permute.xlu0 %1193
        %1195 = vrot.lane.b32.xlu0 %v1192, 117
        %v1196 = vpop.permute.xlu0 %1195
        %v1197 = vsel %vm528, %v1194, %v1196
        %v1199 = vadd.f32 %v1107, %v1197
        %s1200 = sld [smem:[#allocation2 + $0xe]]
        %v1201 = vstv %s1200
        %v1202 = vmul.f32 %v783, %v1201
        %v1203 = vmul.f32 %v784, %v1201
        %v1204 = vmul.f32 %v785, %v1201
        %v1205 = vmul.f32 %v786, %v1201
        %v1210 = vrot.slane %v1202, 1
        %v1211 = vrot.slane %v1204, 1
        %v1212 = vsel %vm793, %v1210, %v1211
        %v1213 = vrot.slane %v1203, 1
        %v1214 = vrot.slane %v1205, 1
        %v1215 = vsel %vm793, %v1213, %v1214
        %1216 = vrot.lane.b32.xlu0 %v1212, 116
        %v1217 = vpop.permute.xlu0 %1216
        %1218 = vrot.lane.b32.xlu0 %v1215, 116
        %v1219 = vpop.permute.xlu0 %1218
        %v1220 = vsel %vm581, %v1217, %v1219
        %v1222 = vadd.f32 %v1130, %v1220
        %s1223 = sld [smem:[#allocation2 + $0x44]]
        %v1224 = vstv %s1223
        %v1225 = vmul.f32 %v783, %v1224
        %v1226 = vmul.f32 %v784, %v1224
        %v1227 = vmul.f32 %v785, %v1224
        %v1228 = vmul.f32 %v786, %v1224
        %v1233 = vrot.slane %v1225, 1
        %v1234 = vrot.slane %v1227, 1
        %v1235 = vsel %vm793, %v1233, %v1234
        %v1236 = vrot.slane %v1226, 1
        %v1237 = vrot.slane %v1228, 1
        %v1238 = vsel %vm793, %v1236, %v1237
        %1239 = vrot.lane.b32.xlu0 %v1235, 116
        %v1240 = vpop.permute.xlu0 %1239
        %1241 = vrot.lane.b32.xlu0 %v1238, 116
        %v1242 = vpop.permute.xlu0 %1241
        %v1243 = vsel %vm581, %v1240, %v1242
        %v1245 = vadd.f32 %v1153, %v1243
        %s1246 = sld [smem:[#allocation2 + $0x7a]]
        %v1247 = vstv %s1246
        %v1248 = vmul.f32 %v783, %v1247
        %v1249 = vmul.f32 %v784, %v1247
        %v1250 = vmul.f32 %v785, %v1247
        %v1251 = vmul.f32 %v786, %v1247
        %v1256 = vrot.slane %v1248, 1
        %v1257 = vrot.slane %v1250, 1
        %v1258 = vsel %vm793, %v1256, %v1257
        %v1259 = vrot.slane %v1249, 1
        %v1260 = vrot.slane %v1251, 1
        %v1261 = vsel %vm793, %v1259, %v1260
        %1262 = vrot.lane.b32.xlu0 %v1258, 116
        %v1263 = vpop.permute.xlu0 %1262
        %1264 = vrot.lane.b32.xlu0 %v1261, 116
        %v1265 = vpop.permute.xlu0 %1264
        %v1266 = vsel %vm581, %v1263, %v1265
        %v1268 = vadd.f32 %v1176, %v1266
        %s1269 = sld [smem:[#allocation2 + $0xb0]]
        %v1270 = vstv %s1269
        %v1271 = vmul.f32 %v783, %v1270
        %v1272 = vmul.f32 %v784, %v1270
        %v1273 = vmul.f32 %v785, %v1270
        %v1274 = vmul.f32 %v786, %v1270
        %v1279 = vrot.slane %v1271, 1
        %v1280 = vrot.slane %v1273, 1
        %v1281 = vsel %vm793, %v1279, %v1280
        %v1282 = vrot.slane %v1272, 1
        %v1283 = vrot.slane %v1274, 1
        %v1284 = vsel %vm793, %v1282, %v1283
        %1285 = vrot.lane.b32.xlu0 %v1281, 116
        %v1286 = vpop.permute.xlu0 %1285
        %1287 = vrot.lane.b32.xlu0 %v1284, 116
        %v1288 = vpop.permute.xlu0 %1287
        %v1289 = vsel %vm581, %v1286, %v1288
        %v1291 = vadd.f32 %v1199, %v1289
        %s1292 = sld [smem:[#allocation2 + $0xf]]
        %v1293 = vstv %s1292
        %v1294 = vmul.f32 %v783, %v1293
        %v1295 = vmul.f32 %v784, %v1293
        %v1296 = vmul.f32 %v785, %v1293
        %v1297 = vmul.f32 %v786, %v1293
        %v1302 = vrot.slane %v1294, 1
        %v1303 = vrot.slane %v1296, 1
        %v1304 = vsel %vm793, %v1302, %v1303
        %v1305 = vrot.slane %v1295, 1
        %v1306 = vrot.slane %v1297, 1
        %v1307 = vsel %vm793, %v1305, %v1306
        %1308 = vrot.lane.b32.xlu0 %v1304, 108
        %v1309 = vpop.permute.xlu0 %1308
        %1310 = vrot.lane.b32.xlu0 %v1307, 108
        %v1311 = vpop.permute.xlu0 %1310
        %v1312 = vsel %vm634, %v1309, %v1311
        %v1314 = vadd.f32 %v1222, %v1312
        %s1315 = sld [smem:[#allocation2 + $0x45]]
        %v1316 = vstv %s1315
        %v1317 = vmul.f32 %v783, %v1316
        %v1318 = vmul.f32 %v784, %v1316
        %v1319 = vmul.f32 %v785, %v1316
        %v1320 = vmul.f32 %v786, %v1316
        %v1325 = vrot.slane %v1317, 1
        %v1326 = vrot.slane %v1319, 1
        %v1327 = vsel %vm793, %v1325, %v1326
        %v1328 = vrot.slane %v1318, 1
        %v1329 = vrot.slane %v1320, 1
        %v1330 = vsel %vm793, %v1328, %v1329
        %1331 = vrot.lane.b32.xlu0 %v1327, 108
        %v1332 = vpop.permute.xlu0 %1331
        %1333 = vrot.lane.b32.xlu0 %v1330, 108
        %v1334 = vpop.permute.xlu0 %1333
        %v1335 = vsel %vm634, %v1332, %v1334
        %v1337 = vadd.f32 %v1245, %v1335
        %s1338 = sld [smem:[#allocation2 + $0x7b]]
        %v1339 = vstv %s1338
        %v1340 = vmul.f32 %v783, %v1339
        %v1341 = vmul.f32 %v784, %v1339
        %v1342 = vmul.f32 %v785, %v1339
        %v1343 = vmul.f32 %v786, %v1339
        %v1348 = vrot.slane %v1340, 1
        %v1349 = vrot.slane %v1342, 1
        %v1350 = vsel %vm793, %v1348, %v1349
        %v1351 = vrot.slane %v1341, 1
        %v1352 = vrot.slane %v1343, 1
        %v1353 = vsel %vm793, %v1351, %v1352
        %1354 = vrot.lane.b32.xlu0 %v1350, 108
        %v1355 = vpop.permute.xlu0 %1354
        %1356 = vrot.lane.b32.xlu0 %v1353, 108
        %v1357 = vpop.permute.xlu0 %1356
        %v1358 = vsel %vm634, %v1355, %v1357
        %v1360 = vadd.f32 %v1268, %v1358
        %s1361 = sld [smem:[#allocation2 + $0xb1]]
        %v1362 = vstv %s1361
        %v1363 = vmul.f32 %v783, %v1362
        %v1364 = vmul.f32 %v784, %v1362
        %v1365 = vmul.f32 %v785, %v1362
        %v1366 = vmul.f32 %v786, %v1362
        %v1371 = vrot.slane %v1363, 1
        %v1372 = vrot.slane %v1365, 1
        %v1373 = vsel %vm793, %v1371, %v1372
        %v1374 = vrot.slane %v1364, 1
        %v1375 = vrot.slane %v1366, 1
        %v1376 = vsel %vm793, %v1374, %v1375
        %1377 = vrot.lane.b32.xlu0 %v1373, 108
        %v1378 = vpop.permute.xlu0 %1377
        %1379 = vrot.lane.b32.xlu0 %v1376, 108
        %v1380 = vpop.permute.xlu0 %1379
        %v1381 = vsel %vm634, %v1378, %v1380
        %v1383 = vadd.f32 %v1291, %v1381
        %s1384 = sld [smem:[#allocation2 + $0x10]]
        %v1385 = vstv %s1384
        %v1386 = vmul.f32 %v783, %v1385
        %v1387 = vmul.f32 %v784, %v1385
        %v1388 = vmul.f32 %v785, %v1385
        %v1389 = vmul.f32 %v786, %v1385
        %v1394 = vrot.slane %v1386, 1
        %v1395 = vrot.slane %v1388, 1
        %v1396 = vsel %vm793, %v1394, %v1395
        %v1397 = vrot.slane %v1387, 1
        %v1398 = vrot.slane %v1389, 1
        %v1399 = vsel %vm793, %v1397, %v1398
        %1400 = vrot.lane.b32.xlu0 %v1396, 107
        %v1401 = vpop.permute.xlu0 %1400
        %1402 = vrot.lane.b32.xlu0 %v1399, 107
        %v1403 = vpop.permute.xlu0 %1402
        %v1404 = vsel %vm687, %v1401, %v1403
        %v1406 = vadd.f32 %v1314, %v1404
        %s1407 = sld [smem:[#allocation2 + $0x46]]
        %v1408 = vstv %s1407
        %v1409 = vmul.f32 %v783, %v1408
        %v1410 = vmul.f32 %v784, %v1408
        %v1411 = vmul.f32 %v785, %v1408
        %v1412 = vmul.f32 %v786, %v1408
        %v1417 = vrot.slane %v1409, 1
        %v1418 = vrot.slane %v1411, 1
        %v1419 = vsel %vm793, %v1417, %v1418
        %v1420 = vrot.slane %v1410, 1
        %v1421 = vrot.slane %v1412, 1
        %v1422 = vsel %vm793, %v1420, %v1421
        %1423 = vrot.lane.b32.xlu0 %v1419, 107
        %v1424 = vpop.permute.xlu0 %1423
        %1425 = vrot.lane.b32.xlu0 %v1422, 107
        %v1426 = vpop.permute.xlu0 %1425
        %v1427 = vsel %vm687, %v1424, %v1426
        %v1429 = vadd.f32 %v1337, %v1427
        %s1430 = sld [smem:[#allocation2 + $0x7c]]
        %v1431 = vstv %s1430
        %v1432 = vmul.f32 %v783, %v1431
        %v1433 = vmul.f32 %v784, %v1431
        %v1434 = vmul.f32 %v785, %v1431
        %v1435 = vmul.f32 %v786, %v1431
        %v1440 = vrot.slane %v1432, 1
        %v1441 = vrot.slane %v1434, 1
        %v1442 = vsel %vm793, %v1440, %v1441
        %v1443 = vrot.slane %v1433, 1
        %v1444 = vrot.slane %v1435, 1
        %v1445 = vsel %vm793, %v1443, %v1444
        %1446 = vrot.lane.b32.xlu0 %v1442, 107
        %v1447 = vpop.permute.xlu0 %1446
        %1448 = vrot.lane.b32.xlu0 %v1445, 107
        %v1449 = vpop.permute.xlu0 %1448
        %v1450 = vsel %vm687, %v1447, %v1449
        %v1452 = vadd.f32 %v1360, %v1450
        %s1453 = sld [smem:[#allocation2 + $0xb2]]
        %v1454 = vstv %s1453
        %v1455 = vmul.f32 %v783, %v1454
        %v1456 = vmul.f32 %v784, %v1454
        %v1457 = vmul.f32 %v785, %v1454
        %v1458 = vmul.f32 %v786, %v1454
        %v1463 = vrot.slane %v1455, 1
        %v1464 = vrot.slane %v1457, 1
        %v1465 = vsel %vm793, %v1463, %v1464
        %v1466 = vrot.slane %v1456, 1
        %v1467 = vrot.slane %v1458, 1
        %v1468 = vsel %vm793, %v1466, %v1467
        %1469 = vrot.lane.b32.xlu0 %v1465, 107
        %v1470 = vpop.permute.xlu0 %1469
        %1471 = vrot.lane.b32.xlu0 %v1468, 107
        %v1472 = vpop.permute.xlu0 %1471
        %v1473 = vsel %vm687, %v1470, %v1472
        %v1475 = vadd.f32 %v1383, %v1473
        %s1476 = sld [smem:[#allocation2 + $0x11]]
        %v1477 = vstv %s1476
        %v1478 = vmul.f32 %v783, %v1477
        %v1479 = vmul.f32 %v784, %v1477
        %v1480 = vmul.f32 %v785, %v1477
        %v1481 = vmul.f32 %v786, %v1477
        %v1486 = vrot.slane %v1478, 1
        %v1487 = vrot.slane %v1480, 1
        %v1488 = vsel %vm793, %v1486, %v1487
        %v1489 = vrot.slane %v1479, 1
        %v1490 = vrot.slane %v1481, 1
        %v1491 = vsel %vm793, %v1489, %v1490
        %1492 = vrot.lane.b32.xlu0 %v1488, 106
        %v1493 = vpop.permute.xlu0 %1492
        %1494 = vrot.lane.b32.xlu0 %v1491, 106
        %v1495 = vpop.permute.xlu0 %1494
        %v1496 = vsel %vm740, %v1493, %v1495
        %v1498 = vadd.f32 %v1406, %v1496
        %s1499 = sld [smem:[#allocation2 + $0x47]]
        %v1500 = vstv %s1499
        %v1501 = vmul.f32 %v783, %v1500
        %v1502 = vmul.f32 %v784, %v1500
        %v1503 = vmul.f32 %v785, %v1500
        %v1504 = vmul.f32 %v786, %v1500
        %v1509 = vrot.slane %v1501, 1
        %v1510 = vrot.slane %v1503, 1
        %v1511 = vsel %vm793, %v1509, %v1510
        %v1512 = vrot.slane %v1502, 1
        %v1513 = vrot.slane %v1504, 1
        %v1514 = vsel %vm793, %v1512, %v1513
        %1515 = vrot.lane.b32.xlu0 %v1511, 106
        %v1516 = vpop.permute.xlu0 %1515
        %1517 = vrot.lane.b32.xlu0 %v1514, 106
        %v1518 = vpop.permute.xlu0 %1517
        %v1519 = vsel %vm740, %v1516, %v1518
        %v1521 = vadd.f32 %v1429, %v1519
        %s1522 = sld [smem:[#allocation2 + $0x7d]]
        %v1523 = vstv %s1522
        %v1524 = vmul.f32 %v783, %v1523
        %v1525 = vmul.f32 %v784, %v1523
        %v1526 = vmul.f32 %v785, %v1523
        %v1527 = vmul.f32 %v786, %v1523
        %v1532 = vrot.slane %v1524, 1
        %v1533 = vrot.slane %v1526, 1
        %v1534 = vsel %vm793, %v1532, %v1533
        %v1535 = vrot.slane %v1525, 1
        %v1536 = vrot.slane %v1527, 1
        %v1537 = vsel %vm793, %v1535, %v1536
        %1538 = vrot.lane.b32.xlu0 %v1534, 106
        %v1539 = vpop.permute.xlu0 %1538
        %1540 = vrot.lane.b32.xlu0 %v1537, 106
        %v1541 = vpop.permute.xlu0 %1540
        %v1542 = vsel %vm740, %v1539, %v1541
        %v1544 = vadd.f32 %v1452, %v1542
        %s1545 = sld [smem:[#allocation2 + $0xb3]]
        %v1546 = vstv %s1545
        %v1547 = vmul.f32 %v783, %v1546
        %v1548 = vmul.f32 %v784, %v1546
        %v1549 = vmul.f32 %v785, %v1546
        %v1550 = vmul.f32 %v786, %v1546
        %v1555 = vrot.slane %v1547, 1
        %v1556 = vrot.slane %v1549, 1
        %v1557 = vsel %vm793, %v1555, %v1556
        %v1558 = vrot.slane %v1548, 1
        %v1559 = vrot.slane %v1550, 1
        %v1560 = vsel %vm793, %v1558, %v1559
        %1561 = vrot.lane.b32.xlu0 %v1557, 106
        %v1562 = vpop.permute.xlu0 %1561
        %1563 = vrot.lane.b32.xlu0 %v1560, 106
        %v1564 = vpop.permute.xlu0 %1563
        %v1565 = vsel %vm740, %v1562, %v1564
        %v1567 = vadd.f32 %v1475, %v1565
        %v1568 = vld [vmem:[%s333] sm:$0xfc]
        %v1569 = vld [vmem:[%s333 + $0x8] sm:$0xfc]
        %v1570 = vld [vmem:[%s333 + $0x10] sm:$0x3]
        %v1571 = vld [vmem:[%s333 + $0x18] sm:$0x3]
        %s1572 = sld [smem:[#allocation2 + $0x12]]
        %v1573 = vstv %s1572
        %v1574 = vmul.f32 %v1568, %v1573
        %v1575 = vmul.f32 %v1570, %v1573
        %vm1578 = vcmask 1045504
        %v1579 = vrot.slane %v1574, 2
        %v1580 = vrot.slane %v1575, 2
        %v1581 = vsel %vm1578, %v1579, %v1580
        %v1583 = vadd.f32 %v1498, %v1581
        %s1584 = sld [smem:[#allocation2 + $0x48]]
        %v1585 = vstv %s1584
        %v1586 = vmul.f32 %v1568, %v1585
        %v1587 = vmul.f32 %v1570, %v1585
        %v1590 = vrot.slane %v1586, 2
        %v1591 = vrot.slane %v1587, 2
        %v1592 = vsel %vm1578, %v1590, %v1591
        %v1594 = vadd.f32 %v1521, %v1592
        %s1595 = sld [smem:[#allocation2 + $0x7e]]
        %v1596 = vstv %s1595
        %v1597 = vmul.f32 %v1568, %v1596
        %v1598 = vmul.f32 %v1570, %v1596
        %v1601 = vrot.slane %v1597, 2
        %v1602 = vrot.slane %v1598, 2
        %v1603 = vsel %vm1578, %v1601, %v1602
        %v1605 = vadd.f32 %v1544, %v1603
        %s1606 = sld [smem:[#allocation2 + $0xb4]]
        %v1607 = vstv %s1606
        %v1608 = vmul.f32 %v1568, %v1607
        %v1609 = vmul.f32 %v1570, %v1607
        %v1612 = vrot.slane %v1608, 2
        %v1613 = vrot.slane %v1609, 2
        %v1614 = vsel %vm1578, %v1612, %v1613
        %v1616 = vadd.f32 %v1567, %v1614
        %s1617 = sld [smem:[#allocation2 + $0x13]]
        %v1618 = vstv %s1617
        %v1619 = vmul.f32 %v1568, %v1618
        %v1620 = vmul.f32 %v1569, %v1618
        %v1621 = vmul.f32 %v1570, %v1618
        %v1622 = vmul.f32 %v1571, %v1618
        %v1627 = vrot.slane %v1619, 2
        %v1628 = vrot.slane %v1621, 2
        %v1629 = vsel %vm1578, %v1627, %v1628
        %v1630 = vrot.slane %v1620, 2
        %v1631 = vrot.slane %v1622, 2
        %v1632 = vsel %vm1578, %v1630, %v1631
        %1633 = vrot.lane.b32.xlu0 %v1629, 127
        %v1634 = vpop.permute.xlu0 %1633
        %1635 = vrot.lane.b32.xlu0 %v1632, 127
        %v1636 = vpop.permute.xlu0 %1635
        %v1637 = vsel %vm369, %v1634, %v1636
        %v1639 = vadd.f32 %v1583, %v1637
        %s1640 = sld [smem:[#allocation2 + $0x49]]
        %v1641 = vstv %s1640
        %v1642 = vmul.f32 %v1568, %v1641
        %v1643 = vmul.f32 %v1569, %v1641
        %v1644 = vmul.f32 %v1570, %v1641
        %v1645 = vmul.f32 %v1571, %v1641
        %v1650 = vrot.slane %v1642, 2
        %v1651 = vrot.slane %v1644, 2
        %v1652 = vsel %vm1578, %v1650, %v1651
        %v1653 = vrot.slane %v1643, 2
        %v1654 = vrot.slane %v1645, 2
        %v1655 = vsel %vm1578, %v1653, %v1654
        %1656 = vrot.lane.b32.xlu0 %v1652, 127
        %v1657 = vpop.permute.xlu0 %1656
        %1658 = vrot.lane.b32.xlu0 %v1655, 127
        %v1659 = vpop.permute.xlu0 %1658
        %v1660 = vsel %vm369, %v1657, %v1659
        %v1662 = vadd.f32 %v1594, %v1660
        %s1663 = sld [smem:[#allocation2 + $0x7f]]
        %v1664 = vstv %s1663
        %v1665 = vmul.f32 %v1568, %v1664
        %v1666 = vmul.f32 %v1569, %v1664
        %v1667 = vmul.f32 %v1570, %v1664
        %v1668 = vmul.f32 %v1571, %v1664
        %v1673 = vrot.slane %v1665, 2
        %v1674 = vrot.slane %v1667, 2
        %v1675 = vsel %vm1578, %v1673, %v1674
        %v1676 = vrot.slane %v1666, 2
        %v1677 = vrot.slane %v1668, 2
        %v1678 = vsel %vm1578, %v1676, %v1677
        %1679 = vrot.lane.b32.xlu0 %v1675, 127
        %v1680 = vpop.permute.xlu0 %1679
        %1681 = vrot.lane.b32.xlu0 %v1678, 127
        %v1682 = vpop.permute.xlu0 %1681
        %v1683 = vsel %vm369, %v1680, %v1682
        %v1685 = vadd.f32 %v1605, %v1683
        %s1686 = sld [smem:[#allocation2 + $0xb5]]
        %v1687 = vstv %s1686
        %v1688 = vmul.f32 %v1568, %v1687
        %v1689 = vmul.f32 %v1569, %v1687
        %v1690 = vmul.f32 %v1570, %v1687
        %v1691 = vmul.f32 %v1571, %v1687
        %v1696 = vrot.slane %v1688, 2
        %v1697 = vrot.slane %v1690, 2
        %v1698 = vsel %vm1578, %v1696, %v1697
        %v1699 = vrot.slane %v1689, 2
        %v1700 = vrot.slane %v1691, 2
        %v1701 = vsel %vm1578, %v1699, %v1700
        %1702 = vrot.lane.b32.xlu0 %v1698, 127
        %v1703 = vpop.permute.xlu0 %1702
        %1704 = vrot.lane.b32.xlu0 %v1701, 127
        %v1705 = vpop.permute.xlu0 %1704
        %v1706 = vsel %vm369, %v1703, %v1705
        %v1708 = vadd.f32 %v1616, %v1706
        %s1709 = sld [smem:[#allocation2 + $0x14]]
        %v1710 = vstv %s1709
        %v1711 = vmul.f32 %v1568, %v1710
        %v1712 = vmul.f32 %v1569, %v1710
        %v1713 = vmul.f32 %v1570, %v1710
        %v1714 = vmul.f32 %v1571, %v1710
        %v1719 = vrot.slane %v1711, 2
        %v1720 = vrot.slane %v1713, 2
        %v1721 = vsel %vm1578, %v1719, %v1720
        %v1722 = vrot.slane %v1712, 2
        %v1723 = vrot.slane %v1714, 2
        %v1724 = vsel %vm1578, %v1722, %v1723
        %1725 = vrot.lane.b32.xlu0 %v1721, 126
        %v1726 = vpop.permute.xlu0 %1725
        %1727 = vrot.lane.b32.xlu0 %v1724, 126
        %v1728 = vpop.permute.xlu0 %1727
        %v1729 = vsel %vm422, %v1726, %v1728
        %v1731 = vadd.f32 %v1639, %v1729
        %s1732 = sld [smem:[#allocation2 + $0x4a]]
        %v1733 = vstv %s1732
        %v1734 = vmul.f32 %v1568, %v1733
        %v1735 = vmul.f32 %v1569, %v1733
        %v1736 = vmul.f32 %v1570, %v1733
        %v1737 = vmul.f32 %v1571, %v1733
        %v1742 = vrot.slane %v1734, 2
        %v1743 = vrot.slane %v1736, 2
        %v1744 = vsel %vm1578, %v1742, %v1743
        %v1745 = vrot.slane %v1735, 2
        %v1746 = vrot.slane %v1737, 2
        %v1747 = vsel %vm1578, %v1745, %v1746
        %1748 = vrot.lane.b32.xlu0 %v1744, 126
        %v1749 = vpop.permute.xlu0 %1748
        %1750 = vrot.lane.b32.xlu0 %v1747, 126
        %v1751 = vpop.permute.xlu0 %1750
        %v1752 = vsel %vm422, %v1749, %v1751
        %v1754 = vadd.f32 %v1662, %v1752
        %s1755 = sld [smem:[#allocation2 + $0x80]]
        %v1756 = vstv %s1755
        %v1757 = vmul.f32 %v1568, %v1756
        %v1758 = vmul.f32 %v1569, %v1756
        %v1759 = vmul.f32 %v1570, %v1756
        %v1760 = vmul.f32 %v1571, %v1756
        %v1765 = vrot.slane %v1757, 2
        %v1766 = vrot.slane %v1759, 2
        %v1767 = vsel %vm1578, %v1765, %v1766
        %v1768 = vrot.slane %v1758, 2
        %v1769 = vrot.slane %v1760, 2
        %v1770 = vsel %vm1578, %v1768, %v1769
        %1771 = vrot.lane.b32.xlu0 %v1767, 126
        %v1772 = vpop.permute.xlu0 %1771
        %1773 = vrot.lane.b32.xlu0 %v1770, 126
        %v1774 = vpop.permute.xlu0 %1773
        %v1775 = vsel %vm422, %v1772, %v1774
        %v1777 = vadd.f32 %v1685, %v1775
        %s1778 = sld [smem:[#allocation2 + $0xb6]]
        %v1779 = vstv %s1778
        %v1780 = vmul.f32 %v1568, %v1779
        %v1781 = vmul.f32 %v1569, %v1779
        %v1782 = vmul.f32 %v1570, %v1779
        %v1783 = vmul.f32 %v1571, %v1779
        %v1788 = vrot.slane %v1780, 2
        %v1789 = vrot.slane %v1782, 2
        %v1790 = vsel %vm1578, %v1788, %v1789
        %v1791 = vrot.slane %v1781, 2
        %v1792 = vrot.slane %v1783, 2
        %v1793 = vsel %vm1578, %v1791, %v1792
        %1794 = vrot.lane.b32.xlu0 %v1790, 126
        %v1795 = vpop.permute.xlu0 %1794
        %1796 = vrot.lane.b32.xlu0 %v1793, 126
        %v1797 = vpop.permute.xlu0 %1796
        %v1798 = vsel %vm422, %v1795, %v1797
        %v1800 = vadd.f32 %v1708, %v1798
        %s1801 = sld [smem:[#allocation2 + $0x15]]
        %v1802 = vstv %s1801
        %v1803 = vmul.f32 %v1568, %v1802
        %v1804 = vmul.f32 %v1569, %v1802
        %v1805 = vmul.f32 %v1570, %v1802
        %v1806 = vmul.f32 %v1571, %v1802
        %v1811 = vrot.slane %v1803, 2
        %v1812 = vrot.slane %v1805, 2
        %v1813 = vsel %vm1578, %v1811, %v1812
        %v1814 = vrot.slane %v1804, 2
        %v1815 = vrot.slane %v1806, 2
        %v1816 = vsel %vm1578, %v1814, %v1815
        %1817 = vrot.lane.b32.xlu0 %v1813, 118
        %v1818 = vpop.permute.xlu0 %1817
        %1819 = vrot.lane.b32.xlu0 %v1816, 118
        %v1820 = vpop.permute.xlu0 %1819
        %v1821 = vsel %vm475, %v1818, %v1820
        %v1823 = vadd.f32 %v1731, %v1821
        %s1824 = sld [smem:[#allocation2 + $0x4b]]
        %v1825 = vstv %s1824
        %v1826 = vmul.f32 %v1568, %v1825
        %v1827 = vmul.f32 %v1569, %v1825
        %v1828 = vmul.f32 %v1570, %v1825
        %v1829 = vmul.f32 %v1571, %v1825
        %v1834 = vrot.slane %v1826, 2
        %v1835 = vrot.slane %v1828, 2
        %v1836 = vsel %vm1578, %v1834, %v1835
        %v1837 = vrot.slane %v1827, 2
        %v1838 = vrot.slane %v1829, 2
        %v1839 = vsel %vm1578, %v1837, %v1838
        %1840 = vrot.lane.b32.xlu0 %v1836, 118
        %v1841 = vpop.permute.xlu0 %1840
        %1842 = vrot.lane.b32.xlu0 %v1839, 118
        %v1843 = vpop.permute.xlu0 %1842
        %v1844 = vsel %vm475, %v1841, %v1843
        %v1846 = vadd.f32 %v1754, %v1844
        %s1847 = sld [smem:[#allocation2 + $0x81]]
        %v1848 = vstv %s1847
        %v1849 = vmul.f32 %v1568, %v1848
        %v1850 = vmul.f32 %v1569, %v1848
        %v1851 = vmul.f32 %v1570, %v1848
        %v1852 = vmul.f32 %v1571, %v1848
        %v1857 = vrot.slane %v1849, 2
        %v1858 = vrot.slane %v1851, 2
        %v1859 = vsel %vm1578, %v1857, %v1858
        %v1860 = vrot.slane %v1850, 2
        %v1861 = vrot.slane %v1852, 2
        %v1862 = vsel %vm1578, %v1860, %v1861
        %1863 = vrot.lane.b32.xlu0 %v1859, 118
        %v1864 = vpop.permute.xlu0 %1863
        %1865 = vrot.lane.b32.xlu0 %v1862, 118
        %v1866 = vpop.permute.xlu0 %1865
        %v1867 = vsel %vm475, %v1864, %v1866
        %v1869 = vadd.f32 %v1777, %v1867
        %s1870 = sld [smem:[#allocation2 + $0xb7]]
        %v1871 = vstv %s1870
        %v1872 = vmul.f32 %v1568, %v1871
        %v1873 = vmul.f32 %v1569, %v1871
        %v1874 = vmul.f32 %v1570, %v1871
        %v1875 = vmul.f32 %v1571, %v1871
        %v1880 = vrot.slane %v1872, 2
        %v1881 = vrot.slane %v1874, 2
        %v1882 = vsel %vm1578, %v1880, %v1881
        %v1883 = vrot.slane %v1873, 2
        %v1884 = vrot.slane %v1875, 2
        %v1885 = vsel %vm1578, %v1883, %v1884
        %1886 = vrot.lane.b32.xlu0 %v1882, 118
        %v1887 = vpop.permute.xlu0 %1886
        %1888 = vrot.lane.b32.xlu0 %v1885, 118
        %v1889 = vpop.permute.xlu0 %1888
        %v1890 = vsel %vm475, %v1887, %v1889
        %v1892 = vadd.f32 %v1800, %v1890
        %s1893 = sld [smem:[#allocation2 + $0x16]]
        %v1894 = vstv %s1893
        %v1895 = vmul.f32 %v1568, %v1894
        %v1896 = vmul.f32 %v1569, %v1894
        %v1897 = vmul.f32 %v1570, %v1894
        %v1898 = vmul.f32 %v1571, %v1894
        %v1903 = vrot.slane %v1895, 2
        %v1904 = vrot.slane %v1897, 2
        %v1905 = vsel %vm1578, %v1903, %v1904
        %v1906 = vrot.slane %v1896, 2
        %v1907 = vrot.slane %v1898, 2
        %v1908 = vsel %vm1578, %v1906, %v1907
        %1909 = vrot.lane.b32.xlu0 %v1905, 117
        %v1910 = vpop.permute.xlu0 %1909
        %1911 = vrot.lane.b32.xlu0 %v1908, 117
        %v1912 = vpop.permute.xlu0 %1911
        %v1913 = vsel %vm528, %v1910, %v1912
        %v1915 = vadd.f32 %v1823, %v1913
        %s1916 = sld [smem:[#allocation2 + $0x4c]]
        %v1917 = vstv %s1916
        %v1918 = vmul.f32 %v1568, %v1917
        %v1919 = vmul.f32 %v1569, %v1917
        %v1920 = vmul.f32 %v1570, %v1917
        %v1921 = vmul.f32 %v1571, %v1917
        %v1926 = vrot.slane %v1918, 2
        %v1927 = vrot.slane %v1920, 2
        %v1928 = vsel %vm1578, %v1926, %v1927
        %v1929 = vrot.slane %v1919, 2
        %v1930 = vrot.slane %v1921, 2
        %v1931 = vsel %vm1578, %v1929, %v1930
        %1932 = vrot.lane.b32.xlu0 %v1928, 117
        %v1933 = vpop.permute.xlu0 %1932
        %1934 = vrot.lane.b32.xlu0 %v1931, 117
        %v1935 = vpop.permute.xlu0 %1934
        %v1936 = vsel %vm528, %v1933, %v1935
        %v1938 = vadd.f32 %v1846, %v1936
        %s1939 = sld [smem:[#allocation2 + $0x82]]
        %v1940 = vstv %s1939
        %v1941 = vmul.f32 %v1568, %v1940
        %v1942 = vmul.f32 %v1569, %v1940
        %v1943 = vmul.f32 %v1570, %v1940
        %v1944 = vmul.f32 %v1571, %v1940
        %v1949 = vrot.slane %v1941, 2
        %v1950 = vrot.slane %v1943, 2
        %v1951 = vsel %vm1578, %v1949, %v1950
        %v1952 = vrot.slane %v1942, 2
        %v1953 = vrot.slane %v1944, 2
        %v1954 = vsel %vm1578, %v1952, %v1953
        %1955 = vrot.lane.b32.xlu0 %v1951, 117
        %v1956 = vpop.permute.xlu0 %1955
        %1957 = vrot.lane.b32.xlu0 %v1954, 117
        %v1958 = vpop.permute.xlu0 %1957
        %v1959 = vsel %vm528, %v1956, %v1958
        %v1961 = vadd.f32 %v1869, %v1959
        %s1962 = sld [smem:[#allocation2 + $0xb8]]
        %v1963 = vstv %s1962
        %v1964 = vmul.f32 %v1568, %v1963
        %v1965 = vmul.f32 %v1569, %v1963
        %v1966 = vmul.f32 %v1570, %v1963
        %v1967 = vmul.f32 %v1571, %v1963
        %v1972 = vrot.slane %v1964, 2
        %v1973 = vrot.slane %v1966, 2
        %v1974 = vsel %vm1578, %v1972, %v1973
        %v1975 = vrot.slane %v1965, 2
        %v1976 = vrot.slane %v1967, 2
        %v1977 = vsel %vm1578, %v1975, %v1976
        %1978 = vrot.lane.b32.xlu0 %v1974, 117
        %v1979 = vpop.permute.xlu0 %1978
        %1980 = vrot.lane.b32.xlu0 %v1977, 117
        %v1981 = vpop.permute.xlu0 %1980
        %v1982 = vsel %vm528, %v1979, %v1981
        %v1984 = vadd.f32 %v1892, %v1982
        %s1985 = sld [smem:[#allocation2 + $0x17]]
        %v1986 = vstv %s1985
        %v1987 = vmul.f32 %v1568, %v1986
        %v1988 = vmul.f32 %v1569, %v1986
        %v1989 = vmul.f32 %v1570, %v1986
        %v1990 = vmul.f32 %v1571, %v1986
        %v1995 = vrot.slane %v1987, 2
        %v1996 = vrot.slane %v1989, 2
        %v1997 = vsel %vm1578, %v1995, %v1996
        %v1998 = vrot.slane %v1988, 2
        %v1999 = vrot.slane %v1990, 2
        %v2000 = vsel %vm1578, %v1998, %v1999
        %2001 = vrot.lane.b32.xlu0 %v1997, 116
        %v2002 = vpop.permute.xlu0 %2001
        %2003 = vrot.lane.b32.xlu0 %v2000, 116
        %v2004 = vpop.permute.xlu0 %2003
        %v2005 = vsel %vm581, %v2002, %v2004
        %v2007 = vadd.f32 %v1915, %v2005
        %s2008 = sld [smem:[#allocation2 + $0x4d]]
        %v2009 = vstv %s2008
        %v2010 = vmul.f32 %v1568, %v2009
        %v2011 = vmul.f32 %v1569, %v2009
        %v2012 = vmul.f32 %v1570, %v2009
        %v2013 = vmul.f32 %v1571, %v2009
        %v2018 = vrot.slane %v2010, 2
        %v2019 = vrot.slane %v2012, 2
        %v2020 = vsel %vm1578, %v2018, %v2019
        %v2021 = vrot.slane %v2011, 2
        %v2022 = vrot.slane %v2013, 2
        %v2023 = vsel %vm1578, %v2021, %v2022
        %2024 = vrot.lane.b32.xlu0 %v2020, 116
        %v2025 = vpop.permute.xlu0 %2024
        %2026 = vrot.lane.b32.xlu0 %v2023, 116
        %v2027 = vpop.permute.xlu0 %2026
        %v2028 = vsel %vm581, %v2025, %v2027
        %v2030 = vadd.f32 %v1938, %v2028
        %s2031 = sld [smem:[#allocation2 + $0x83]]
        %v2032 = vstv %s2031
        %v2033 = vmul.f32 %v1568, %v2032
        %v2034 = vmul.f32 %v1569, %v2032
        %v2035 = vmul.f32 %v1570, %v2032
        %v2036 = vmul.f32 %v1571, %v2032
        %v2041 = vrot.slane %v2033, 2
        %v2042 = vrot.slane %v2035, 2
        %v2043 = vsel %vm1578, %v2041, %v2042
        %v2044 = vrot.slane %v2034, 2
        %v2045 = vrot.slane %v2036, 2
        %v2046 = vsel %vm1578, %v2044, %v2045
        %2047 = vrot.lane.b32.xlu0 %v2043, 116
        %v2048 = vpop.permute.xlu0 %2047
        %2049 = vrot.lane.b32.xlu0 %v2046, 116
        %v2050 = vpop.permute.xlu0 %2049
        %v2051 = vsel %vm581, %v2048, %v2050
        %v2053 = vadd.f32 %v1961, %v2051
        %s2054 = sld [smem:[#allocation2 + $0xb9]]
        %v2055 = vstv %s2054
        %v2056 = vmul.f32 %v1568, %v2055
        %v2057 = vmul.f32 %v1569, %v2055
        %v2058 = vmul.f32 %v1570, %v2055
        %v2059 = vmul.f32 %v1571, %v2055
        %v2064 = vrot.slane %v2056, 2
        %v2065 = vrot.slane %v2058, 2
        %v2066 = vsel %vm1578, %v2064, %v2065
        %v2067 = vrot.slane %v2057, 2
        %v2068 = vrot.slane %v2059, 2
        %v2069 = vsel %vm1578, %v2067, %v2068
        %2070 = vrot.lane.b32.xlu0 %v2066, 116
        %v2071 = vpop.permute.xlu0 %2070
        %2072 = vrot.lane.b32.xlu0 %v2069, 116
        %v2073 = vpop.permute.xlu0 %2072
        %v2074 = vsel %vm581, %v2071, %v2073
        %v2076 = vadd.f32 %v1984, %v2074
        %s2077 = sld [smem:[#allocation2 + $0x18]]
        %v2078 = vstv %s2077
        %v2079 = vmul.f32 %v1568, %v2078
        %v2080 = vmul.f32 %v1569, %v2078
        %v2081 = vmul.f32 %v1570, %v2078
        %v2082 = vmul.f32 %v1571, %v2078
        %v2087 = vrot.slane %v2079, 2
        %v2088 = vrot.slane %v2081, 2
        %v2089 = vsel %vm1578, %v2087, %v2088
        %v2090 = vrot.slane %v2080, 2
        %v2091 = vrot.slane %v2082, 2
        %v2092 = vsel %vm1578, %v2090, %v2091
        %2093 = vrot.lane.b32.xlu0 %v2089, 108
        %v2094 = vpop.permute.xlu0 %2093
        %2095 = vrot.lane.b32.xlu0 %v2092, 108
        %v2096 = vpop.permute.xlu0 %2095
        %v2097 = vsel %vm634, %v2094, %v2096
        %v2099 = vadd.f32 %v2007, %v2097
        %s2100 = sld [smem:[#allocation2 + $0x4e]]
        %v2101 = vstv %s2100
        %v2102 = vmul.f32 %v1568, %v2101
        %v2103 = vmul.f32 %v1569, %v2101
        %v2104 = vmul.f32 %v1570, %v2101
        %v2105 = vmul.f32 %v1571, %v2101
        %v2110 = vrot.slane %v2102, 2
        %v2111 = vrot.slane %v2104, 2
        %v2112 = vsel %vm1578, %v2110, %v2111
        %v2113 = vrot.slane %v2103, 2
        %v2114 = vrot.slane %v2105, 2
        %v2115 = vsel %vm1578, %v2113, %v2114
        %2116 = vrot.lane.b32.xlu0 %v2112, 108
        %v2117 = vpop.permute.xlu0 %2116
        %2118 = vrot.lane.b32.xlu0 %v2115, 108
        %v2119 = vpop.permute.xlu0 %2118
        %v2120 = vsel %vm634, %v2117, %v2119
        %v2122 = vadd.f32 %v2030, %v2120
        %s2123 = sld [smem:[#allocation2 + $0x84]]
        %v2124 = vstv %s2123
        %v2125 = vmul.f32 %v1568, %v2124
        %v2126 = vmul.f32 %v1569, %v2124
        %v2127 = vmul.f32 %v1570, %v2124
        %v2128 = vmul.f32 %v1571, %v2124
        %v2133 = vrot.slane %v2125, 2
        %v2134 = vrot.slane %v2127, 2
        %v2135 = vsel %vm1578, %v2133, %v2134
        %v2136 = vrot.slane %v2126, 2
        %v2137 = vrot.slane %v2128, 2
        %v2138 = vsel %vm1578, %v2136, %v2137
        %2139 = vrot.lane.b32.xlu0 %v2135, 108
        %v2140 = vpop.permute.xlu0 %2139
        %2141 = vrot.lane.b32.xlu0 %v2138, 108
        %v2142 = vpop.permute.xlu0 %2141
        %v2143 = vsel %vm634, %v2140, %v2142
        %v2145 = vadd.f32 %v2053, %v2143
        %s2146 = sld [smem:[#allocation2 + $0xba]]
        %v2147 = vstv %s2146
        %v2148 = vmul.f32 %v1568, %v2147
        %v2149 = vmul.f32 %v1569, %v2147
        %v2150 = vmul.f32 %v1570, %v2147
        %v2151 = vmul.f32 %v1571, %v2147
        %v2156 = vrot.slane %v2148, 2
        %v2157 = vrot.slane %v2150, 2
        %v2158 = vsel %vm1578, %v2156, %v2157
        %v2159 = vrot.slane %v2149, 2
        %v2160 = vrot.slane %v2151, 2
        %v2161 = vsel %vm1578, %v2159, %v2160
        %2162 = vrot.lane.b32.xlu0 %v2158, 108
        %v2163 = vpop.permute.xlu0 %2162
        %2164 = vrot.lane.b32.xlu0 %v2161, 108
        %v2165 = vpop.permute.xlu0 %2164
        %v2166 = vsel %vm634, %v2163, %v2165
        %v2168 = vadd.f32 %v2076, %v2166
        %s2169 = sld [smem:[#allocation2 + $0x19]]
        %v2170 = vstv %s2169
        %v2171 = vmul.f32 %v1568, %v2170
        %v2172 = vmul.f32 %v1569, %v2170
        %v2173 = vmul.f32 %v1570, %v2170
        %v2174 = vmul.f32 %v1571, %v2170
        %v2179 = vrot.slane %v2171, 2
        %v2180 = vrot.slane %v2173, 2
        %v2181 = vsel %vm1578, %v2179, %v2180
        %v2182 = vrot.slane %v2172, 2
        %v2183 = vrot.slane %v2174, 2
        %v2184 = vsel %vm1578, %v2182, %v2183
        %2185 = vrot.lane.b32.xlu0 %v2181, 107
        %v2186 = vpop.permute.xlu0 %2185
        %2187 = vrot.lane.b32.xlu0 %v2184, 107
        %v2188 = vpop.permute.xlu0 %2187
        %v2189 = vsel %vm687, %v2186, %v2188
        %v2191 = vadd.f32 %v2099, %v2189
        %s2192 = sld [smem:[#allocation2 + $0x4f]]
        %v2193 = vstv %s2192
        %v2194 = vmul.f32 %v1568, %v2193
        %v2195 = vmul.f32 %v1569, %v2193
        %v2196 = vmul.f32 %v1570, %v2193
        %v2197 = vmul.f32 %v1571, %v2193
        %v2202 = vrot.slane %v2194, 2
        %v2203 = vrot.slane %v2196, 2
        %v2204 = vsel %vm1578, %v2202, %v2203
        %v2205 = vrot.slane %v2195, 2
        %v2206 = vrot.slane %v2197, 2
        %v2207 = vsel %vm1578, %v2205, %v2206
        %2208 = vrot.lane.b32.xlu0 %v2204, 107
        %v2209 = vpop.permute.xlu0 %2208
        %2210 = vrot.lane.b32.xlu0 %v2207, 107
        %v2211 = vpop.permute.xlu0 %2210
        %v2212 = vsel %vm687, %v2209, %v2211
        %v2214 = vadd.f32 %v2122, %v2212
        %s2215 = sld [smem:[#allocation2 + $0x85]]
        %v2216 = vstv %s2215
        %v2217 = vmul.f32 %v1568, %v2216
        %v2218 = vmul.f32 %v1569, %v2216
        %v2219 = vmul.f32 %v1570, %v2216
        %v2220 = vmul.f32 %v1571, %v2216
        %v2225 = vrot.slane %v2217, 2
        %v2226 = vrot.slane %v2219, 2
        %v2227 = vsel %vm1578, %v2225, %v2226
        %v2228 = vrot.slane %v2218, 2
        %v2229 = vrot.slane %v2220, 2
        %v2230 = vsel %vm1578, %v2228, %v2229
        %2231 = vrot.lane.b32.xlu0 %v2227, 107
        %v2232 = vpop.permute.xlu0 %2231
        %2233 = vrot.lane.b32.xlu0 %v2230, 107
        %v2234 = vpop.permute.xlu0 %2233
        %v2235 = vsel %vm687, %v2232, %v2234
        %v2237 = vadd.f32 %v2145, %v2235
        %s2238 = sld [smem:[#allocation2 + $0xbb]]
        %v2239 = vstv %s2238
        %v2240 = vmul.f32 %v1568, %v2239
        %v2241 = vmul.f32 %v1569, %v2239
        %v2242 = vmul.f32 %v1570, %v2239
        %v2243 = vmul.f32 %v1571, %v2239
        %v2248 = vrot.slane %v2240, 2
        %v2249 = vrot.slane %v2242, 2
        %v2250 = vsel %vm1578, %v2248, %v2249
        %v2251 = vrot.slane %v2241, 2
        %v2252 = vrot.slane %v2243, 2
        %v2253 = vsel %vm1578, %v2251, %v2252
        %2254 = vrot.lane.b32.xlu0 %v2250, 107
        %v2255 = vpop.permute.xlu0 %2254
        %2256 = vrot.lane.b32.xlu0 %v2253, 107
        %v2257 = vpop.permute.xlu0 %2256
        %v2258 = vsel %vm687, %v2255, %v2257
        %v2260 = vadd.f32 %v2168, %v2258
        %s2261 = sld [smem:[#allocation2 + $0x1a]]
        %v2262 = vstv %s2261
        %v2263 = vmul.f32 %v1568, %v2262
        %v2264 = vmul.f32 %v1569, %v2262
        %v2265 = vmul.f32 %v1570, %v2262
        %v2266 = vmul.f32 %v1571, %v2262
        %v2271 = vrot.slane %v2263, 2
        %v2272 = vrot.slane %v2265, 2
        %v2273 = vsel %vm1578, %v2271, %v2272
        %v2274 = vrot.slane %v2264, 2
        %v2275 = vrot.slane %v2266, 2
        %v2276 = vsel %vm1578, %v2274, %v2275
        %2277 = vrot.lane.b32.xlu0 %v2273, 106
        %v2278 = vpop.permute.xlu0 %2277
        %2279 = vrot.lane.b32.xlu0 %v2276, 106
        %v2280 = vpop.permute.xlu0 %2279
        %v2281 = vsel %vm740, %v2278, %v2280
        %v2283 = vadd.f32 %v2191, %v2281
        %s2284 = sld [smem:[#allocation2 + $0x50]]
        %v2285 = vstv %s2284
        %v2286 = vmul.f32 %v1568, %v2285
        %v2287 = vmul.f32 %v1569, %v2285
        %v2288 = vmul.f32 %v1570, %v2285
        %v2289 = vmul.f32 %v1571, %v2285
        %v2294 = vrot.slane %v2286, 2
        %v2295 = vrot.slane %v2288, 2
        %v2296 = vsel %vm1578, %v2294, %v2295
        %v2297 = vrot.slane %v2287, 2
        %v2298 = vrot.slane %v2289, 2
        %v2299 = vsel %vm1578, %v2297, %v2298
        %2300 = vrot.lane.b32.xlu0 %v2296, 106
        %v2301 = vpop.permute.xlu0 %2300
        %2302 = vrot.lane.b32.xlu0 %v2299, 106
        %v2303 = vpop.permute.xlu0 %2302
        %v2304 = vsel %vm740, %v2301, %v2303
        %v2306 = vadd.f32 %v2214, %v2304
        %s2307 = sld [smem:[#allocation2 + $0x86]]
        %v2308 = vstv %s2307
        %v2309 = vmul.f32 %v1568, %v2308
        %v2310 = vmul.f32 %v1569, %v2308
        %v2311 = vmul.f32 %v1570, %v2308
        %v2312 = vmul.f32 %v1571, %v2308
        %v2317 = vrot.slane %v2309, 2
        %v2318 = vrot.slane %v2311, 2
        %v2319 = vsel %vm1578, %v2317, %v2318
        %v2320 = vrot.slane %v2310, 2
        %v2321 = vrot.slane %v2312, 2
        %v2322 = vsel %vm1578, %v2320, %v2321
        %2323 = vrot.lane.b32.xlu0 %v2319, 106
        %v2324 = vpop.permute.xlu0 %2323
        %2325 = vrot.lane.b32.xlu0 %v2322, 106
        %v2326 = vpop.permute.xlu0 %2325
        %v2327 = vsel %vm740, %v2324, %v2326
        %v2329 = vadd.f32 %v2237, %v2327
        %s2330 = sld [smem:[#allocation2 + $0xbc]]
        %v2331 = vstv %s2330
        %v2332 = vmul.f32 %v1568, %v2331
        %v2333 = vmul.f32 %v1569, %v2331
        %v2334 = vmul.f32 %v1570, %v2331
        %v2335 = vmul.f32 %v1571, %v2331
        %v2340 = vrot.slane %v2332, 2
        %v2341 = vrot.slane %v2334, 2
        %v2342 = vsel %vm1578, %v2340, %v2341
        %v2343 = vrot.slane %v2333, 2
        %v2344 = vrot.slane %v2335, 2
        %v2345 = vsel %vm1578, %v2343, %v2344
        %2346 = vrot.lane.b32.xlu0 %v2342, 106
        %v2347 = vpop.permute.xlu0 %2346
        %2348 = vrot.lane.b32.xlu0 %v2345, 106
        %v2349 = vpop.permute.xlu0 %2348
        %v2350 = vsel %vm740, %v2347, %v2349
        %v2352 = vadd.f32 %v2260, %v2350
        %v2353 = vld [vmem:[%s333 + $0x10] sm:$0xfc]
        %v2354 = vld [vmem:[%s333 + $0x18] sm:$0xfc]
        %v2355 = vld [vmem:[%s333 + $0x20] sm:$0x3]
        %v2356 = vld [vmem:[%s333 + $0x28] sm:$0x3]
        %s2357 = sld [smem:[#allocation2 + $0x1b]]
        %v2358 = vstv %s2357
        %v2359 = vmul.f32 %v2353, %v2358
        %v2360 = vmul.f32 %v2355, %v2358
        %v2363 = vrot.slane %v2359, 2
        %v2364 = vrot.slane %v2360, 2
        %v2365 = vsel %vm1578, %v2363, %v2364
        %v2367 = vadd.f32 %v2283, %v2365
        %s2368 = sld [smem:[#allocation2 + $0x51]]
        %v2369 = vstv %s2368
        %v2370 = vmul.f32 %v2353, %v2369
        %v2371 = vmul.f32 %v2355, %v2369
        %v2374 = vrot.slane %v2370, 2
        %v2375 = vrot.slane %v2371, 2
        %v2376 = vsel %vm1578, %v2374, %v2375
        %v2378 = vadd.f32 %v2306, %v2376
        %s2379 = sld [smem:[#allocation2 + $0x87]]
        %v2380 = vstv %s2379
        %v2381 = vmul.f32 %v2353, %v2380
        %v2382 = vmul.f32 %v2355, %v2380
        %v2385 = vrot.slane %v2381, 2
        %v2386 = vrot.slane %v2382, 2
        %v2387 = vsel %vm1578, %v2385, %v2386
        %v2389 = vadd.f32 %v2329, %v2387
        %s2390 = sld [smem:[#allocation2 + $0xbd]]
        %v2391 = vstv %s2390
        %v2392 = vmul.f32 %v2353, %v2391
        %v2393 = vmul.f32 %v2355, %v2391
        %v2396 = vrot.slane %v2392, 2
        %v2397 = vrot.slane %v2393, 2
        %v2398 = vsel %vm1578, %v2396, %v2397
        %v2400 = vadd.f32 %v2352, %v2398
        %s2401 = sld [smem:[#allocation2 + $0x1c]]
        %v2402 = vstv %s2401
        %v2403 = vmul.f32 %v2353, %v2402
        %v2404 = vmul.f32 %v2354, %v2402
        %v2405 = vmul.f32 %v2355, %v2402
        %v2406 = vmul.f32 %v2356, %v2402
        %v2411 = vrot.slane %v2403, 2
        %v2412 = vrot.slane %v2405, 2
        %v2413 = vsel %vm1578, %v2411, %v2412
        %v2414 = vrot.slane %v2404, 2
        %v2415 = vrot.slane %v2406, 2
        %v2416 = vsel %vm1578, %v2414, %v2415
        %2417 = vrot.lane.b32.xlu0 %v2413, 127
        %v2418 = vpop.permute.xlu0 %2417
        %2419 = vrot.lane.b32.xlu0 %v2416, 127
        %v2420 = vpop.permute.xlu0 %2419
        %v2421 = vsel %vm369, %v2418, %v2420
        %v2423 = vadd.f32 %v2367, %v2421
        %s2424 = sld [smem:[#allocation2 + $0x52]]
        %v2425 = vstv %s2424
        %v2426 = vmul.f32 %v2353, %v2425
        %v2427 = vmul.f32 %v2354, %v2425
        %v2428 = vmul.f32 %v2355, %v2425
        %v2429 = vmul.f32 %v2356, %v2425
        %v2434 = vrot.slane %v2426, 2
        %v2435 = vrot.slane %v2428, 2
        %v2436 = vsel %vm1578, %v2434, %v2435
        %v2437 = vrot.slane %v2427, 2
        %v2438 = vrot.slane %v2429, 2
        %v2439 = vsel %vm1578, %v2437, %v2438
        %2440 = vrot.lane.b32.xlu0 %v2436, 127
        %v2441 = vpop.permute.xlu0 %2440
        %2442 = vrot.lane.b32.xlu0 %v2439, 127
        %v2443 = vpop.permute.xlu0 %2442
        %v2444 = vsel %vm369, %v2441, %v2443
        %v2446 = vadd.f32 %v2378, %v2444
        %s2447 = sld [smem:[#allocation2 + $0x88]]
        %v2448 = vstv %s2447
        %v2449 = vmul.f32 %v2353, %v2448
        %v2450 = vmul.f32 %v2354, %v2448
        %v2451 = vmul.f32 %v2355, %v2448
        %v2452 = vmul.f32 %v2356, %v2448
        %v2457 = vrot.slane %v2449, 2
        %v2458 = vrot.slane %v2451, 2
        %v2459 = vsel %vm1578, %v2457, %v2458
        %v2460 = vrot.slane %v2450, 2
        %v2461 = vrot.slane %v2452, 2
        %v2462 = vsel %vm1578, %v2460, %v2461
        %2463 = vrot.lane.b32.xlu0 %v2459, 127
        %v2464 = vpop.permute.xlu0 %2463
        %2465 = vrot.lane.b32.xlu0 %v2462, 127
        %v2466 = vpop.permute.xlu0 %2465
        %v2467 = vsel %vm369, %v2464, %v2466
        %v2469 = vadd.f32 %v2389, %v2467
        %s2470 = sld [smem:[#allocation2 + $0xbe]]
        %v2471 = vstv %s2470
        %v2472 = vmul.f32 %v2353, %v2471
        %v2473 = vmul.f32 %v2354, %v2471
        %v2474 = vmul.f32 %v2355, %v2471
        %v2475 = vmul.f32 %v2356, %v2471
        %v2480 = vrot.slane %v2472, 2
        %v2481 = vrot.slane %v2474, 2
        %v2482 = vsel %vm1578, %v2480, %v2481
        %v2483 = vrot.slane %v2473, 2
        %v2484 = vrot.slane %v2475, 2
        %v2485 = vsel %vm1578, %v2483, %v2484
        %2486 = vrot.lane.b32.xlu0 %v2482, 127
        %v2487 = vpop.permute.xlu0 %2486
        %2488 = vrot.lane.b32.xlu0 %v2485, 127
        %v2489 = vpop.permute.xlu0 %2488
        %v2490 = vsel %vm369, %v2487, %v2489
        %v2492 = vadd.f32 %v2400, %v2490
        %s2493 = sld [smem:[#allocation2 + $0x1d]]
        %v2494 = vstv %s2493
        %v2495 = vmul.f32 %v2353, %v2494
        %v2496 = vmul.f32 %v2354, %v2494
        %v2497 = vmul.f32 %v2355, %v2494
        %v2498 = vmul.f32 %v2356, %v2494
        %v2503 = vrot.slane %v2495, 2
        %v2504 = vrot.slane %v2497, 2
        %v2505 = vsel %vm1578, %v2503, %v2504
        %v2506 = vrot.slane %v2496, 2
        %v2507 = vrot.slane %v2498, 2
        %v2508 = vsel %vm1578, %v2506, %v2507
        %2509 = vrot.lane.b32.xlu0 %v2505, 126
        %v2510 = vpop.permute.xlu0 %2509
        %2511 = vrot.lane.b32.xlu0 %v2508, 126
        %v2512 = vpop.permute.xlu0 %2511
        %v2513 = vsel %vm422, %v2510, %v2512
        %v2515 = vadd.f32 %v2423, %v2513
        %s2516 = sld [smem:[#allocation2 + $0x53]]
        %v2517 = vstv %s2516
        %v2518 = vmul.f32 %v2353, %v2517
        %v2519 = vmul.f32 %v2354, %v2517
        %v2520 = vmul.f32 %v2355, %v2517
        %v2521 = vmul.f32 %v2356, %v2517
        %v2526 = vrot.slane %v2518, 2
        %v2527 = vrot.slane %v2520, 2
        %v2528 = vsel %vm1578, %v2526, %v2527
        %v2529 = vrot.slane %v2519, 2
        %v2530 = vrot.slane %v2521, 2
        %v2531 = vsel %vm1578, %v2529, %v2530
        %2532 = vrot.lane.b32.xlu0 %v2528, 126
        %v2533 = vpop.permute.xlu0 %2532
        %2534 = vrot.lane.b32.xlu0 %v2531, 126
        %v2535 = vpop.permute.xlu0 %2534
        %v2536 = vsel %vm422, %v2533, %v2535
        %v2538 = vadd.f32 %v2446, %v2536
        %s2539 = sld [smem:[#allocation2 + $0x89]]
        %v2540 = vstv %s2539
        %v2541 = vmul.f32 %v2353, %v2540
        %v2542 = vmul.f32 %v2354, %v2540
        %v2543 = vmul.f32 %v2355, %v2540
        %v2544 = vmul.f32 %v2356, %v2540
        %v2549 = vrot.slane %v2541, 2
        %v2550 = vrot.slane %v2543, 2
        %v2551 = vsel %vm1578, %v2549, %v2550
        %v2552 = vrot.slane %v2542, 2
        %v2553 = vrot.slane %v2544, 2
        %v2554 = vsel %vm1578, %v2552, %v2553
        %2555 = vrot.lane.b32.xlu0 %v2551, 126
        %v2556 = vpop.permute.xlu0 %2555
        %2557 = vrot.lane.b32.xlu0 %v2554, 126
        %v2558 = vpop.permute.xlu0 %2557
        %v2559 = vsel %vm422, %v2556, %v2558
        %v2561 = vadd.f32 %v2469, %v2559
        %s2562 = sld [smem:[#allocation2 + $0xbf]]
        %v2563 = vstv %s2562
        %v2564 = vmul.f32 %v2353, %v2563
        %v2565 = vmul.f32 %v2354, %v2563
        %v2566 = vmul.f32 %v2355, %v2563
        %v2567 = vmul.f32 %v2356, %v2563
        %v2572 = vrot.slane %v2564, 2
        %v2573 = vrot.slane %v2566, 2
        %v2574 = vsel %vm1578, %v2572, %v2573
        %v2575 = vrot.slane %v2565, 2
        %v2576 = vrot.slane %v2567, 2
        %v2577 = vsel %vm1578, %v2575, %v2576
        %2578 = vrot.lane.b32.xlu0 %v2574, 126
        %v2579 = vpop.permute.xlu0 %2578
        %2580 = vrot.lane.b32.xlu0 %v2577, 126
        %v2581 = vpop.permute.xlu0 %2580
        %v2582 = vsel %vm422, %v2579, %v2581
        %v2584 = vadd.f32 %v2492, %v2582
        %s2585 = sld [smem:[#allocation2 + $0x1e]]
        %v2586 = vstv %s2585
        %v2587 = vmul.f32 %v2353, %v2586
        %v2588 = vmul.f32 %v2354, %v2586
        %v2589 = vmul.f32 %v2355, %v2586
        %v2590 = vmul.f32 %v2356, %v2586
        %v2595 = vrot.slane %v2587, 2
        %v2596 = vrot.slane %v2589, 2
        %v2597 = vsel %vm1578, %v2595, %v2596
        %v2598 = vrot.slane %v2588, 2
        %v2599 = vrot.slane %v2590, 2
        %v2600 = vsel %vm1578, %v2598, %v2599
        %2601 = vrot.lane.b32.xlu0 %v2597, 118
        %v2602 = vpop.permute.xlu0 %2601
        %2603 = vrot.lane.b32.xlu0 %v2600, 118
        %v2604 = vpop.permute.xlu0 %2603
        %v2605 = vsel %vm475, %v2602, %v2604
        %v2607 = vadd.f32 %v2515, %v2605
        %s2608 = sld [smem:[#allocation2 + $0x54]]
        %v2609 = vstv %s2608
        %v2610 = vmul.f32 %v2353, %v2609
        %v2611 = vmul.f32 %v2354, %v2609
        %v2612 = vmul.f32 %v2355, %v2609
        %v2613 = vmul.f32 %v2356, %v2609
        %v2618 = vrot.slane %v2610, 2
        %v2619 = vrot.slane %v2612, 2
        %v2620 = vsel %vm1578, %v2618, %v2619
        %v2621 = vrot.slane %v2611, 2
        %v2622 = vrot.slane %v2613, 2
        %v2623 = vsel %vm1578, %v2621, %v2622
        %2624 = vrot.lane.b32.xlu0 %v2620, 118
        %v2625 = vpop.permute.xlu0 %2624
        %2626 = vrot.lane.b32.xlu0 %v2623, 118
        %v2627 = vpop.permute.xlu0 %2626
        %v2628 = vsel %vm475, %v2625, %v2627
        %v2630 = vadd.f32 %v2538, %v2628
        %s2631 = sld [smem:[#allocation2 + $0x8a]]
        %v2632 = vstv %s2631
        %v2633 = vmul.f32 %v2353, %v2632
        %v2634 = vmul.f32 %v2354, %v2632
        %v2635 = vmul.f32 %v2355, %v2632
        %v2636 = vmul.f32 %v2356, %v2632
        %v2641 = vrot.slane %v2633, 2
        %v2642 = vrot.slane %v2635, 2
        %v2643 = vsel %vm1578, %v2641, %v2642
        %v2644 = vrot.slane %v2634, 2
        %v2645 = vrot.slane %v2636, 2
        %v2646 = vsel %vm1578, %v2644, %v2645
        %2647 = vrot.lane.b32.xlu0 %v2643, 118
        %v2648 = vpop.permute.xlu0 %2647
        %2649 = vrot.lane.b32.xlu0 %v2646, 118
        %v2650 = vpop.permute.xlu0 %2649
        %v2651 = vsel %vm475, %v2648, %v2650
        %v2653 = vadd.f32 %v2561, %v2651
        %s2654 = sld [smem:[#allocation2 + $0xc0]]
        %v2655 = vstv %s2654
        %v2656 = vmul.f32 %v2353, %v2655
        %v2657 = vmul.f32 %v2354, %v2655
        %v2658 = vmul.f32 %v2355, %v2655
        %v2659 = vmul.f32 %v2356, %v2655
        %v2664 = vrot.slane %v2656, 2
        %v2665 = vrot.slane %v2658, 2
        %v2666 = vsel %vm1578, %v2664, %v2665
        %v2667 = vrot.slane %v2657, 2
        %v2668 = vrot.slane %v2659, 2
        %v2669 = vsel %vm1578, %v2667, %v2668
        %2670 = vrot.lane.b32.xlu0 %v2666, 118
        %v2671 = vpop.permute.xlu0 %2670
        %2672 = vrot.lane.b32.xlu0 %v2669, 118
        %v2673 = vpop.permute.xlu0 %2672
        %v2674 = vsel %vm475, %v2671, %v2673
        %v2676 = vadd.f32 %v2584, %v2674
        %s2677 = sld [smem:[#allocation2 + $0x1f]]
        %v2678 = vstv %s2677
        %v2679 = vmul.f32 %v2353, %v2678
        %v2680 = vmul.f32 %v2354, %v2678
        %v2681 = vmul.f32 %v2355, %v2678
        %v2682 = vmul.f32 %v2356, %v2678
        %v2687 = vrot.slane %v2679, 2
        %v2688 = vrot.slane %v2681, 2
        %v2689 = vsel %vm1578, %v2687, %v2688
        %v2690 = vrot.slane %v2680, 2
        %v2691 = vrot.slane %v2682, 2
        %v2692 = vsel %vm1578, %v2690, %v2691
        %2693 = vrot.lane.b32.xlu0 %v2689, 117
        %v2694 = vpop.permute.xlu0 %2693
        %2695 = vrot.lane.b32.xlu0 %v2692, 117
        %v2696 = vpop.permute.xlu0 %2695
        %v2697 = vsel %vm528, %v2694, %v2696
        %v2699 = vadd.f32 %v2607, %v2697
        %s2700 = sld [smem:[#allocation2 + $0x55]]
        %v2701 = vstv %s2700
        %v2702 = vmul.f32 %v2353, %v2701
        %v2703 = vmul.f32 %v2354, %v2701
        %v2704 = vmul.f32 %v2355, %v2701
        %v2705 = vmul.f32 %v2356, %v2701
        %v2710 = vrot.slane %v2702, 2
        %v2711 = vrot.slane %v2704, 2
        %v2712 = vsel %vm1578, %v2710, %v2711
        %v2713 = vrot.slane %v2703, 2
        %v2714 = vrot.slane %v2705, 2
        %v2715 = vsel %vm1578, %v2713, %v2714
        %2716 = vrot.lane.b32.xlu0 %v2712, 117
        %v2717 = vpop.permute.xlu0 %2716
        %2718 = vrot.lane.b32.xlu0 %v2715, 117
        %v2719 = vpop.permute.xlu0 %2718
        %v2720 = vsel %vm528, %v2717, %v2719
        %v2722 = vadd.f32 %v2630, %v2720
        %s2723 = sld [smem:[#allocation2 + $0x8b]]
        %v2724 = vstv %s2723
        %v2725 = vmul.f32 %v2353, %v2724
        %v2726 = vmul.f32 %v2354, %v2724
        %v2727 = vmul.f32 %v2355, %v2724
        %v2728 = vmul.f32 %v2356, %v2724
        %v2733 = vrot.slane %v2725, 2
        %v2734 = vrot.slane %v2727, 2
        %v2735 = vsel %vm1578, %v2733, %v2734
        %v2736 = vrot.slane %v2726, 2
        %v2737 = vrot.slane %v2728, 2
        %v2738 = vsel %vm1578, %v2736, %v2737
        %2739 = vrot.lane.b32.xlu0 %v2735, 117
        %v2740 = vpop.permute.xlu0 %2739
        %2741 = vrot.lane.b32.xlu0 %v2738, 117
        %v2742 = vpop.permute.xlu0 %2741
        %v2743 = vsel %vm528, %v2740, %v2742
        %v2745 = vadd.f32 %v2653, %v2743
        %s2746 = sld [smem:[#allocation2 + $0xc1]]
        %v2747 = vstv %s2746
        %v2748 = vmul.f32 %v2353, %v2747
        %v2749 = vmul.f32 %v2354, %v2747
        %v2750 = vmul.f32 %v2355, %v2747
        %v2751 = vmul.f32 %v2356, %v2747
        %v2756 = vrot.slane %v2748, 2
        %v2757 = vrot.slane %v2750, 2
        %v2758 = vsel %vm1578, %v2756, %v2757
        %v2759 = vrot.slane %v2749, 2
        %v2760 = vrot.slane %v2751, 2
        %v2761 = vsel %vm1578, %v2759, %v2760
        %2762 = vrot.lane.b32.xlu0 %v2758, 117
        %v2763 = vpop.permute.xlu0 %2762
        %2764 = vrot.lane.b32.xlu0 %v2761, 117
        %v2765 = vpop.permute.xlu0 %2764
        %v2766 = vsel %vm528, %v2763, %v2765
        %v2768 = vadd.f32 %v2676, %v2766
        %s2769 = sld [smem:[#allocation2 + $0x20]]
        %v2770 = vstv %s2769
        %v2771 = vmul.f32 %v2353, %v2770
        %v2772 = vmul.f32 %v2354, %v2770
        %v2773 = vmul.f32 %v2355, %v2770
        %v2774 = vmul.f32 %v2356, %v2770
        %v2779 = vrot.slane %v2771, 2
        %v2780 = vrot.slane %v2773, 2
        %v2781 = vsel %vm1578, %v2779, %v2780
        %v2782 = vrot.slane %v2772, 2
        %v2783 = vrot.slane %v2774, 2
        %v2784 = vsel %vm1578, %v2782, %v2783
        %2785 = vrot.lane.b32.xlu0 %v2781, 116
        %v2786 = vpop.permute.xlu0 %2785
        %2787 = vrot.lane.b32.xlu0 %v2784, 116
        %v2788 = vpop.permute.xlu0 %2787
        %v2789 = vsel %vm581, %v2786, %v2788
        %v2791 = vadd.f32 %v2699, %v2789
        %s2792 = sld [smem:[#allocation2 + $0x56]]
        %v2793 = vstv %s2792
        %v2794 = vmul.f32 %v2353, %v2793
        %v2795 = vmul.f32 %v2354, %v2793
        %v2796 = vmul.f32 %v2355, %v2793
        %v2797 = vmul.f32 %v2356, %v2793
        %v2802 = vrot.slane %v2794, 2
        %v2803 = vrot.slane %v2796, 2
        %v2804 = vsel %vm1578, %v2802, %v2803
        %v2805 = vrot.slane %v2795, 2
        %v2806 = vrot.slane %v2797, 2
        %v2807 = vsel %vm1578, %v2805, %v2806
        %2808 = vrot.lane.b32.xlu0 %v2804, 116
        %v2809 = vpop.permute.xlu0 %2808
        %2810 = vrot.lane.b32.xlu0 %v2807, 116
        %v2811 = vpop.permute.xlu0 %2810
        %v2812 = vsel %vm581, %v2809, %v2811
        %v2814 = vadd.f32 %v2722, %v2812
        %s2815 = sld [smem:[#allocation2 + $0x8c]]
        %v2816 = vstv %s2815
        %v2817 = vmul.f32 %v2353, %v2816
        %v2818 = vmul.f32 %v2354, %v2816
        %v2819 = vmul.f32 %v2355, %v2816
        %v2820 = vmul.f32 %v2356, %v2816
        %v2825 = vrot.slane %v2817, 2
        %v2826 = vrot.slane %v2819, 2
        %v2827 = vsel %vm1578, %v2825, %v2826
        %v2828 = vrot.slane %v2818, 2
        %v2829 = vrot.slane %v2820, 2
        %v2830 = vsel %vm1578, %v2828, %v2829
        %2831 = vrot.lane.b32.xlu0 %v2827, 116
        %v2832 = vpop.permute.xlu0 %2831
        %2833 = vrot.lane.b32.xlu0 %v2830, 116
        %v2834 = vpop.permute.xlu0 %2833
        %v2835 = vsel %vm581, %v2832, %v2834
        %v2837 = vadd.f32 %v2745, %v2835
        %s2838 = sld [smem:[#allocation2 + $0xc2]]
        %v2839 = vstv %s2838
        %v2840 = vmul.f32 %v2353, %v2839
        %v2841 = vmul.f32 %v2354, %v2839
        %v2842 = vmul.f32 %v2355, %v2839
        %v2843 = vmul.f32 %v2356, %v2839
        %v2848 = vrot.slane %v2840, 2
        %v2849 = vrot.slane %v2842, 2
        %v2850 = vsel %vm1578, %v2848, %v2849
        %v2851 = vrot.slane %v2841, 2
        %v2852 = vrot.slane %v2843, 2
        %v2853 = vsel %vm1578, %v2851, %v2852
        %2854 = vrot.lane.b32.xlu0 %v2850, 116
        %v2855 = vpop.permute.xlu0 %2854
        %2856 = vrot.lane.b32.xlu0 %v2853, 116
        %v2857 = vpop.permute.xlu0 %2856
        %v2858 = vsel %vm581, %v2855, %v2857
        %v2860 = vadd.f32 %v2768, %v2858
        %s2861 = sld [smem:[#allocation2 + $0x21]]
        %v2862 = vstv %s2861
        %v2863 = vmul.f32 %v2353, %v2862
        %v2864 = vmul.f32 %v2354, %v2862
        %v2865 = vmul.f32 %v2355, %v2862
        %v2866 = vmul.f32 %v2356, %v2862
        %v2871 = vrot.slane %v2863, 2
        %v2872 = vrot.slane %v2865, 2
        %v2873 = vsel %vm1578, %v2871, %v2872
        %v2874 = vrot.slane %v2864, 2
        %v2875 = vrot.slane %v2866, 2
        %v2876 = vsel %vm1578, %v2874, %v2875
        %2877 = vrot.lane.b32.xlu0 %v2873, 108
        %v2878 = vpop.permute.xlu0 %2877
        %2879 = vrot.lane.b32.xlu0 %v2876, 108
        %v2880 = vpop.permute.xlu0 %2879
        %v2881 = vsel %vm634, %v2878, %v2880
        %v2883 = vadd.f32 %v2791, %v2881
        %s2884 = sld [smem:[#allocation2 + $0x57]]
        %v2885 = vstv %s2884
        %v2886 = vmul.f32 %v2353, %v2885
        %v2887 = vmul.f32 %v2354, %v2885
        %v2888 = vmul.f32 %v2355, %v2885
        %v2889 = vmul.f32 %v2356, %v2885
        %v2894 = vrot.slane %v2886, 2
        %v2895 = vrot.slane %v2888, 2
        %v2896 = vsel %vm1578, %v2894, %v2895
        %v2897 = vrot.slane %v2887, 2
        %v2898 = vrot.slane %v2889, 2
        %v2899 = vsel %vm1578, %v2897, %v2898
        %2900 = vrot.lane.b32.xlu0 %v2896, 108
        %v2901 = vpop.permute.xlu0 %2900
        %2902 = vrot.lane.b32.xlu0 %v2899, 108
        %v2903 = vpop.permute.xlu0 %2902
        %v2904 = vsel %vm634, %v2901, %v2903
        %v2906 = vadd.f32 %v2814, %v2904
        %s2907 = sld [smem:[#allocation2 + $0x8d]]
        %v2908 = vstv %s2907
        %v2909 = vmul.f32 %v2353, %v2908
        %v2910 = vmul.f32 %v2354, %v2908
        %v2911 = vmul.f32 %v2355, %v2908
        %v2912 = vmul.f32 %v2356, %v2908
        %v2917 = vrot.slane %v2909, 2
        %v2918 = vrot.slane %v2911, 2
        %v2919 = vsel %vm1578, %v2917, %v2918
        %v2920 = vrot.slane %v2910, 2
        %v2921 = vrot.slane %v2912, 2
        %v2922 = vsel %vm1578, %v2920, %v2921
        %2923 = vrot.lane.b32.xlu0 %v2919, 108
        %v2924 = vpop.permute.xlu0 %2923
        %2925 = vrot.lane.b32.xlu0 %v2922, 108
        %v2926 = vpop.permute.xlu0 %2925
        %v2927 = vsel %vm634, %v2924, %v2926
        %v2929 = vadd.f32 %v2837, %v2927
        %s2930 = sld [smem:[#allocation2 + $0xc3]]
        %v2931 = vstv %s2930
        %v2932 = vmul.f32 %v2353, %v2931
        %v2933 = vmul.f32 %v2354, %v2931
        %v2934 = vmul.f32 %v2355, %v2931
        %v2935 = vmul.f32 %v2356, %v2931
        %v2940 = vrot.slane %v2932, 2
        %v2941 = vrot.slane %v2934, 2
        %v2942 = vsel %vm1578, %v2940, %v2941
        %v2943 = vrot.slane %v2933, 2
        %v2944 = vrot.slane %v2935, 2
        %v2945 = vsel %vm1578, %v2943, %v2944
        %2946 = vrot.lane.b32.xlu0 %v2942, 108
        %v2947 = vpop.permute.xlu0 %2946
        %2948 = vrot.lane.b32.xlu0 %v2945, 108
        %v2949 = vpop.permute.xlu0 %2948
        %v2950 = vsel %vm634, %v2947, %v2949
        %v2952 = vadd.f32 %v2860, %v2950
        %s2953 = sld [smem:[#allocation2 + $0x22]]
        %v2954 = vstv %s2953
        %v2955 = vmul.f32 %v2353, %v2954
        %v2956 = vmul.f32 %v2354, %v2954
        %v2957 = vmul.f32 %v2355, %v2954
        %v2958 = vmul.f32 %v2356, %v2954
        %v2963 = vrot.slane %v2955, 2
        %v2964 = vrot.slane %v2957, 2
        %v2965 = vsel %vm1578, %v2963, %v2964
        %v2966 = vrot.slane %v2956, 2
        %v2967 = vrot.slane %v2958, 2
        %v2968 = vsel %vm1578, %v2966, %v2967
        %2969 = vrot.lane.b32.xlu0 %v2965, 107
        %v2970 = vpop.permute.xlu0 %2969
        %2971 = vrot.lane.b32.xlu0 %v2968, 107
        %v2972 = vpop.permute.xlu0 %2971
        %v2973 = vsel %vm687, %v2970, %v2972
        %v2975 = vadd.f32 %v2883, %v2973
        %s2976 = sld [smem:[#allocation2 + $0x58]]
        %v2977 = vstv %s2976
        %v2978 = vmul.f32 %v2353, %v2977
        %v2979 = vmul.f32 %v2354, %v2977
        %v2980 = vmul.f32 %v2355, %v2977
        %v2981 = vmul.f32 %v2356, %v2977
        %v2986 = vrot.slane %v2978, 2
        %v2987 = vrot.slane %v2980, 2
        %v2988 = vsel %vm1578, %v2986, %v2987
        %v2989 = vrot.slane %v2979, 2
        %v2990 = vrot.slane %v2981, 2
        %v2991 = vsel %vm1578, %v2989, %v2990
        %2992 = vrot.lane.b32.xlu0 %v2988, 107
        %v2993 = vpop.permute.xlu0 %2992
        %2994 = vrot.lane.b32.xlu0 %v2991, 107
        %v2995 = vpop.permute.xlu0 %2994
        %v2996 = vsel %vm687, %v2993, %v2995
        %v2998 = vadd.f32 %v2906, %v2996
        %s2999 = sld [smem:[#allocation2 + $0x8e]]
        %v3000 = vstv %s2999
        %v3001 = vmul.f32 %v2353, %v3000
        %v3002 = vmul.f32 %v2354, %v3000
        %v3003 = vmul.f32 %v2355, %v3000
        %v3004 = vmul.f32 %v2356, %v3000
        %v3009 = vrot.slane %v3001, 2
        %v3010 = vrot.slane %v3003, 2
        %v3011 = vsel %vm1578, %v3009, %v3010
        %v3012 = vrot.slane %v3002, 2
        %v3013 = vrot.slane %v3004, 2
        %v3014 = vsel %vm1578, %v3012, %v3013
        %3015 = vrot.lane.b32.xlu0 %v3011, 107
        %v3016 = vpop.permute.xlu0 %3015
        %3017 = vrot.lane.b32.xlu0 %v3014, 107
        %v3018 = vpop.permute.xlu0 %3017
        %v3019 = vsel %vm687, %v3016, %v3018
        %v3021 = vadd.f32 %v2929, %v3019
        %s3022 = sld [smem:[#allocation2 + $0xc4]]
        %v3023 = vstv %s3022
        %v3024 = vmul.f32 %v2353, %v3023
        %v3025 = vmul.f32 %v2354, %v3023
        %v3026 = vmul.f32 %v2355, %v3023
        %v3027 = vmul.f32 %v2356, %v3023
        %v3032 = vrot.slane %v3024, 2
        %v3033 = vrot.slane %v3026, 2
        %v3034 = vsel %vm1578, %v3032, %v3033
        %v3035 = vrot.slane %v3025, 2
        %v3036 = vrot.slane %v3027, 2
        %v3037 = vsel %vm1578, %v3035, %v3036
        %3038 = vrot.lane.b32.xlu0 %v3034, 107
        %v3039 = vpop.permute.xlu0 %3038
        %3040 = vrot.lane.b32.xlu0 %v3037, 107
        %v3041 = vpop.permute.xlu0 %3040
        %v3042 = vsel %vm687, %v3039, %v3041
        %v3044 = vadd.f32 %v2952, %v3042
        %s3045 = sld [smem:[#allocation2 + $0x23]]
        %v3046 = vstv %s3045
        %v3047 = vmul.f32 %v2353, %v3046
        %v3048 = vmul.f32 %v2354, %v3046
        %v3049 = vmul.f32 %v2355, %v3046
        %v3050 = vmul.f32 %v2356, %v3046
        %v3055 = vrot.slane %v3047, 2
        %v3056 = vrot.slane %v3049, 2
        %v3057 = vsel %vm1578, %v3055, %v3056
        %v3058 = vrot.slane %v3048, 2
        %v3059 = vrot.slane %v3050, 2
        %v3060 = vsel %vm1578, %v3058, %v3059
        %3061 = vrot.lane.b32.xlu0 %v3057, 106
        %v3062 = vpop.permute.xlu0 %3061
        %3063 = vrot.lane.b32.xlu0 %v3060, 106
        %v3064 = vpop.permute.xlu0 %3063
        %v3065 = vsel %vm740, %v3062, %v3064
        %v3067 = vadd.f32 %v2975, %v3065
        %s3068 = sld [smem:[#allocation2 + $0x59]]
        %v3069 = vstv %s3068
        %v3070 = vmul.f32 %v2353, %v3069
        %v3071 = vmul.f32 %v2354, %v3069
        %v3072 = vmul.f32 %v2355, %v3069
        %v3073 = vmul.f32 %v2356, %v3069
        %v3078 = vrot.slane %v3070, 2
        %v3079 = vrot.slane %v3072, 2
        %v3080 = vsel %vm1578, %v3078, %v3079
        %v3081 = vrot.slane %v3071, 2
        %v3082 = vrot.slane %v3073, 2
        %v3083 = vsel %vm1578, %v3081, %v3082
        %3084 = vrot.lane.b32.xlu0 %v3080, 106
        %v3085 = vpop.permute.xlu0 %3084
        %3086 = vrot.lane.b32.xlu0 %v3083, 106
        %v3087 = vpop.permute.xlu0 %3086
        %v3088 = vsel %vm740, %v3085, %v3087
        %v3090 = vadd.f32 %v2998, %v3088
        %s3091 = sld [smem:[#allocation2 + $0x8f]]
        %v3092 = vstv %s3091
        %v3093 = vmul.f32 %v2353, %v3092
        %v3094 = vmul.f32 %v2354, %v3092
        %v3095 = vmul.f32 %v2355, %v3092
        %v3096 = vmul.f32 %v2356, %v3092
        %v3101 = vrot.slane %v3093, 2
        %v3102 = vrot.slane %v3095, 2
        %v3103 = vsel %vm1578, %v3101, %v3102
        %v3104 = vrot.slane %v3094, 2
        %v3105 = vrot.slane %v3096, 2
        %v3106 = vsel %vm1578, %v3104, %v3105
        %3107 = vrot.lane.b32.xlu0 %v3103, 106
        %v3108 = vpop.permute.xlu0 %3107
        %3109 = vrot.lane.b32.xlu0 %v3106, 106
        %v3110 = vpop.permute.xlu0 %3109
        %v3111 = vsel %vm740, %v3108, %v3110
        %v3113 = vadd.f32 %v3021, %v3111
        %s3114 = sld [smem:[#allocation2 + $0xc5]]
        %v3115 = vstv %s3114
        %v3116 = vmul.f32 %v2353, %v3115
        %v3117 = vmul.f32 %v2354, %v3115
        %v3118 = vmul.f32 %v2355, %v3115
        %v3119 = vmul.f32 %v2356, %v3115
        %v3124 = vrot.slane %v3116, 2
        %v3125 = vrot.slane %v3118, 2
        %v3126 = vsel %vm1578, %v3124, %v3125
        %v3127 = vrot.slane %v3117, 2
        %v3128 = vrot.slane %v3119, 2
        %v3129 = vsel %vm1578, %v3127, %v3128
        %3130 = vrot.lane.b32.xlu0 %v3126, 106
        %v3131 = vpop.permute.xlu0 %3130
        %3132 = vrot.lane.b32.xlu0 %v3129, 106
        %v3133 = vpop.permute.xlu0 %3132
        %v3134 = vsel %vm740, %v3131, %v3133
        %v3136 = vadd.f32 %v3044, %v3134
        %v3137 = vld [vmem:[%s333 + $0x10] sm:$0xf8]
        %v3138 = vld [vmem:[%s333 + $0x18] sm:$0xf8]
        %v3139 = vld [vmem:[%s333 + $0x20] sm:$0x7]
        %v3140 = vld [vmem:[%s333 + $0x28] sm:$0x7]
        %s3141 = sld [smem:[#allocation2 + $0x24]]
        %v3142 = vstv %s3141
        %v3143 = vmul.f32 %v3137, %v3142
        %v3144 = vmul.f32 %v3139, %v3142
        %vm3147 = vcmask 1044480
        %v3148 = vrot.slane %v3143, 3
        %v3149 = vrot.slane %v3144, 3
        %v3150 = vsel %vm3147, %v3148, %v3149
        %v3152 = vadd.f32 %v3067, %v3150
        %s3153 = sld [smem:[#allocation2 + $0x5a]]
        %v3154 = vstv %s3153
        %v3155 = vmul.f32 %v3137, %v3154
        %v3156 = vmul.f32 %v3139, %v3154
        %v3159 = vrot.slane %v3155, 3
        %v3160 = vrot.slane %v3156, 3
        %v3161 = vsel %vm3147, %v3159, %v3160
        %v3163 = vadd.f32 %v3090, %v3161
        %s3164 = sld [smem:[#allocation2 + $0x90]]
        %v3165 = vstv %s3164
        %v3166 = vmul.f32 %v3137, %v3165
        %v3167 = vmul.f32 %v3139, %v3165
        %v3170 = vrot.slane %v3166, 3
        %v3171 = vrot.slane %v3167, 3
        %v3172 = vsel %vm3147, %v3170, %v3171
        %v3174 = vadd.f32 %v3113, %v3172
        %s3175 = sld [smem:[#allocation2 + $0xc6]]
        %v3176 = vstv %s3175
        %v3177 = vmul.f32 %v3137, %v3176
        %v3178 = vmul.f32 %v3139, %v3176
        %v3181 = vrot.slane %v3177, 3
        %v3182 = vrot.slane %v3178, 3
        %v3183 = vsel %vm3147, %v3181, %v3182
        %v3185 = vadd.f32 %v3136, %v3183
        %s3186 = sld [smem:[#allocation2 + $0x25]]
        %v3187 = vstv %s3186
        %v3188 = vmul.f32 %v3137, %v3187
        %v3189 = vmul.f32 %v3138, %v3187
        %v3190 = vmul.f32 %v3139, %v3187
        %v3191 = vmul.f32 %v3140, %v3187
        %v3196 = vrot.slane %v3188, 3
        %v3197 = vrot.slane %v3190, 3
        %v3198 = vsel %vm3147, %v3196, %v3197
        %v3199 = vrot.slane %v3189, 3
        %v3200 = vrot.slane %v3191, 3
        %v3201 = vsel %vm3147, %v3199, %v3200
        %3202 = vrot.lane.b32.xlu0 %v3198, 127
        %v3203 = vpop.permute.xlu0 %3202
        %3204 = vrot.lane.b32.xlu0 %v3201, 127
        %v3205 = vpop.permute.xlu0 %3204
        %v3206 = vsel %vm369, %v3203, %v3205
        %v3208 = vadd.f32 %v3152, %v3206
        %s3209 = sld [smem:[#allocation2 + $0x5b]]
        %v3210 = vstv %s3209
        %v3211 = vmul.f32 %v3137, %v3210
        %v3212 = vmul.f32 %v3138, %v3210
        %v3213 = vmul.f32 %v3139, %v3210
        %v3214 = vmul.f32 %v3140, %v3210
        %v3219 = vrot.slane %v3211, 3
        %v3220 = vrot.slane %v3213, 3
        %v3221 = vsel %vm3147, %v3219, %v3220
        %v3222 = vrot.slane %v3212, 3
        %v3223 = vrot.slane %v3214, 3
        %v3224 = vsel %vm3147, %v3222, %v3223
        %3225 = vrot.lane.b32.xlu0 %v3221, 127
        %v3226 = vpop.permute.xlu0 %3225
        %3227 = vrot.lane.b32.xlu0 %v3224, 127
        %v3228 = vpop.permute.xlu0 %3227
        %v3229 = vsel %vm369, %v3226, %v3228
        %v3231 = vadd.f32 %v3163, %v3229
        %s3232 = sld [smem:[#allocation2 + $0x91]]
        %v3233 = vstv %s3232
        %v3234 = vmul.f32 %v3137, %v3233
        %v3235 = vmul.f32 %v3138, %v3233
        %v3236 = vmul.f32 %v3139, %v3233
        %v3237 = vmul.f32 %v3140, %v3233
        %v3242 = vrot.slane %v3234, 3
        %v3243 = vrot.slane %v3236, 3
        %v3244 = vsel %vm3147, %v3242, %v3243
        %v3245 = vrot.slane %v3235, 3
        %v3246 = vrot.slane %v3237, 3
        %v3247 = vsel %vm3147, %v3245, %v3246
        %3248 = vrot.lane.b32.xlu0 %v3244, 127
        %v3249 = vpop.permute.xlu0 %3248
        %3250 = vrot.lane.b32.xlu0 %v3247, 127
        %v3251 = vpop.permute.xlu0 %3250
        %v3252 = vsel %vm369, %v3249, %v3251
        %v3254 = vadd.f32 %v3174, %v3252
        %s3255 = sld [smem:[#allocation2 + $0xc7]]
        %v3256 = vstv %s3255
        %v3257 = vmul.f32 %v3137, %v3256
        %v3258 = vmul.f32 %v3138, %v3256
        %v3259 = vmul.f32 %v3139, %v3256
        %v3260 = vmul.f32 %v3140, %v3256
        %v3265 = vrot.slane %v3257, 3
        %v3266 = vrot.slane %v3259, 3
        %v3267 = vsel %vm3147, %v3265, %v3266
        %v3268 = vrot.slane %v3258, 3
        %v3269 = vrot.slane %v3260, 3
        %v3270 = vsel %vm3147, %v3268, %v3269
        %3271 = vrot.lane.b32.xlu0 %v3267, 127
        %v3272 = vpop.permute.xlu0 %3271
        %3273 = vrot.lane.b32.xlu0 %v3270, 127
        %v3274 = vpop.permute.xlu0 %3273
        %v3275 = vsel %vm369, %v3272, %v3274
        %v3277 = vadd.f32 %v3185, %v3275
        %s3278 = sld [smem:[#allocation2 + $0x26]]
        %v3279 = vstv %s3278
        %v3280 = vmul.f32 %v3137, %v3279
        %v3281 = vmul.f32 %v3138, %v3279
        %v3282 = vmul.f32 %v3139, %v3279
        %v3283 = vmul.f32 %v3140, %v3279
        %v3288 = vrot.slane %v3280, 3
        %v3289 = vrot.slane %v3282, 3
        %v3290 = vsel %vm3147, %v3288, %v3289
        %v3291 = vrot.slane %v3281, 3
        %v3292 = vrot.slane %v3283, 3
        %v3293 = vsel %vm3147, %v3291, %v3292
        %3294 = vrot.lane.b32.xlu0 %v3290, 126
        %v3295 = vpop.permute.xlu0 %3294
        %3296 = vrot.lane.b32.xlu0 %v3293, 126
        %v3297 = vpop.permute.xlu0 %3296
        %v3298 = vsel %vm422, %v3295, %v3297
        %v3300 = vadd.f32 %v3208, %v3298
        %s3301 = sld [smem:[#allocation2 + $0x5c]]
        %v3302 = vstv %s3301
        %v3303 = vmul.f32 %v3137, %v3302
        %v3304 = vmul.f32 %v3138, %v3302
        %v3305 = vmul.f32 %v3139, %v3302
        %v3306 = vmul.f32 %v3140, %v3302
        %v3311 = vrot.slane %v3303, 3
        %v3312 = vrot.slane %v3305, 3
        %v3313 = vsel %vm3147, %v3311, %v3312
        %v3314 = vrot.slane %v3304, 3
        %v3315 = vrot.slane %v3306, 3
        %v3316 = vsel %vm3147, %v3314, %v3315
        %3317 = vrot.lane.b32.xlu0 %v3313, 126
        %v3318 = vpop.permute.xlu0 %3317
        %3319 = vrot.lane.b32.xlu0 %v3316, 126
        %v3320 = vpop.permute.xlu0 %3319
        %v3321 = vsel %vm422, %v3318, %v3320
        %v3323 = vadd.f32 %v3231, %v3321
        %s3324 = sld [smem:[#allocation2 + $0x92]]
        %v3325 = vstv %s3324
        %v3326 = vmul.f32 %v3137, %v3325
        %v3327 = vmul.f32 %v3138, %v3325
        %v3328 = vmul.f32 %v3139, %v3325
        %v3329 = vmul.f32 %v3140, %v3325
        %v3334 = vrot.slane %v3326, 3
        %v3335 = vrot.slane %v3328, 3
        %v3336 = vsel %vm3147, %v3334, %v3335
        %v3337 = vrot.slane %v3327, 3
        %v3338 = vrot.slane %v3329, 3
        %v3339 = vsel %vm3147, %v3337, %v3338
        %3340 = vrot.lane.b32.xlu0 %v3336, 126
        %v3341 = vpop.permute.xlu0 %3340
        %3342 = vrot.lane.b32.xlu0 %v3339, 126
        %v3343 = vpop.permute.xlu0 %3342
        %v3344 = vsel %vm422, %v3341, %v3343
        %v3346 = vadd.f32 %v3254, %v3344
        %s3347 = sld [smem:[#allocation2 + $0xc8]]
        %v3348 = vstv %s3347
        %v3349 = vmul.f32 %v3137, %v3348
        %v3350 = vmul.f32 %v3138, %v3348
        %v3351 = vmul.f32 %v3139, %v3348
        %v3352 = vmul.f32 %v3140, %v3348
        %v3357 = vrot.slane %v3349, 3
        %v3358 = vrot.slane %v3351, 3
        %v3359 = vsel %vm3147, %v3357, %v3358
        %v3360 = vrot.slane %v3350, 3
        %v3361 = vrot.slane %v3352, 3
        %v3362 = vsel %vm3147, %v3360, %v3361
        %3363 = vrot.lane.b32.xlu0 %v3359, 126
        %v3364 = vpop.permute.xlu0 %3363
        %3365 = vrot.lane.b32.xlu0 %v3362, 126
        %v3366 = vpop.permute.xlu0 %3365
        %v3367 = vsel %vm422, %v3364, %v3366
        %v3369 = vadd.f32 %v3277, %v3367
        %s3370 = sld [smem:[#allocation2 + $0x27]]
        %v3371 = vstv %s3370
        %v3372 = vmul.f32 %v3137, %v3371
        %v3373 = vmul.f32 %v3138, %v3371
        %v3374 = vmul.f32 %v3139, %v3371
        %v3375 = vmul.f32 %v3140, %v3371
        %v3380 = vrot.slane %v3372, 3
        %v3381 = vrot.slane %v3374, 3
        %v3382 = vsel %vm3147, %v3380, %v3381
        %v3383 = vrot.slane %v3373, 3
        %v3384 = vrot.slane %v3375, 3
        %v3385 = vsel %vm3147, %v3383, %v3384
        %3386 = vrot.lane.b32.xlu0 %v3382, 118
        %v3387 = vpop.permute.xlu0 %3386
        %3388 = vrot.lane.b32.xlu0 %v3385, 118
        %v3389 = vpop.permute.xlu0 %3388
        %v3390 = vsel %vm475, %v3387, %v3389
        %v3392 = vadd.f32 %v3300, %v3390
        %s3393 = sld [smem:[#allocation2 + $0x5d]]
        %v3394 = vstv %s3393
        %v3395 = vmul.f32 %v3137, %v3394
        %v3396 = vmul.f32 %v3138, %v3394
        %v3397 = vmul.f32 %v3139, %v3394
        %v3398 = vmul.f32 %v3140, %v3394
        %v3403 = vrot.slane %v3395, 3
        %v3404 = vrot.slane %v3397, 3
        %v3405 = vsel %vm3147, %v3403, %v3404
        %v3406 = vrot.slane %v3396, 3
        %v3407 = vrot.slane %v3398, 3
        %v3408 = vsel %vm3147, %v3406, %v3407
        %3409 = vrot.lane.b32.xlu0 %v3405, 118
        %v3410 = vpop.permute.xlu0 %3409
        %3411 = vrot.lane.b32.xlu0 %v3408, 118
        %v3412 = vpop.permute.xlu0 %3411
        %v3413 = vsel %vm475, %v3410, %v3412
        %v3415 = vadd.f32 %v3323, %v3413
        %s3416 = sld [smem:[#allocation2 + $0x93]]
        %v3417 = vstv %s3416
        %v3418 = vmul.f32 %v3137, %v3417
        %v3419 = vmul.f32 %v3138, %v3417
        %v3420 = vmul.f32 %v3139, %v3417
        %v3421 = vmul.f32 %v3140, %v3417
        %v3426 = vrot.slane %v3418, 3
        %v3427 = vrot.slane %v3420, 3
        %v3428 = vsel %vm3147, %v3426, %v3427
        %v3429 = vrot.slane %v3419, 3
        %v3430 = vrot.slane %v3421, 3
        %v3431 = vsel %vm3147, %v3429, %v3430
        %3432 = vrot.lane.b32.xlu0 %v3428, 118
        %v3433 = vpop.permute.xlu0 %3432
        %3434 = vrot.lane.b32.xlu0 %v3431, 118
        %v3435 = vpop.permute.xlu0 %3434
        %v3436 = vsel %vm475, %v3433, %v3435
        %v3438 = vadd.f32 %v3346, %v3436
        %s3439 = sld [smem:[#allocation2 + $0xc9]]
        %v3440 = vstv %s3439
        %v3441 = vmul.f32 %v3137, %v3440
        %v3442 = vmul.f32 %v3138, %v3440
        %v3443 = vmul.f32 %v3139, %v3440
        %v3444 = vmul.f32 %v3140, %v3440
        %v3449 = vrot.slane %v3441, 3
        %v3450 = vrot.slane %v3443, 3
        %v3451 = vsel %vm3147, %v3449, %v3450
        %v3452 = vrot.slane %v3442, 3
        %v3453 = vrot.slane %v3444, 3
        %v3454 = vsel %vm3147, %v3452, %v3453
        %3455 = vrot.lane.b32.xlu0 %v3451, 118
        %v3456 = vpop.permute.xlu0 %3455
        %3457 = vrot.lane.b32.xlu0 %v3454, 118
        %v3458 = vpop.permute.xlu0 %3457
        %v3459 = vsel %vm475, %v3456, %v3458
        %v3461 = vadd.f32 %v3369, %v3459
        %s3462 = sld [smem:[#allocation2 + $0x28]]
        %v3463 = vstv %s3462
        %v3464 = vmul.f32 %v3137, %v3463
        %v3465 = vmul.f32 %v3138, %v3463
        %v3466 = vmul.f32 %v3139, %v3463
        %v3467 = vmul.f32 %v3140, %v3463
        %v3472 = vrot.slane %v3464, 3
        %v3473 = vrot.slane %v3466, 3
        %v3474 = vsel %vm3147, %v3472, %v3473
        %v3475 = vrot.slane %v3465, 3
        %v3476 = vrot.slane %v3467, 3
        %v3477 = vsel %vm3147, %v3475, %v3476
        %3478 = vrot.lane.b32.xlu0 %v3474, 117
        %v3479 = vpop.permute.xlu0 %3478
        %3480 = vrot.lane.b32.xlu0 %v3477, 117
        %v3481 = vpop.permute.xlu0 %3480
        %v3482 = vsel %vm528, %v3479, %v3481
        %v3484 = vadd.f32 %v3392, %v3482
        %s3485 = sld [smem:[#allocation2 + $0x5e]]
        %v3486 = vstv %s3485
        %v3487 = vmul.f32 %v3137, %v3486
        %v3488 = vmul.f32 %v3138, %v3486
        %v3489 = vmul.f32 %v3139, %v3486
        %v3490 = vmul.f32 %v3140, %v3486
        %v3495 = vrot.slane %v3487, 3
        %v3496 = vrot.slane %v3489, 3
        %v3497 = vsel %vm3147, %v3495, %v3496
        %v3498 = vrot.slane %v3488, 3
        %v3499 = vrot.slane %v3490, 3
        %v3500 = vsel %vm3147, %v3498, %v3499
        %3501 = vrot.lane.b32.xlu0 %v3497, 117
        %v3502 = vpop.permute.xlu0 %3501
        %3503 = vrot.lane.b32.xlu0 %v3500, 117
        %v3504 = vpop.permute.xlu0 %3503
        %v3505 = vsel %vm528, %v3502, %v3504
        %v3507 = vadd.f32 %v3415, %v3505
        %s3508 = sld [smem:[#allocation2 + $0x94]]
        %v3509 = vstv %s3508
        %v3510 = vmul.f32 %v3137, %v3509
        %v3511 = vmul.f32 %v3138, %v3509
        %v3512 = vmul.f32 %v3139, %v3509
        %v3513 = vmul.f32 %v3140, %v3509
        %v3518 = vrot.slane %v3510, 3
        %v3519 = vrot.slane %v3512, 3
        %v3520 = vsel %vm3147, %v3518, %v3519
        %v3521 = vrot.slane %v3511, 3
        %v3522 = vrot.slane %v3513, 3
        %v3523 = vsel %vm3147, %v3521, %v3522
        %3524 = vrot.lane.b32.xlu0 %v3520, 117
        %v3525 = vpop.permute.xlu0 %3524
        %3526 = vrot.lane.b32.xlu0 %v3523, 117
        %v3527 = vpop.permute.xlu0 %3526
        %v3528 = vsel %vm528, %v3525, %v3527
        %v3530 = vadd.f32 %v3438, %v3528
        %s3531 = sld [smem:[#allocation2 + $0xca]]
        %v3532 = vstv %s3531
        %v3533 = vmul.f32 %v3137, %v3532
        %v3534 = vmul.f32 %v3138, %v3532
        %v3535 = vmul.f32 %v3139, %v3532
        %v3536 = vmul.f32 %v3140, %v3532
        %v3541 = vrot.slane %v3533, 3
        %v3542 = vrot.slane %v3535, 3
        %v3543 = vsel %vm3147, %v3541, %v3542
        %v3544 = vrot.slane %v3534, 3
        %v3545 = vrot.slane %v3536, 3
        %v3546 = vsel %vm3147, %v3544, %v3545
        %3547 = vrot.lane.b32.xlu0 %v3543, 117
        %v3548 = vpop.permute.xlu0 %3547
        %3549 = vrot.lane.b32.xlu0 %v3546, 117
        %v3550 = vpop.permute.xlu0 %3549
        %v3551 = vsel %vm528, %v3548, %v3550
        %v3553 = vadd.f32 %v3461, %v3551
        %s3554 = sld [smem:[#allocation2 + $0x29]]
        %v3555 = vstv %s3554
        %v3556 = vmul.f32 %v3137, %v3555
        %v3557 = vmul.f32 %v3138, %v3555
        %v3558 = vmul.f32 %v3139, %v3555
        %v3559 = vmul.f32 %v3140, %v3555
        %v3564 = vrot.slane %v3556, 3
        %v3565 = vrot.slane %v3558, 3
        %v3566 = vsel %vm3147, %v3564, %v3565
        %v3567 = vrot.slane %v3557, 3
        %v3568 = vrot.slane %v3559, 3
        %v3569 = vsel %vm3147, %v3567, %v3568
        %3570 = vrot.lane.b32.xlu0 %v3566, 116
        %v3571 = vpop.permute.xlu0 %3570
        %3572 = vrot.lane.b32.xlu0 %v3569, 116
        %v3573 = vpop.permute.xlu0 %3572
        %v3574 = vsel %vm581, %v3571, %v3573
        %v3576 = vadd.f32 %v3484, %v3574
        %s3577 = sld [smem:[#allocation2 + $0x5f]]
        %v3578 = vstv %s3577
        %v3579 = vmul.f32 %v3137, %v3578
        %v3580 = vmul.f32 %v3138, %v3578
        %v3581 = vmul.f32 %v3139, %v3578
        %v3582 = vmul.f32 %v3140, %v3578
        %v3587 = vrot.slane %v3579, 3
        %v3588 = vrot.slane %v3581, 3
        %v3589 = vsel %vm3147, %v3587, %v3588
        %v3590 = vrot.slane %v3580, 3
        %v3591 = vrot.slane %v3582, 3
        %v3592 = vsel %vm3147, %v3590, %v3591
        %3593 = vrot.lane.b32.xlu0 %v3589, 116
        %v3594 = vpop.permute.xlu0 %3593
        %3595 = vrot.lane.b32.xlu0 %v3592, 116
        %v3596 = vpop.permute.xlu0 %3595
        %v3597 = vsel %vm581, %v3594, %v3596
        %v3599 = vadd.f32 %v3507, %v3597
        %s3600 = sld [smem:[#allocation2 + $0x95]]
        %v3601 = vstv %s3600
        %v3602 = vmul.f32 %v3137, %v3601
        %v3603 = vmul.f32 %v3138, %v3601
        %v3604 = vmul.f32 %v3139, %v3601
        %v3605 = vmul.f32 %v3140, %v3601
        %v3610 = vrot.slane %v3602, 3
        %v3611 = vrot.slane %v3604, 3
        %v3612 = vsel %vm3147, %v3610, %v3611
        %v3613 = vrot.slane %v3603, 3
        %v3614 = vrot.slane %v3605, 3
        %v3615 = vsel %vm3147, %v3613, %v3614
        %3616 = vrot.lane.b32.xlu0 %v3612, 116
        %v3617 = vpop.permute.xlu0 %3616
        %3618 = vrot.lane.b32.xlu0 %v3615, 116
        %v3619 = vpop.permute.xlu0 %3618
        %v3620 = vsel %vm581, %v3617, %v3619
        %v3622 = vadd.f32 %v3530, %v3620
        %s3623 = sld [smem:[#allocation2 + $0xcb]]
        %v3624 = vstv %s3623
        %v3625 = vmul.f32 %v3137, %v3624
        %v3626 = vmul.f32 %v3138, %v3624
        %v3627 = vmul.f32 %v3139, %v3624
        %v3628 = vmul.f32 %v3140, %v3624
        %v3633 = vrot.slane %v3625, 3
        %v3634 = vrot.slane %v3627, 3
        %v3635 = vsel %vm3147, %v3633, %v3634
        %v3636 = vrot.slane %v3626, 3
        %v3637 = vrot.slane %v3628, 3
        %v3638 = vsel %vm3147, %v3636, %v3637
        %3639 = vrot.lane.b32.xlu0 %v3635, 116
        %v3640 = vpop.permute.xlu0 %3639
        %3641 = vrot.lane.b32.xlu0 %v3638, 116
        %v3642 = vpop.permute.xlu0 %3641
        %v3643 = vsel %vm581, %v3640, %v3642
        %v3645 = vadd.f32 %v3553, %v3643
        %s3646 = sld [smem:[#allocation2 + $0x2a]]
        %v3647 = vstv %s3646
        %v3648 = vmul.f32 %v3137, %v3647
        %v3649 = vmul.f32 %v3138, %v3647
        %v3650 = vmul.f32 %v3139, %v3647
        %v3651 = vmul.f32 %v3140, %v3647
        %v3656 = vrot.slane %v3648, 3
        %v3657 = vrot.slane %v3650, 3
        %v3658 = vsel %vm3147, %v3656, %v3657
        %v3659 = vrot.slane %v3649, 3
        %v3660 = vrot.slane %v3651, 3
        %v3661 = vsel %vm3147, %v3659, %v3660
        %3662 = vrot.lane.b32.xlu0 %v3658, 108
        %v3663 = vpop.permute.xlu0 %3662
        %3664 = vrot.lane.b32.xlu0 %v3661, 108
        %v3665 = vpop.permute.xlu0 %3664
        %v3666 = vsel %vm634, %v3663, %v3665
        %v3668 = vadd.f32 %v3576, %v3666
        %s3669 = sld [smem:[#allocation2 + $0x60]]
        %v3670 = vstv %s3669
        %v3671 = vmul.f32 %v3137, %v3670
        %v3672 = vmul.f32 %v3138, %v3670
        %v3673 = vmul.f32 %v3139, %v3670
        %v3674 = vmul.f32 %v3140, %v3670
        %v3679 = vrot.slane %v3671, 3
        %v3680 = vrot.slane %v3673, 3
        %v3681 = vsel %vm3147, %v3679, %v3680
        %v3682 = vrot.slane %v3672, 3
        %v3683 = vrot.slane %v3674, 3
        %v3684 = vsel %vm3147, %v3682, %v3683
        %3685 = vrot.lane.b32.xlu0 %v3681, 108
        %v3686 = vpop.permute.xlu0 %3685
        %3687 = vrot.lane.b32.xlu0 %v3684, 108
        %v3688 = vpop.permute.xlu0 %3687
        %v3689 = vsel %vm634, %v3686, %v3688
        %v3691 = vadd.f32 %v3599, %v3689
        %s3692 = sld [smem:[#allocation2 + $0x96]]
        %v3693 = vstv %s3692
        %v3694 = vmul.f32 %v3137, %v3693
        %v3695 = vmul.f32 %v3138, %v3693
        %v3696 = vmul.f32 %v3139, %v3693
        %v3697 = vmul.f32 %v3140, %v3693
        %v3702 = vrot.slane %v3694, 3
        %v3703 = vrot.slane %v3696, 3
        %v3704 = vsel %vm3147, %v3702, %v3703
        %v3705 = vrot.slane %v3695, 3
        %v3706 = vrot.slane %v3697, 3
        %v3707 = vsel %vm3147, %v3705, %v3706
        %3708 = vrot.lane.b32.xlu0 %v3704, 108
        %v3709 = vpop.permute.xlu0 %3708
        %3710 = vrot.lane.b32.xlu0 %v3707, 108
        %v3711 = vpop.permute.xlu0 %3710
        %v3712 = vsel %vm634, %v3709, %v3711
        %v3714 = vadd.f32 %v3622, %v3712
        %s3715 = sld [smem:[#allocation2 + $0xcc]]
        %v3716 = vstv %s3715
        %v3717 = vmul.f32 %v3137, %v3716
        %v3718 = vmul.f32 %v3138, %v3716
        %v3719 = vmul.f32 %v3139, %v3716
        %v3720 = vmul.f32 %v3140, %v3716
        %v3725 = vrot.slane %v3717, 3
        %v3726 = vrot.slane %v3719, 3
        %v3727 = vsel %vm3147, %v3725, %v3726
        %v3728 = vrot.slane %v3718, 3
        %v3729 = vrot.slane %v3720, 3
        %v3730 = vsel %vm3147, %v3728, %v3729
        %3731 = vrot.lane.b32.xlu0 %v3727, 108
        %v3732 = vpop.permute.xlu0 %3731
        %3733 = vrot.lane.b32.xlu0 %v3730, 108
        %v3734 = vpop.permute.xlu0 %3733
        %v3735 = vsel %vm634, %v3732, %v3734
        %v3737 = vadd.f32 %v3645, %v3735
        %s3738 = sld [smem:[#allocation2 + $0x2b]]
        %v3739 = vstv %s3738
        %v3740 = vmul.f32 %v3137, %v3739
        %v3741 = vmul.f32 %v3138, %v3739
        %v3742 = vmul.f32 %v3139, %v3739
        %v3743 = vmul.f32 %v3140, %v3739
        %v3748 = vrot.slane %v3740, 3
        %v3749 = vrot.slane %v3742, 3
        %v3750 = vsel %vm3147, %v3748, %v3749
        %v3751 = vrot.slane %v3741, 3
        %v3752 = vrot.slane %v3743, 3
        %v3753 = vsel %vm3147, %v3751, %v3752
        %3754 = vrot.lane.b32.xlu0 %v3750, 107
        %v3755 = vpop.permute.xlu0 %3754
        %3756 = vrot.lane.b32.xlu0 %v3753, 107
        %v3757 = vpop.permute.xlu0 %3756
        %v3758 = vsel %vm687, %v3755, %v3757
        %v3760 = vadd.f32 %v3668, %v3758
        %s3761 = sld [smem:[#allocation2 + $0x61]]
        %v3762 = vstv %s3761
        %v3763 = vmul.f32 %v3137, %v3762
        %v3764 = vmul.f32 %v3138, %v3762
        %v3765 = vmul.f32 %v3139, %v3762
        %v3766 = vmul.f32 %v3140, %v3762
        %v3771 = vrot.slane %v3763, 3
        %v3772 = vrot.slane %v3765, 3
        %v3773 = vsel %vm3147, %v3771, %v3772
        %v3774 = vrot.slane %v3764, 3
        %v3775 = vrot.slane %v3766, 3
        %v3776 = vsel %vm3147, %v3774, %v3775
        %3777 = vrot.lane.b32.xlu0 %v3773, 107
        %v3778 = vpop.permute.xlu0 %3777
        %3779 = vrot.lane.b32.xlu0 %v3776, 107
        %v3780 = vpop.permute.xlu0 %3779
        %v3781 = vsel %vm687, %v3778, %v3780
        %v3783 = vadd.f32 %v3691, %v3781
        %s3784 = sld [smem:[#allocation2 + $0x97]]
        %v3785 = vstv %s3784
        %v3786 = vmul.f32 %v3137, %v3785
        %v3787 = vmul.f32 %v3138, %v3785
        %v3788 = vmul.f32 %v3139, %v3785
        %v3789 = vmul.f32 %v3140, %v3785
        %v3794 = vrot.slane %v3786, 3
        %v3795 = vrot.slane %v3788, 3
        %v3796 = vsel %vm3147, %v3794, %v3795
        %v3797 = vrot.slane %v3787, 3
        %v3798 = vrot.slane %v3789, 3
        %v3799 = vsel %vm3147, %v3797, %v3798
        %3800 = vrot.lane.b32.xlu0 %v3796, 107
        %v3801 = vpop.permute.xlu0 %3800
        %3802 = vrot.lane.b32.xlu0 %v3799, 107
        %v3803 = vpop.permute.xlu0 %3802
        %v3804 = vsel %vm687, %v3801, %v3803
        %v3806 = vadd.f32 %v3714, %v3804
        %s3807 = sld [smem:[#allocation2 + $0xcd]]
        %v3808 = vstv %s3807
        %v3809 = vmul.f32 %v3137, %v3808
        %v3810 = vmul.f32 %v3138, %v3808
        %v3811 = vmul.f32 %v3139, %v3808
        %v3812 = vmul.f32 %v3140, %v3808
        %v3817 = vrot.slane %v3809, 3
        %v3818 = vrot.slane %v3811, 3
        %v3819 = vsel %vm3147, %v3817, %v3818
        %v3820 = vrot.slane %v3810, 3
        %v3821 = vrot.slane %v3812, 3
        %v3822 = vsel %vm3147, %v3820, %v3821
        %3823 = vrot.lane.b32.xlu0 %v3819, 107
        %v3824 = vpop.permute.xlu0 %3823
        %3825 = vrot.lane.b32.xlu0 %v3822, 107
        %v3826 = vpop.permute.xlu0 %3825
        %v3827 = vsel %vm687, %v3824, %v3826
        %v3829 = vadd.f32 %v3737, %v3827
        %s3830 = sld [smem:[#allocation2 + $0x2c]]
        %v3831 = vstv %s3830
        %v3832 = vmul.f32 %v3137, %v3831
        %v3833 = vmul.f32 %v3138, %v3831
        %v3834 = vmul.f32 %v3139, %v3831
        %v3835 = vmul.f32 %v3140, %v3831
        %v3840 = vrot.slane %v3832, 3
        %v3841 = vrot.slane %v3834, 3
        %v3842 = vsel %vm3147, %v3840, %v3841
        %v3843 = vrot.slane %v3833, 3
        %v3844 = vrot.slane %v3835, 3
        %v3845 = vsel %vm3147, %v3843, %v3844
        %3846 = vrot.lane.b32.xlu0 %v3842, 106
        %v3847 = vpop.permute.xlu0 %3846
        %3848 = vrot.lane.b32.xlu0 %v3845, 106
        %v3849 = vpop.permute.xlu0 %3848
        %v3850 = vsel %vm740, %v3847, %v3849
        %v3852 = vadd.f32 %v3760, %v3850
        %s3853 = sld [smem:[#allocation2 + $0x62]]
        %v3854 = vstv %s3853
        %v3855 = vmul.f32 %v3137, %v3854
        %v3856 = vmul.f32 %v3138, %v3854
        %v3857 = vmul.f32 %v3139, %v3854
        %v3858 = vmul.f32 %v3140, %v3854
        %v3863 = vrot.slane %v3855, 3
        %v3864 = vrot.slane %v3857, 3
        %v3865 = vsel %vm3147, %v3863, %v3864
        %v3866 = vrot.slane %v3856, 3
        %v3867 = vrot.slane %v3858, 3
        %v3868 = vsel %vm3147, %v3866, %v3867
        %3869 = vrot.lane.b32.xlu0 %v3865, 106
        %v3870 = vpop.permute.xlu0 %3869
        %3871 = vrot.lane.b32.xlu0 %v3868, 106
        %v3872 = vpop.permute.xlu0 %3871
        %v3873 = vsel %vm740, %v3870, %v3872
        %v3875 = vadd.f32 %v3783, %v3873
        %s3876 = sld [smem:[#allocation2 + $0x98]]
        %v3877 = vstv %s3876
        %v3878 = vmul.f32 %v3137, %v3877
        %v3879 = vmul.f32 %v3138, %v3877
        %v3880 = vmul.f32 %v3139, %v3877
        %v3881 = vmul.f32 %v3140, %v3877
        %v3886 = vrot.slane %v3878, 3
        %v3887 = vrot.slane %v3880, 3
        %v3888 = vsel %vm3147, %v3886, %v3887
        %v3889 = vrot.slane %v3879, 3
        %v3890 = vrot.slane %v3881, 3
        %v3891 = vsel %vm3147, %v3889, %v3890
        %3892 = vrot.lane.b32.xlu0 %v3888, 106
        %v3893 = vpop.permute.xlu0 %3892
        %3894 = vrot.lane.b32.xlu0 %v3891, 106
        %v3895 = vpop.permute.xlu0 %3894
        %v3896 = vsel %vm740, %v3893, %v3895
        %v3898 = vadd.f32 %v3806, %v3896
        %s3899 = sld [smem:[#allocation2 + $0xce]]
        %v3900 = vstv %s3899
        %v3901 = vmul.f32 %v3137, %v3900
        %v3902 = vmul.f32 %v3138, %v3900
        %v3903 = vmul.f32 %v3139, %v3900
        %v3904 = vmul.f32 %v3140, %v3900
        %v3909 = vrot.slane %v3901, 3
        %v3910 = vrot.slane %v3903, 3
        %v3911 = vsel %vm3147, %v3909, %v3910
        %v3912 = vrot.slane %v3902, 3
        %v3913 = vrot.slane %v3904, 3
        %v3914 = vsel %vm3147, %v3912, %v3913
        %3915 = vrot.lane.b32.xlu0 %v3911, 106
        %v3916 = vpop.permute.xlu0 %3915
        %3917 = vrot.lane.b32.xlu0 %v3914, 106
        %v3918 = vpop.permute.xlu0 %3917
        %v3919 = vsel %vm740, %v3916, %v3918
        %v3921 = vadd.f32 %v3829, %v3919
        %v3922 = vld [vmem:[%s333 + $0x10] sm:$0xf0]
        %v3923 = vld [vmem:[%s333 + $0x18] sm:$0xf0]
        %v3924 = vld [vmem:[%s333 + $0x20] sm:$0xf]
        %v3925 = vld [vmem:[%s333 + $0x28] sm:$0xf]
        %s3926 = sld [smem:[#allocation2 + $0x2d]]
        %v3927 = vstv %s3926
        %v3928 = vmul.f32 %v3922, %v3927
        %v3929 = vmul.f32 %v3924, %v3927
        %vm3932 = vcmask 1043456
        %v3933 = vrot.slane %v3928, 4
        %v3934 = vrot.slane %v3929, 4
        %v3935 = vsel %vm3932, %v3933, %v3934
        %v3937 = vadd.f32 %v3852, %v3935
        %s3938 = sld [smem:[#allocation2 + $0x63]]
        %v3939 = vstv %s3938
        %v3940 = vmul.f32 %v3922, %v3939
        %v3941 = vmul.f32 %v3924, %v3939
        %v3944 = vrot.slane %v3940, 4
        %v3945 = vrot.slane %v3941, 4
        %v3946 = vsel %vm3932, %v3944, %v3945
        %v3948 = vadd.f32 %v3875, %v3946
        %s3949 = sld [smem:[#allocation2 + $0x99]]
        %v3950 = vstv %s3949
        %v3951 = vmul.f32 %v3922, %v3950
        %v3952 = vmul.f32 %v3924, %v3950
        %v3955 = vrot.slane %v3951, 4
        %v3956 = vrot.slane %v3952, 4
        %v3957 = vsel %vm3932, %v3955, %v3956
        %v3959 = vadd.f32 %v3898, %v3957
        %s3960 = sld [smem:[#allocation2 + $0xcf]]
        %v3961 = vstv %s3960
        %v3962 = vmul.f32 %v3922, %v3961
        %v3963 = vmul.f32 %v3924, %v3961
        %v3966 = vrot.slane %v3962, 4
        %v3967 = vrot.slane %v3963, 4
        %v3968 = vsel %vm3932, %v3966, %v3967
        %v3970 = vadd.f32 %v3921, %v3968
        %s3971 = sld [smem:[#allocation2 + $0x2e]]
        %v3972 = vstv %s3971
        %v3973 = vmul.f32 %v3922, %v3972
        %v3974 = vmul.f32 %v3923, %v3972
        %v3975 = vmul.f32 %v3924, %v3972
        %v3976 = vmul.f32 %v3925, %v3972
        %v3981 = vrot.slane %v3973, 4
        %v3982 = vrot.slane %v3975, 4
        %v3983 = vsel %vm3932, %v3981, %v3982
        %v3984 = vrot.slane %v3974, 4
        %v3985 = vrot.slane %v3976, 4
        %v3986 = vsel %vm3932, %v3984, %v3985
        %3987 = vrot.lane.b32.xlu0 %v3983, 127
        %v3988 = vpop.permute.xlu0 %3987
        %3989 = vrot.lane.b32.xlu0 %v3986, 127
        %v3990 = vpop.permute.xlu0 %3989
        %v3991 = vsel %vm369, %v3988, %v3990
        %v3993 = vadd.f32 %v3937, %v3991
        %s3994 = sld [smem:[#allocation2 + $0x64]]
        %v3995 = vstv %s3994
        %v3996 = vmul.f32 %v3922, %v3995
        %v3997 = vmul.f32 %v3923, %v3995
        %v3998 = vmul.f32 %v3924, %v3995
        %v3999 = vmul.f32 %v3925, %v3995
        %v4004 = vrot.slane %v3996, 4
        %v4005 = vrot.slane %v3998, 4
        %v4006 = vsel %vm3932, %v4004, %v4005
        %v4007 = vrot.slane %v3997, 4
        %v4008 = vrot.slane %v3999, 4
        %v4009 = vsel %vm3932, %v4007, %v4008
        %4010 = vrot.lane.b32.xlu0 %v4006, 127
        %v4011 = vpop.permute.xlu0 %4010
        %4012 = vrot.lane.b32.xlu0 %v4009, 127
        %v4013 = vpop.permute.xlu0 %4012
        %v4014 = vsel %vm369, %v4011, %v4013
        %v4016 = vadd.f32 %v3948, %v4014
        %s4017 = sld [smem:[#allocation2 + $0x9a]]
        %v4018 = vstv %s4017
        %v4019 = vmul.f32 %v3922, %v4018
        %v4020 = vmul.f32 %v3923, %v4018
        %v4021 = vmul.f32 %v3924, %v4018
        %v4022 = vmul.f32 %v3925, %v4018
        %v4027 = vrot.slane %v4019, 4
        %v4028 = vrot.slane %v4021, 4
        %v4029 = vsel %vm3932, %v4027, %v4028
        %v4030 = vrot.slane %v4020, 4
        %v4031 = vrot.slane %v4022, 4
        %v4032 = vsel %vm3932, %v4030, %v4031
        %4033 = vrot.lane.b32.xlu0 %v4029, 127
        %v4034 = vpop.permute.xlu0 %4033
        %4035 = vrot.lane.b32.xlu0 %v4032, 127
        %v4036 = vpop.permute.xlu0 %4035
        %v4037 = vsel %vm369, %v4034, %v4036
        %v4039 = vadd.f32 %v3959, %v4037
        %s4040 = sld [smem:[#allocation2 + $0xd0]]
        %v4041 = vstv %s4040
        %v4042 = vmul.f32 %v3922, %v4041
        %v4043 = vmul.f32 %v3923, %v4041
        %v4044 = vmul.f32 %v3924, %v4041
        %v4045 = vmul.f32 %v3925, %v4041
        %v4050 = vrot.slane %v4042, 4
        %v4051 = vrot.slane %v4044, 4
        %v4052 = vsel %vm3932, %v4050, %v4051
        %v4053 = vrot.slane %v4043, 4
        %v4054 = vrot.slane %v4045, 4
        %v4055 = vsel %vm3932, %v4053, %v4054
        %4056 = vrot.lane.b32.xlu0 %v4052, 127
        %v4057 = vpop.permute.xlu0 %4056
        %4058 = vrot.lane.b32.xlu0 %v4055, 127
        %v4059 = vpop.permute.xlu0 %4058
        %v4060 = vsel %vm369, %v4057, %v4059
        %v4062 = vadd.f32 %v3970, %v4060
        %s4063 = sld [smem:[#allocation2 + $0x2f]]
        %v4064 = vstv %s4063
        %v4065 = vmul.f32 %v3922, %v4064
        %v4066 = vmul.f32 %v3923, %v4064
        %v4067 = vmul.f32 %v3924, %v4064
        %v4068 = vmul.f32 %v3925, %v4064
        %v4073 = vrot.slane %v4065, 4
        %v4074 = vrot.slane %v4067, 4
        %v4075 = vsel %vm3932, %v4073, %v4074
        %v4076 = vrot.slane %v4066, 4
        %v4077 = vrot.slane %v4068, 4
        %v4078 = vsel %vm3932, %v4076, %v4077
        %4079 = vrot.lane.b32.xlu0 %v4075, 126
        %v4080 = vpop.permute.xlu0 %4079
        %4081 = vrot.lane.b32.xlu0 %v4078, 126
        %v4082 = vpop.permute.xlu0 %4081
        %v4083 = vsel %vm422, %v4080, %v4082
        %v4085 = vadd.f32 %v3993, %v4083
        %s4086 = sld [smem:[#allocation2 + $0x65]]
        %v4087 = vstv %s4086
        %v4088 = vmul.f32 %v3922, %v4087
        %v4089 = vmul.f32 %v3923, %v4087
        %v4090 = vmul.f32 %v3924, %v4087
        %v4091 = vmul.f32 %v3925, %v4087
        %v4096 = vrot.slane %v4088, 4
        %v4097 = vrot.slane %v4090, 4
        %v4098 = vsel %vm3932, %v4096, %v4097
        %v4099 = vrot.slane %v4089, 4
        %v4100 = vrot.slane %v4091, 4
        %v4101 = vsel %vm3932, %v4099, %v4100
        %4102 = vrot.lane.b32.xlu0 %v4098, 126
        %v4103 = vpop.permute.xlu0 %4102
        %4104 = vrot.lane.b32.xlu0 %v4101, 126
        %v4105 = vpop.permute.xlu0 %4104
        %v4106 = vsel %vm422, %v4103, %v4105
        %v4108 = vadd.f32 %v4016, %v4106
        %s4109 = sld [smem:[#allocation2 + $0x9b]]
        %v4110 = vstv %s4109
        %v4111 = vmul.f32 %v3922, %v4110
        %v4112 = vmul.f32 %v3923, %v4110
        %v4113 = vmul.f32 %v3924, %v4110
        %v4114 = vmul.f32 %v3925, %v4110
        %v4119 = vrot.slane %v4111, 4
        %v4120 = vrot.slane %v4113, 4
        %v4121 = vsel %vm3932, %v4119, %v4120
        %v4122 = vrot.slane %v4112, 4
        %v4123 = vrot.slane %v4114, 4
        %v4124 = vsel %vm3932, %v4122, %v4123
        %4125 = vrot.lane.b32.xlu0 %v4121, 126
        %v4126 = vpop.permute.xlu0 %4125
        %4127 = vrot.lane.b32.xlu0 %v4124, 126
        %v4128 = vpop.permute.xlu0 %4127
        %v4129 = vsel %vm422, %v4126, %v4128
        %v4131 = vadd.f32 %v4039, %v4129
        %s4132 = sld [smem:[#allocation2 + $0xd1]]
        %v4133 = vstv %s4132
        %v4134 = vmul.f32 %v3922, %v4133
        %v4135 = vmul.f32 %v3923, %v4133
        %v4136 = vmul.f32 %v3924, %v4133
        %v4137 = vmul.f32 %v3925, %v4133
        %v4142 = vrot.slane %v4134, 4
        %v4143 = vrot.slane %v4136, 4
        %v4144 = vsel %vm3932, %v4142, %v4143
        %v4145 = vrot.slane %v4135, 4
        %v4146 = vrot.slane %v4137, 4
        %v4147 = vsel %vm3932, %v4145, %v4146
        %4148 = vrot.lane.b32.xlu0 %v4144, 126
        %v4149 = vpop.permute.xlu0 %4148
        %4150 = vrot.lane.b32.xlu0 %v4147, 126
        %v4151 = vpop.permute.xlu0 %4150
        %v4152 = vsel %vm422, %v4149, %v4151
        %v4154 = vadd.f32 %v4062, %v4152
        %s4155 = sld [smem:[#allocation2 + $0x30]]
        %v4156 = vstv %s4155
        %v4157 = vmul.f32 %v3922, %v4156
        %v4158 = vmul.f32 %v3923, %v4156
        %v4159 = vmul.f32 %v3924, %v4156
        %v4160 = vmul.f32 %v3925, %v4156
        %v4165 = vrot.slane %v4157, 4
        %v4166 = vrot.slane %v4159, 4
        %v4167 = vsel %vm3932, %v4165, %v4166
        %v4168 = vrot.slane %v4158, 4
        %v4169 = vrot.slane %v4160, 4
        %v4170 = vsel %vm3932, %v4168, %v4169
        %4171 = vrot.lane.b32.xlu0 %v4167, 118
        %v4172 = vpop.permute.xlu0 %4171
        %4173 = vrot.lane.b32.xlu0 %v4170, 118
        %v4174 = vpop.permute.xlu0 %4173
        %v4175 = vsel %vm475, %v4172, %v4174
        %v4177 = vadd.f32 %v4085, %v4175
        %s4178 = sld [smem:[#allocation2 + $0x66]]
        %v4179 = vstv %s4178
        %v4180 = vmul.f32 %v3922, %v4179
        %v4181 = vmul.f32 %v3923, %v4179
        %v4182 = vmul.f32 %v3924, %v4179
        %v4183 = vmul.f32 %v3925, %v4179
        %v4188 = vrot.slane %v4180, 4
        %v4189 = vrot.slane %v4182, 4
        %v4190 = vsel %vm3932, %v4188, %v4189
        %v4191 = vrot.slane %v4181, 4
        %v4192 = vrot.slane %v4183, 4
        %v4193 = vsel %vm3932, %v4191, %v4192
        %4194 = vrot.lane.b32.xlu0 %v4190, 118
        %v4195 = vpop.permute.xlu0 %4194
        %4196 = vrot.lane.b32.xlu0 %v4193, 118
        %v4197 = vpop.permute.xlu0 %4196
        %v4198 = vsel %vm475, %v4195, %v4197
        %v4200 = vadd.f32 %v4108, %v4198
        %s4201 = sld [smem:[#allocation2 + $0x9c]]
        %v4202 = vstv %s4201
        %v4203 = vmul.f32 %v3922, %v4202
        %v4204 = vmul.f32 %v3923, %v4202
        %v4205 = vmul.f32 %v3924, %v4202
        %v4206 = vmul.f32 %v3925, %v4202
        %v4211 = vrot.slane %v4203, 4
        %v4212 = vrot.slane %v4205, 4
        %v4213 = vsel %vm3932, %v4211, %v4212
        %v4214 = vrot.slane %v4204, 4
        %v4215 = vrot.slane %v4206, 4
        %v4216 = vsel %vm3932, %v4214, %v4215
        %4217 = vrot.lane.b32.xlu0 %v4213, 118
        %v4218 = vpop.permute.xlu0 %4217
        %4219 = vrot.lane.b32.xlu0 %v4216, 118
        %v4220 = vpop.permute.xlu0 %4219
        %v4221 = vsel %vm475, %v4218, %v4220
        %v4223 = vadd.f32 %v4131, %v4221
        %s4224 = sld [smem:[#allocation2 + $0xd2]]
        %v4225 = vstv %s4224
        %v4226 = vmul.f32 %v3922, %v4225
        %v4227 = vmul.f32 %v3923, %v4225
        %v4228 = vmul.f32 %v3924, %v4225
        %v4229 = vmul.f32 %v3925, %v4225
        %v4234 = vrot.slane %v4226, 4
        %v4235 = vrot.slane %v4228, 4
        %v4236 = vsel %vm3932, %v4234, %v4235
        %v4237 = vrot.slane %v4227, 4
        %v4238 = vrot.slane %v4229, 4
        %v4239 = vsel %vm3932, %v4237, %v4238
        %4240 = vrot.lane.b32.xlu0 %v4236, 118
        %v4241 = vpop.permute.xlu0 %4240
        %4242 = vrot.lane.b32.xlu0 %v4239, 118
        %v4243 = vpop.permute.xlu0 %4242
        %v4244 = vsel %vm475, %v4241, %v4243
        %v4246 = vadd.f32 %v4154, %v4244
        %s4247 = sld [smem:[#allocation2 + $0x31]]
        %v4248 = vstv %s4247
        %v4249 = vmul.f32 %v3922, %v4248
        %v4250 = vmul.f32 %v3923, %v4248
        %v4251 = vmul.f32 %v3924, %v4248
        %v4252 = vmul.f32 %v3925, %v4248
        %v4257 = vrot.slane %v4249, 4
        %v4258 = vrot.slane %v4251, 4
        %v4259 = vsel %vm3932, %v4257, %v4258
        %v4260 = vrot.slane %v4250, 4
        %v4261 = vrot.slane %v4252, 4
        %v4262 = vsel %vm3932, %v4260, %v4261
        %4263 = vrot.lane.b32.xlu0 %v4259, 117
        %v4264 = vpop.permute.xlu0 %4263
        %4265 = vrot.lane.b32.xlu0 %v4262, 117
        %v4266 = vpop.permute.xlu0 %4265
        %v4267 = vsel %vm528, %v4264, %v4266
        %v4269 = vadd.f32 %v4177, %v4267
        %s4270 = sld [smem:[#allocation2 + $0x67]]
        %v4271 = vstv %s4270
        %v4272 = vmul.f32 %v3922, %v4271
        %v4273 = vmul.f32 %v3923, %v4271
        %v4274 = vmul.f32 %v3924, %v4271
        %v4275 = vmul.f32 %v3925, %v4271
        %v4280 = vrot.slane %v4272, 4
        %v4281 = vrot.slane %v4274, 4
        %v4282 = vsel %vm3932, %v4280, %v4281
        %v4283 = vrot.slane %v4273, 4
        %v4284 = vrot.slane %v4275, 4
        %v4285 = vsel %vm3932, %v4283, %v4284
        %4286 = vrot.lane.b32.xlu0 %v4282, 117
        %v4287 = vpop.permute.xlu0 %4286
        %4288 = vrot.lane.b32.xlu0 %v4285, 117
        %v4289 = vpop.permute.xlu0 %4288
        %v4290 = vsel %vm528, %v4287, %v4289
        %v4292 = vadd.f32 %v4200, %v4290
        %s4293 = sld [smem:[#allocation2 + $0x9d]]
        %v4294 = vstv %s4293
        %v4295 = vmul.f32 %v3922, %v4294
        %v4296 = vmul.f32 %v3923, %v4294
        %v4297 = vmul.f32 %v3924, %v4294
        %v4298 = vmul.f32 %v3925, %v4294
        %v4303 = vrot.slane %v4295, 4
        %v4304 = vrot.slane %v4297, 4
        %v4305 = vsel %vm3932, %v4303, %v4304
        %v4306 = vrot.slane %v4296, 4
        %v4307 = vrot.slane %v4298, 4
        %v4308 = vsel %vm3932, %v4306, %v4307
        %4309 = vrot.lane.b32.xlu0 %v4305, 117
        %v4310 = vpop.permute.xlu0 %4309
        %4311 = vrot.lane.b32.xlu0 %v4308, 117
        %v4312 = vpop.permute.xlu0 %4311
        %v4313 = vsel %vm528, %v4310, %v4312
        %v4315 = vadd.f32 %v4223, %v4313
        %s4316 = sld [smem:[#allocation2 + $0xd3]]
        %v4317 = vstv %s4316
        %v4318 = vmul.f32 %v3922, %v4317
        %v4319 = vmul.f32 %v3923, %v4317
        %v4320 = vmul.f32 %v3924, %v4317
        %v4321 = vmul.f32 %v3925, %v4317
        %v4326 = vrot.slane %v4318, 4
        %v4327 = vrot.slane %v4320, 4
        %v4328 = vsel %vm3932, %v4326, %v4327
        %v4329 = vrot.slane %v4319, 4
        %v4330 = vrot.slane %v4321, 4
        %v4331 = vsel %vm3932, %v4329, %v4330
        %4332 = vrot.lane.b32.xlu0 %v4328, 117
        %v4333 = vpop.permute.xlu0 %4332
        %4334 = vrot.lane.b32.xlu0 %v4331, 117
        %v4335 = vpop.permute.xlu0 %4334
        %v4336 = vsel %vm528, %v4333, %v4335
        %v4338 = vadd.f32 %v4246, %v4336
        %s4339 = sld [smem:[#allocation2 + $0x32]]
        %v4340 = vstv %s4339
        %v4341 = vmul.f32 %v3922, %v4340
        %v4342 = vmul.f32 %v3923, %v4340
        %v4343 = vmul.f32 %v3924, %v4340
        %v4344 = vmul.f32 %v3925, %v4340
        %v4349 = vrot.slane %v4341, 4
        %v4350 = vrot.slane %v4343, 4
        %v4351 = vsel %vm3932, %v4349, %v4350
        %v4352 = vrot.slane %v4342, 4
        %v4353 = vrot.slane %v4344, 4
        %v4354 = vsel %vm3932, %v4352, %v4353
        %4355 = vrot.lane.b32.xlu0 %v4351, 116
        %v4356 = vpop.permute.xlu0 %4355
        %4357 = vrot.lane.b32.xlu0 %v4354, 116
        %v4358 = vpop.permute.xlu0 %4357
        %v4359 = vsel %vm581, %v4356, %v4358
        %v4361 = vadd.f32 %v4269, %v4359
        %s4362 = sld [smem:[#allocation2 + $0x68]]
        %v4363 = vstv %s4362
        %v4364 = vmul.f32 %v3922, %v4363
        %v4365 = vmul.f32 %v3923, %v4363
        %v4366 = vmul.f32 %v3924, %v4363
        %v4367 = vmul.f32 %v3925, %v4363
        %v4372 = vrot.slane %v4364, 4
        %v4373 = vrot.slane %v4366, 4
        %v4374 = vsel %vm3932, %v4372, %v4373
        %v4375 = vrot.slane %v4365, 4
        %v4376 = vrot.slane %v4367, 4
        %v4377 = vsel %vm3932, %v4375, %v4376
        %4378 = vrot.lane.b32.xlu0 %v4374, 116
        %v4379 = vpop.permute.xlu0 %4378
        %4380 = vrot.lane.b32.xlu0 %v4377, 116
        %v4381 = vpop.permute.xlu0 %4380
        %v4382 = vsel %vm581, %v4379, %v4381
        %v4384 = vadd.f32 %v4292, %v4382
        %s4385 = sld [smem:[#allocation2 + $0x9e]]
        %v4386 = vstv %s4385
        %v4387 = vmul.f32 %v3922, %v4386
        %v4388 = vmul.f32 %v3923, %v4386
        %v4389 = vmul.f32 %v3924, %v4386
        %v4390 = vmul.f32 %v3925, %v4386
        %v4395 = vrot.slane %v4387, 4
        %v4396 = vrot.slane %v4389, 4
        %v4397 = vsel %vm3932, %v4395, %v4396
        %v4398 = vrot.slane %v4388, 4
        %v4399 = vrot.slane %v4390, 4
        %v4400 = vsel %vm3932, %v4398, %v4399
        %4401 = vrot.lane.b32.xlu0 %v4397, 116
        %v4402 = vpop.permute.xlu0 %4401
        %4403 = vrot.lane.b32.xlu0 %v4400, 116
        %v4404 = vpop.permute.xlu0 %4403
        %v4405 = vsel %vm581, %v4402, %v4404
        %v4407 = vadd.f32 %v4315, %v4405
        %s4408 = sld [smem:[#allocation2 + $0xd4]]
        %v4409 = vstv %s4408
        %v4410 = vmul.f32 %v3922, %v4409
        %v4411 = vmul.f32 %v3923, %v4409
        %v4412 = vmul.f32 %v3924, %v4409
        %v4413 = vmul.f32 %v3925, %v4409
        %v4418 = vrot.slane %v4410, 4
        %v4419 = vrot.slane %v4412, 4
        %v4420 = vsel %vm3932, %v4418, %v4419
        %v4421 = vrot.slane %v4411, 4
        %v4422 = vrot.slane %v4413, 4
        %v4423 = vsel %vm3932, %v4421, %v4422
        %4424 = vrot.lane.b32.xlu0 %v4420, 116
        %v4425 = vpop.permute.xlu0 %4424
        %4426 = vrot.lane.b32.xlu0 %v4423, 116
        %v4427 = vpop.permute.xlu0 %4426
        %v4428 = vsel %vm581, %v4425, %v4427
        %v4430 = vadd.f32 %v4338, %v4428
        %s4431 = sld [smem:[#allocation2 + $0x33]]
        %v4432 = vstv %s4431
        %v4433 = vmul.f32 %v3922, %v4432
        %v4434 = vmul.f32 %v3923, %v4432
        %v4435 = vmul.f32 %v3924, %v4432
        %v4436 = vmul.f32 %v3925, %v4432
        %v4441 = vrot.slane %v4433, 4
        %v4442 = vrot.slane %v4435, 4
        %v4443 = vsel %vm3932, %v4441, %v4442
        %v4444 = vrot.slane %v4434, 4
        %v4445 = vrot.slane %v4436, 4
        %v4446 = vsel %vm3932, %v4444, %v4445
        %4447 = vrot.lane.b32.xlu0 %v4443, 108
        %v4448 = vpop.permute.xlu0 %4447
        %4449 = vrot.lane.b32.xlu0 %v4446, 108
        %v4450 = vpop.permute.xlu0 %4449
        %v4451 = vsel %vm634, %v4448, %v4450
        %v4453 = vadd.f32 %v4361, %v4451
        %s4454 = sld [smem:[#allocation2 + $0x69]]
        %v4455 = vstv %s4454
        %v4456 = vmul.f32 %v3922, %v4455
        %v4457 = vmul.f32 %v3923, %v4455
        %v4458 = vmul.f32 %v3924, %v4455
        %v4459 = vmul.f32 %v3925, %v4455
        %v4464 = vrot.slane %v4456, 4
        %v4465 = vrot.slane %v4458, 4
        %v4466 = vsel %vm3932, %v4464, %v4465
        %v4467 = vrot.slane %v4457, 4
        %v4468 = vrot.slane %v4459, 4
        %v4469 = vsel %vm3932, %v4467, %v4468
        %4470 = vrot.lane.b32.xlu0 %v4466, 108
        %v4471 = vpop.permute.xlu0 %4470
        %4472 = vrot.lane.b32.xlu0 %v4469, 108
        %v4473 = vpop.permute.xlu0 %4472
        %v4474 = vsel %vm634, %v4471, %v4473
        %v4476 = vadd.f32 %v4384, %v4474
        %s4477 = sld [smem:[#allocation2 + $0x9f]]
        %v4478 = vstv %s4477
        %v4479 = vmul.f32 %v3922, %v4478
        %v4480 = vmul.f32 %v3923, %v4478
        %v4481 = vmul.f32 %v3924, %v4478
        %v4482 = vmul.f32 %v3925, %v4478
        %v4487 = vrot.slane %v4479, 4
        %v4488 = vrot.slane %v4481, 4
        %v4489 = vsel %vm3932, %v4487, %v4488
        %v4490 = vrot.slane %v4480, 4
        %v4491 = vrot.slane %v4482, 4
        %v4492 = vsel %vm3932, %v4490, %v4491
        %4493 = vrot.lane.b32.xlu0 %v4489, 108
        %v4494 = vpop.permute.xlu0 %4493
        %4495 = vrot.lane.b32.xlu0 %v4492, 108
        %v4496 = vpop.permute.xlu0 %4495
        %v4497 = vsel %vm634, %v4494, %v4496
        %v4499 = vadd.f32 %v4407, %v4497
        %s4500 = sld [smem:[#allocation2 + $0xd5]]
        %v4501 = vstv %s4500
        %v4502 = vmul.f32 %v3922, %v4501
        %v4503 = vmul.f32 %v3923, %v4501
        %v4504 = vmul.f32 %v3924, %v4501
        %v4505 = vmul.f32 %v3925, %v4501
        %v4510 = vrot.slane %v4502, 4
        %v4511 = vrot.slane %v4504, 4
        %v4512 = vsel %vm3932, %v4510, %v4511
        %v4513 = vrot.slane %v4503, 4
        %v4514 = vrot.slane %v4505, 4
        %v4515 = vsel %vm3932, %v4513, %v4514
        %4516 = vrot.lane.b32.xlu0 %v4512, 108
        %v4517 = vpop.permute.xlu0 %4516
        %4518 = vrot.lane.b32.xlu0 %v4515, 108
        %v4519 = vpop.permute.xlu0 %4518
        %v4520 = vsel %vm634, %v4517, %v4519
        %v4522 = vadd.f32 %v4430, %v4520
        %s4523 = sld [smem:[#allocation2 + $0x34]]
        %v4524 = vstv %s4523
        %v4525 = vmul.f32 %v3922, %v4524
        %v4526 = vmul.f32 %v3923, %v4524
        %v4527 = vmul.f32 %v3924, %v4524
        %v4528 = vmul.f32 %v3925, %v4524
        %v4533 = vrot.slane %v4525, 4
        %v4534 = vrot.slane %v4527, 4
        %v4535 = vsel %vm3932, %v4533, %v4534
        %v4536 = vrot.slane %v4526, 4
        %v4537 = vrot.slane %v4528, 4
        %v4538 = vsel %vm3932, %v4536, %v4537
        %4539 = vrot.lane.b32.xlu0 %v4535, 107
        %v4540 = vpop.permute.xlu0 %4539
        %4541 = vrot.lane.b32.xlu0 %v4538, 107
        %v4542 = vpop.permute.xlu0 %4541
        %v4543 = vsel %vm687, %v4540, %v4542
        %v4545 = vadd.f32 %v4453, %v4543
        %s4546 = sld [smem:[#allocation2 + $0x6a]]
        %v4547 = vstv %s4546
        %v4548 = vmul.f32 %v3922, %v4547
        %v4549 = vmul.f32 %v3923, %v4547
        %v4550 = vmul.f32 %v3924, %v4547
        %v4551 = vmul.f32 %v3925, %v4547
        %v4556 = vrot.slane %v4548, 4
        %v4557 = vrot.slane %v4550, 4
        %v4558 = vsel %vm3932, %v4556, %v4557
        %v4559 = vrot.slane %v4549, 4
        %v4560 = vrot.slane %v4551, 4
        %v4561 = vsel %vm3932, %v4559, %v4560
        %4562 = vrot.lane.b32.xlu0 %v4558, 107
        %v4563 = vpop.permute.xlu0 %4562
        %4564 = vrot.lane.b32.xlu0 %v4561, 107
        %v4565 = vpop.permute.xlu0 %4564
        %v4566 = vsel %vm687, %v4563, %v4565
        %v4568 = vadd.f32 %v4476, %v4566
        %s4569 = sld [smem:[#allocation2 + $0xa0]]
        %v4570 = vstv %s4569
        %v4571 = vmul.f32 %v3922, %v4570
        %v4572 = vmul.f32 %v3923, %v4570
        %v4573 = vmul.f32 %v3924, %v4570
        %v4574 = vmul.f32 %v3925, %v4570
        %v4579 = vrot.slane %v4571, 4
        %v4580 = vrot.slane %v4573, 4
        %v4581 = vsel %vm3932, %v4579, %v4580
        %v4582 = vrot.slane %v4572, 4
        %v4583 = vrot.slane %v4574, 4
        %v4584 = vsel %vm3932, %v4582, %v4583
        %4585 = vrot.lane.b32.xlu0 %v4581, 107
        %v4586 = vpop.permute.xlu0 %4585
        %4587 = vrot.lane.b32.xlu0 %v4584, 107
        %v4588 = vpop.permute.xlu0 %4587
        %v4589 = vsel %vm687, %v4586, %v4588
        %v4591 = vadd.f32 %v4499, %v4589
        %s4592 = sld [smem:[#allocation2 + $0xd6]]
        %v4593 = vstv %s4592
        %v4594 = vmul.f32 %v3922, %v4593
        %v4595 = vmul.f32 %v3923, %v4593
        %v4596 = vmul.f32 %v3924, %v4593
        %v4597 = vmul.f32 %v3925, %v4593
        %v4602 = vrot.slane %v4594, 4
        %v4603 = vrot.slane %v4596, 4
        %v4604 = vsel %vm3932, %v4602, %v4603
        %v4605 = vrot.slane %v4595, 4
        %v4606 = vrot.slane %v4597, 4
        %v4607 = vsel %vm3932, %v4605, %v4606
        %4608 = vrot.lane.b32.xlu0 %v4604, 107
        %v4609 = vpop.permute.xlu0 %4608
        %4610 = vrot.lane.b32.xlu0 %v4607, 107
        %v4611 = vpop.permute.xlu0 %4610
        %v4612 = vsel %vm687, %v4609, %v4611
        %v4614 = vadd.f32 %v4522, %v4612
        %s4615 = sld [smem:[#allocation2 + $0x35]]
        %v4616 = vstv %s4615
        %v4617 = vmul.f32 %v3922, %v4616
        %v4618 = vmul.f32 %v3923, %v4616
        %v4619 = vmul.f32 %v3924, %v4616
        %v4620 = vmul.f32 %v3925, %v4616
        %v4625 = vrot.slane %v4617, 4
        %v4626 = vrot.slane %v4619, 4
        %v4627 = vsel %vm3932, %v4625, %v4626
        %v4628 = vrot.slane %v4618, 4
        %v4629 = vrot.slane %v4620, 4
        %v4630 = vsel %vm3932, %v4628, %v4629
        %4631 = vrot.lane.b32.xlu0 %v4627, 106
        %v4632 = vpop.permute.xlu0 %4631
        %4633 = vrot.lane.b32.xlu0 %v4630, 106
        %v4634 = vpop.permute.xlu0 %4633
        %v4635 = vsel %vm740, %v4632, %v4634
        %v4637 = vadd.f32 %v4545, %v4635
        %s4638 = sld [smem:[#allocation2 + $0x6b]]
        %v4639 = vstv %s4638
        %v4640 = vmul.f32 %v3922, %v4639
        %v4641 = vmul.f32 %v3923, %v4639
        %v4642 = vmul.f32 %v3924, %v4639
        %v4643 = vmul.f32 %v3925, %v4639
        %v4648 = vrot.slane %v4640, 4
        %v4649 = vrot.slane %v4642, 4
        %v4650 = vsel %vm3932, %v4648, %v4649
        %v4651 = vrot.slane %v4641, 4
        %v4652 = vrot.slane %v4643, 4
        %v4653 = vsel %vm3932, %v4651, %v4652
        %4654 = vrot.lane.b32.xlu0 %v4650, 106
        %v4655 = vpop.permute.xlu0 %4654
        %4656 = vrot.lane.b32.xlu0 %v4653, 106
        %v4657 = vpop.permute.xlu0 %4656
        %v4658 = vsel %vm740, %v4655, %v4657
        %v4660 = vadd.f32 %v4568, %v4658
        %s4661 = sld [smem:[#allocation2 + $0xa1]]
        %v4662 = vstv %s4661
        %v4663 = vmul.f32 %v3922, %v4662
        %v4664 = vmul.f32 %v3923, %v4662
        %v4665 = vmul.f32 %v3924, %v4662
        %v4666 = vmul.f32 %v3925, %v4662
        %v4671 = vrot.slane %v4663, 4
        %v4672 = vrot.slane %v4665, 4
        %v4673 = vsel %vm3932, %v4671, %v4672
        %v4674 = vrot.slane %v4664, 4
        %v4675 = vrot.slane %v4666, 4
        %v4676 = vsel %vm3932, %v4674, %v4675
        %4677 = vrot.lane.b32.xlu0 %v4673, 106
        %v4678 = vpop.permute.xlu0 %4677
        %4679 = vrot.lane.b32.xlu0 %v4676, 106
        %v4680 = vpop.permute.xlu0 %4679
        %v4681 = vsel %vm740, %v4678, %v4680
        %v4683 = vadd.f32 %v4591, %v4681
        %s4684 = sld [smem:[#allocation2 + $0xd7]]
        %v4685 = vstv %s4684
        %v4686 = vmul.f32 %v3922, %v4685
        %v4687 = vmul.f32 %v3923, %v4685
        %v4688 = vmul.f32 %v3924, %v4685
        %v4689 = vmul.f32 %v3925, %v4685
        %v4694 = vrot.slane %v4686, 4
        %v4695 = vrot.slane %v4688, 4
        %v4696 = vsel %vm3932, %v4694, %v4695
        %v4697 = vrot.slane %v4687, 4
        %v4698 = vrot.slane %v4689, 4
        %v4699 = vsel %vm3932, %v4697, %v4698
        %4700 = vrot.lane.b32.xlu0 %v4696, 106
        %v4701 = vpop.permute.xlu0 %4700
        %4702 = vrot.lane.b32.xlu0 %v4699, 106
        %v4703 = vpop.permute.xlu0 %4702
        %v4704 = vsel %vm740, %v4701, %v4703
        %v4706 = vadd.f32 %v4614, %v4704
        %v4707 = vmul.f32 %v4637, %v344
        %4708 = vadd.xlane.f32.xlu0 %v4707
        %v4709 = vpop.xlane.xlu0 %4708
        %v4710 = vrot.slane %v4709, 4
        %v4711 = vadd.f32 %v4709, %v4710
        %v4712 = vrot.slane %v4711, 2
        %v4713 = vadd.f32 %v4711, %v4712
        %v4714 = vrot.slane %v4713, 1
        %v4715 = vadd.f32 %v4713, %v4714
        %s4716 = vtos %v4715
        %s4717 = smul.f32 %s4716, 0.001953125
        %v4718 = vmul.f32 %v4707, %v4707
        %4719 = vadd.xlane.f32.xlu0 %v4718
        %v4720 = vpop.xlane.xlu0 %4719
        %v4721 = vrot.slane %v4720, 4
        %v4722 = vadd.f32 %v4720, %v4721
        %v4723 = vrot.slane %v4722, 2
        %v4724 = vadd.f32 %v4722, %v4723
        %v4725 = vrot.slane %v4724, 1
        %v4726 = vadd.f32 %v4724, %v4725
        %s4727 = vtos %v4726
        %s4728 = smul.f32 %s4727, 0.001953125
        %s4729 = smul.f32 %s4717, %s4717
        %s4730 = ssub.f32 %s4728, %s4729
        %v4731 = vstv %s4717
        %v4732 = vsub.f32 %v4637, %v4731
        %s4733 = sadd.f32 %s4730, 1e-05
        %v4734 = vstv %s4733
        %v4735 = vrsqrt.pop %v4734
        %s4736 = vtos %v4735
        %v4737 = vstv %s4736
        %v4738 = vmul.f32 %v4732, %v4737
        %v4739 = vmul.f32 %v4738, 0.01
        %v4740 = vmax.f32 %v4738, %v4739
        %4741 = vst [vmem:[%s338] sm:$0xff] %v4740
        %s4742 = sld [smem:[#allocation4]]
        %v4743 = vstv %s4742
        %v4744 = vmul.f32 %v4740, %v4743
        %v4745 = vmul.f32 %v4660, %v344
        %4746 = vadd.xlane.f32.xlu0 %v4745
        %v4747 = vpop.xlane.xlu0 %4746
        %v4748 = vrot.slane %v4747, 4
        %v4749 = vadd.f32 %v4747, %v4748
        %v4750 = vrot.slane %v4749, 2
        %v4751 = vadd.f32 %v4749, %v4750
        %v4752 = vrot.slane %v4751, 1
        %v4753 = vadd.f32 %v4751, %v4752
        %s4754 = vtos %v4753
        %s4755 = smul.f32 %s4754, 0.001953125
        %v4756 = vmul.f32 %v4745, %v4745
        %4757 = vadd.xlane.f32.xlu0 %v4756
        %v4758 = vpop.xlane.xlu0 %4757
        %v4759 = vrot.slane %v4758, 4
        %v4760 = vadd.f32 %v4758, %v4759
        %v4761 = vrot.slane %v4760, 2
        %v4762 = vadd.f32 %v4760, %v4761
        %v4763 = vrot.slane %v4762, 1
        %v4764 = vadd.f32 %v4762, %v4763
        %s4765 = vtos %v4764
        %s4766 = smul.f32 %s4765, 0.001953125
        %s4767 = smul.f32 %s4755, %s4755
        %s4768 = ssub.f32 %s4766, %s4767
        %v4769 = vstv %s4755
        %v4770 = vsub.f32 %v4660, %v4769
        %s4771 = sadd.f32 %s4768, 1e-05
        %v4772 = vstv %s4771
        %v4773 = vrsqrt.pop %v4772
        %s4774 = vtos %v4773
        %v4775 = vstv %s4774
        %v4776 = vmul.f32 %v4770, %v4775
        %v4777 = vmul.f32 %v4776, 0.01
        %v4778 = vmax.f32 %v4776, %v4777
        %s4779 = scalar_lea.vmem %s338, 8
        %4780 = vst [vmem:[%s4779] sm:$0xff] %v4778
        %s4781 = sld [smem:[#allocation4 + $0x1]]
        %v4782 = vstv %s4781
        %v4783 = vmul.f32 %v4778, %v4782
        %v4784 = vadd.f32 %v4744, %v4783
        %v4785 = vmul.f32 %v4683, %v344
        %4786 = vadd.xlane.f32.xlu0 %v4785
        %v4787 = vpop.xlane.xlu0 %4786
        %v4788 = vrot.slane %v4787, 4
        %v4789 = vadd.f32 %v4787, %v4788
        %v4790 = vrot.slane %v4789, 2
        %v4791 = vadd.f32 %v4789, %v4790
        %v4792 = vrot.slane %v4791, 1
        %v4793 = vadd.f32 %v4791, %v4792
        %s4794 = vtos %v4793
        %s4795 = smul.f32 %s4794, 0.001953125
        %v4796 = vmul.f32 %v4785, %v4785
        %4797 = vadd.xlane.f32.xlu0 %v4796
        %v4798 = vpop.xlane.xlu0 %4797
        %v4799 = vrot.slane %v4798, 4
        %v4800 = vadd.f32 %v4798, %v4799
        %v4801 = vrot.slane %v4800, 2
        %v4802 = vadd.f32 %v4800, %v4801
        %v4803 = vrot.slane %v4802, 1
        %v4804 = vadd.f32 %v4802, %v4803
        %s4805 = vtos %v4804
        %s4806 = smul.f32 %s4805, 0.001953125
        %s4807 = smul.f32 %s4795, %s4795
        %s4808 = ssub.f32 %s4806, %s4807
        %v4809 = vstv %s4795
        %v4810 = vsub.f32 %v4683, %v4809
        %s4811 = sadd.f32 %s4808, 1e-05
        %v4812 = vstv %s4811
        %v4813 = vrsqrt.pop %v4812
        %s4814 = vtos %v4813
        %v4815 = vstv %s4814
        %v4816 = vmul.f32 %v4810, %v4815
        %v4817 = vmul.f32 %v4816, 0.01
        %v4818 = vmax.f32 %v4816, %v4817
        %s4819 = scalar_lea.vmem %s338, 16
        %4820 = vst [vmem:[%s4819] sm:$0xff] %v4818
        %s4821 = sld [smem:[#allocation4 + $0x2]]
        %v4822 = vstv %s4821
        %v4823 = vmul.f32 %v4818, %v4822
        %v4824 = vadd.f32 %v4784, %v4823
        %v4825 = vmul.f32 %v4706, %v344
        %4826 = vadd.xlane.f32.xlu0 %v4825
        %v4827 = vpop.xlane.xlu0 %4826
        %v4828 = vrot.slane %v4827, 4
        %v4829 = vadd.f32 %v4827, %v4828
        %v4830 = vrot.slane %v4829, 2
        %v4831 = vadd.f32 %v4829, %v4830
        %v4832 = vrot.slane %v4831, 1
        %v4833 = vadd.f32 %v4831, %v4832
        %s4834 = vtos %v4833
        %s4835 = smul.f32 %s4834, 0.001953125
        %v4836 = vmul.f32 %v4825, %v4825
        %4837 = vadd.xlane.f32.xlu0 %v4836
        %v4838 = vpop.xlane.xlu0 %4837
        %v4839 = vrot.slane %v4838, 4
        %v4840 = vadd.f32 %v4838, %v4839
        %v4841 = vrot.slane %v4840, 2
        %v4842 = vadd.f32 %v4840, %v4841
        %v4843 = vrot.slane %v4842, 1
        %v4844 = vadd.f32 %v4842, %v4843
        %s4845 = vtos %v4844
        %s4846 = smul.f32 %s4845, 0.001953125
        %s4847 = smul.f32 %s4835, %s4835
        %s4848 = ssub.f32 %s4846, %s4847
        %v4849 = vstv %s4835
        %v4850 = vsub.f32 %v4706, %v4849
        %s4851 = sadd.f32 %s4848, 1e-05
        %v4852 = vstv %s4851
        %v4853 = vrsqrt.pop %v4852
        %s4854 = vtos %v4853
        %v4855 = vstv %s4854
        %v4856 = vmul.f32 %v4850, %v4855
        %v4857 = vmul.f32 %v4856, 0.01
        %v4858 = vmax.f32 %v4856, %v4857
        %s4859 = scalar_lea.vmem %s338, 24
        %4860 = vst [vmem:[%s4859] sm:$0xff] %v4858
        %s4861 = sld [smem:[#allocation4 + $0x3]]
        %v4862 = vstv %s4861
        %v4863 = vmul.f32 %v4858, %v4862
        %v4864 = vadd.f32 %v4824, %v4863
        %v4865 = vxor.u32 %v4864, 2147483648
        %v4866 = vmul.f32 %v4865, 1.442695
        %v4867 = vpow.pop %v4866
        %v4868 = vadd.f32 %v4867, 1.0
        %v4869 = vrcp.pop %v4868
        %v4870 = vmul.f32 1.0, %v4869
        %s4871 = sld [smem:[#allocation7]]
        %v4872 = vstv %s4871
        %s4873 = sld [smem:[#allocation7 + $0x1]]
        %v4874 = vstv %s4873
        %v4875 = vld [vmem:[%s338] sm:$0xff]
        %v4876 = vmul.f32 %v4875, %v4870
        %4877 = vst [vmem:[%s338] sm:$0xff] %v4876
        %s4878 = sld [smem:[#allocation6]]
        %v4879 = vstv %s4878
        %v4880 = vmul.f32 %v4876, %v4879
        %v4881 = vadd.f32 %v4872, %v4880
        %s4882 = sld [smem:[#allocation6 + $0x4]]
        %v4883 = vstv %s4882
        %v4884 = vmul.f32 %v4876, %v4883
        %v4885 = vadd.f32 %v4874, %v4884
        %v4886 = vld [vmem:[%s4779] sm:$0xff]
        %v4887 = vmul.f32 %v4886, %v4870
        %4888 = vst [vmem:[%s4779] sm:$0xff] %v4887
        %s4889 = sld [smem:[#allocation6 + $0x1]]
        %v4890 = vstv %s4889
        %v4891 = vmul.f32 %v4887, %v4890
        %v4892 = vadd.f32 %v4881, %v4891
        %s4893 = sld [smem:[#allocation6 + $0x5]]
        %v4894 = vstv %s4893
        %v4895 = vmul.f32 %v4887, %v4894
        %v4896 = vadd.f32 %v4885, %v4895
        %v4897 = vld [vmem:[%s4819] sm:$0xff]
        %v4898 = vmul.f32 %v4897, %v4870
        %4899 = vst [vmem:[%s4819] sm:$0xff] %v4898
        %s4900 = sld [smem:[#allocation6 + $0x2]]
        %v4901 = vstv %s4900
        %v4902 = vmul.f32 %v4898, %v4901
        %v4903 = vadd.f32 %v4892, %v4902
        %s4904 = sld [smem:[#allocation6 + $0x6]]
        %v4905 = vstv %s4904
        %v4906 = vmul.f32 %v4898, %v4905
        %v4907 = vadd.f32 %v4896, %v4906
        %v4908 = vld [vmem:[%s4859] sm:$0xff]
        %v4909 = vmul.f32 %v4908, %v4870
        %4910 = vst [vmem:[%s4859] sm:$0xff] %v4909
        %s4911 = sld [smem:[#allocation6 + $0x3]]
        %v4912 = vstv %s4911
        %v4913 = vmul.f32 %v4909, %v4912
        %v4914 = vadd.f32 %v4903, %v4913
        %s4915 = sld [smem:[#allocation6 + $0x7]]
        %v4916 = vstv %s4915
        %v4917 = vmul.f32 %v4909, %v4916
        %v4918 = vadd.f32 %v4907, %v4917
        %4919 = vst [vmem:[%s343] sm:$0xff] %v4914
        %s4920 = scalar_lea.vmem %s343, 8
        %4921 = vst [vmem:[%s4920] sm:$0xff] %v4918
        %p4922 = scmp.lt.s32.totalorder %s22, 1
        %s4923 = scalar_select %p4922, %s22, 1
        %s4924 = smul.addr %s4923, 4
        %s4925 = smul.addr %s4924, 8
        %s4926 = scalar_lea.vmem %s6, %s4925
        %p4927 = scmp.lt.s32.totalorder %s22, 1
        %s4928 = scalar_select %p4927, %s22, 1
        %s4929 = smul.addr %s4928, 2
        %s4930 = smul.addr %s4929, 8
        %s4931 = scalar_lea.vmem %s7, %s4930
        // Predicated region
        $region61: #{sse_conv_forward.1} parent=43 // pred_check
          %p4932 = pneg %p171
        $region62: #{sse_conv_forward.1} parent=43 // pred_check_branch
          %4934 = sbr.rel (%p4932) target = $region64
        $region63: #{sse_conv_forward.1} parent=43 // pred_region
          _
        $region64: #{sse_conv_forward.1} parent=43 // pred_fallthru
          _
        // Predicated region
        $region65: #{sse_conv_forward.1} parent=43 // pred_check
          %p4935 = pneg %p197
        $region66: #{sse_conv_forward.1} parent=43 // pred_check_branch
          %4937 = sbr.rel (%p4935) target = $region68
        $region67: #{sse_conv_forward.1} parent=43 // pred_region
          _
        $region68: #{sse_conv_forward.1} parent=43 // pred_fallthru
          _
      $region44: #{sse_conv_forward.1} parent=5 // pred_fallthru
        _
      %p4938 = scmp.le.s32.totalorder 2, %s17
      // Predicated region
      $region69: #{sse_conv_forward.1} parent=5 // pred_check
        %p4939 = pneg %p4938
      $region70: #{sse_conv_forward.1} parent=5 // pred_check_branch
        %4941 = sbr.rel (%p4939) target = $region72
      $region71: #{sse_conv_forward.1} parent=5 // pred_region
        %s4942 = ssub.s32 %s17, 2
        // Predicated region
        $region73: #{sse_conv_forward.1} parent=71 // pred_check
          %p4943 = pneg %p177
        $region74: #{sse_conv_forward.1} parent=71 // pred_check_branch
          %4945 = sbr.rel (%p4943) target = $region76
        $region75: #{sse_conv_forward.1} parent=71 // pred_region
          %p4946 = scmp.lt.s32.totalorder %s23, 1
          %s4947 = scalar_select %p4946, %s23, 1
          %s4948 = smul.addr %s4947, 4
          %s4949 = smul.addr %s4948, 8
          %s4950 = scalar_lea.vmem %s6, %s4949
        $region76: #{sse_conv_forward.1} parent=71 // pred_fallthru
          _
        // Predicated region
        $region77: #{sse_conv_forward.1} parent=71 // pred_check
          %p4951 = pneg %p203
        $region78: #{sse_conv_forward.1} parent=71 // pred_check_branch
          %4953 = sbr.rel (%p4951) target = $region80
        $region79: #{sse_conv_forward.1} parent=71 // pred_region
          %p4954 = scmp.lt.s32.totalorder %s23, 1
          %s4955 = scalar_select %p4954, %s23, 1
          %s4956 = smul.addr %s4955, 2
          %s4957 = smul.addr %s4956, 8
          %s4958 = scalar_lea.vmem %s7, %s4957
        $region80: #{sse_conv_forward.1} parent=71 // pred_fallthru
          _
      $region72: #{sse_conv_forward.1} parent=5 // pred_fallthru
        _
    $region6: #{sse_conv_forward.1} parent=1 // loop_footer
      %s21 = sadd.s32 1, %s17
    $region7: #{sse_conv_forward.1} parent=1 // loop_footer_branch
      %16 = sbr.rel target = $region3
    $region8: #{sse_conv_forward.1} parent=1 // loop_exit
      _
    %4959 = vsyncpa [#allocation3], 1
    %s4960 = scalar_lea.sflag [#allocation3], 1
    %4961 = vsyncpa %s4960, 1
    %4962 = vsyncpa [#allocation5], 1
    %4963 = vsyncpa [#allocation8], 1

</llo_original>
